<compile_context>
chip_gen: v6e
topology: v6e:2x2x1
jax: 0.10.0
libtpu: 0.0.40
codegen_flags: <defaults>
</compile_context>

<pallas_src>
import numpy as np

import jax
import jax.numpy as jnp
from jax.experimental import pallas as pl
from jax.experimental.pallas import tpu as pltpu


# ------------------------------ fused kernel --------------------------------

def _net_fused_kernel(x1_ref, w1_ref, pb1_ref, s1_ref,
                      w2_ref, pb2_ref, s2_ref,
                      fc1w_ref, fc1b_ref, fc2w_ref, fc2b_ref,
                      feat_ref, out_ref, lhs_ref):
    tb = x1_ref.shape[1]                      # batch tile (multiple of 16)

    # conv1: single banded matmul. rows = (pooled-row i1, batch), lanes =
    # (row-phase, c1, j) in two 256-wide blocks.
    x1 = x1_ref[...].reshape(12 * tb, 168)
    c1 = jnp.dot(x1, w1_ref[...], preferred_element_type=jnp.float32)   # (12tb,512)

    # 2x2 max-pool + bias + relu:
    #   row pooling  = max of the two 128-aligned phase halves (bf16),
    #   col pooling  = ONE fused even|odd 0/1 selection matmul, then max of its
    #                  two 128-lane halves,
    #   bias         = per-channel, added once on the pooled (12tb,128) tensor
    #                  (commutes with the selection matmul and the max).
    a1 = jnp.maximum(c1[:, :256].astype(jnp.bfloat16),
                     c1[:, 256:].astype(jnp.bfloat16))
    m1 = jnp.dot(a1, s1_ref[...], preferred_element_type=jnp.float32)   # (12tb,256)
    p1 = jnp.maximum(jnp.maximum(m1[:, :128], m1[:, 128:]) + pb1_ref[...], 0.0)
    p1 = p1.astype(jnp.bfloat16)                                        # (12tb,128)

    # conv2 LHS: one pass of 24 aligned (tb,128) stores into VMEM scratch.
    # Rows = (i2, batch), lanes = (tap d, c1, j1).
    # TODO(synk): conv2_drop (Dropout2d) is identity here (inference / eval mode).
    for i2 in range(4):
        for d in range(6):
            r = 2 * i2 + d
            lhs_ref[i2 * tb:(i2 + 1) * tb, d * 128:(d + 1) * 128] = (
                p1[r * tb:(r + 1) * tb, :])
    c2 = jnp.dot(lhs_ref[...], w2_ref[...],
                 preferred_element_type=jnp.float32)                    # (4tb,512)

    a2 = jnp.maximum(c2[:, :256].astype(jnp.bfloat16),
                     c2[:, 256:].astype(jnp.bfloat16))
    m2 = jnp.dot(a2, s2_ref[...], preferred_element_type=jnp.float32)   # (4tb,256)
    p2 = jnp.maximum(jnp.maximum(m2[:, :128], m2[:, 128:]) + pb2_ref[...], 0.0)

    # flatten (fc1 weights pre-permuted to this lane order), fc1+relu, fc2.
    flat = jnp.concatenate([p2[i2 * tb:(i2 + 1) * tb, :] for i2 in range(4)],
                           axis=-1).astype(jnp.bfloat16)                # (tb,512)
    # TODO(synk): F.dropout on feat is identity (eval mode).
    feat = jnp.maximum(
        jnp.dot(flat, fc1w_ref[...], preferred_element_type=jnp.float32)
        + fc1b_ref[...], 0.0)
    feat_ref[...] = feat
    # fc2 is zero-padded to 128 lanes so the logits store is lane-dense; the
    # wrapper slices [:, :10].
    out_ref[...] = (jnp.dot(feat.astype(jnp.bfloat16), fc2w_ref[...],
                            preferred_element_type=jnp.float32) + fc2b_ref[...])


# ---------------------- one-time weight transformations ---------------------

def _conv1_matrix(w):
    # w: (10, 1, 5, 5) torch layout.
    # rows k = d*28 + wcol (d in [0,6) covers both phases of a row pair);
    # cols l = phase*256 + c*24 + j (j in [0,24)), phase blocks padded to 256.
    D, Wc, P, C, J = np.meshgrid(np.arange(6), np.arange(28), np.arange(2),
                                 np.arange(10), np.arange(24), indexing="ij")
    di, dj = D - P, Wc - J
    valid = (di >= 0) & (di < 5) & (dj >= 0) & (dj < 5)
    taps = w[C, np.zeros_like(C), np.clip(di, 0, 4), np.clip(dj, 0, 4)]
    taps = jnp.where(jnp.asarray(valid), taps, 0.0)       # (6, 28, 2, 10, 24)
    w1 = jnp.zeros((6, 28, 2, 256), jnp.float32)
    w1 = w1.at[:, :, :, :240].set(taps.reshape(6, 28, 2, 240))
    return w1.reshape(168, 512).astype(jnp.bfloat16)


def _conv2_matrix(w):
    # w: (20, 10, 5, 5).
    # rows k = d2*128 + c1*12 + j1 (128-padded per d2);
    # cols l = phase*256 + c2*8 + j2 (phase blocks padded to 256).
    D2, C1, J1, P, C2, J2 = np.meshgrid(np.arange(6), np.arange(10), np.arange(12),
                                        np.arange(2), np.arange(20), np.arange(8),
                                        indexing="ij")
    di, dj = D2 - P, J1 - J2
    valid = (di >= 0) & (di < 5) & (dj >= 0) & (dj < 5)
    taps = w[C2, C1, np.clip(di, 0, 4), np.clip(dj, 0, 4)]
    taps = jnp.where(jnp.asarray(valid), taps, 0.0)       # (6, 10, 12, 2, 20, 8)
    w2 = jnp.zeros((6, 128, 2, 256), jnp.float32)
    w2 = w2.at[:, :120, :, :160].set(taps.reshape(6, 120, 2, 160))
    return w2.reshape(768, 512).astype(jnp.bfloat16)


def _pooled_bias(b, w_out):
    # Per-channel conv bias laid out on the POOLED lane order c*w_out + j'
    # (padded to 128); bias commutes with the 0/1 selection matmul and the max.
    n_ch = b.shape[0]
    pb = jnp.zeros((1, 128), jnp.float32)
    return pb.at[0, :n_ch * w_out].set(
        jnp.broadcast_to(b[:, None], (n_ch, w_out)).reshape(n_ch * w_out))


def _pool_selector(n_ch, w_in, pad_in, pad_out):
    # Fused even|odd 0/1 selection matrix (pad_in, 2*pad_out): even spatial
    # columns map to output lanes [:pad_out], odd columns to [pad_out:].
    w_out = w_in // 2
    s = np.zeros((pad_in, 2 * pad_out), np.float32)
    for c in range(n_ch):
        for j in range(w_out):
            s[c * w_in + 2 * j, c * w_out + j] = 1.0
            s[c * w_in + 2 * j + 1, pad_out + c * w_out + j] = 1.0
    return jnp.asarray(s, jnp.bfloat16)


def _fc_matrices(fc1_w, fc1_b, fc2_w, fc2_b):
    # Kernel flatten lane order: l = i2*128 + c2*4 + j2' (c2<20, j2'<4, rest pad).
    # Torch x.view(-1, 320) feature order: f = c2*16 + i2*4 + j2'.
    idx = np.zeros((512,), np.int32)
    valid = np.zeros((512,), bool)
    for i2 in range(4):
        for c2 in range(20):
            for j2 in range(4):
                l = i2 * 128 + c2 * 4 + j2
                idx[l] = c2 * 16 + i2 * 4 + j2
                valid[l] = True
    w1p = jnp.where(jnp.asarray(valid)[:, None], fc1_w.T[jnp.asarray(idx), :], 0.0)
    # fc2 zero-padded to 128 output lanes for an unmasked, lane-dense store.
    fc2w_p = jnp.zeros((128, 128), jnp.float32).at[:, :10].set(fc2_w.T)
    fc2b_p = jnp.zeros((1, 128), jnp.float32).at[0, :10].set(fc2_b)
    return (w1p.astype(jnp.bfloat16),
            fc1_b.reshape(1, 128).astype(jnp.float32),
            fc2w_p.astype(jnp.bfloat16),
            fc2b_p)


def prepare_params(p):
    fc1w, fc1b, fc2w, fc2b = _fc_matrices(p["fc1_w"], p["fc1_b"],
                                          p["fc2_w"], p["fc2_b"])
    return dict(
        w1=_conv1_matrix(p["conv1_w"]), pb1=_pooled_bias(p["conv1_b"], 12),
        s1=_pool_selector(10, 24, 256, 128),
        w2=_conv2_matrix(p["conv2_w"]), pb2=_pooled_bias(p["conv2_b"], 4),
        s2=_pool_selector(20, 8, 256, 128),
        fc1w=fc1w, fc1b=fc1b, fc2w=fc2w, fc2b=fc2b)


def init_params(key):
    # torch default-style U(+-1/sqrt(fan_in)), torch layouts.
    ks = jax.random.split(key, 8)

    def u(k, shape, fan_in):
        bound = 1.0 / np.sqrt(fan_in)
        return jax.random.uniform(k, shape, jnp.float32, -bound, bound)

    return dict(
        conv1_w=u(ks[0], (10, 1, 5, 5), 25), conv1_b=u(ks[1], (10,), 25),
        conv2_w=u(ks[2], (20, 10, 5, 5), 250), conv2_b=u(ks[3], (20,), 250),
        fc1_w=u(ks[4], (128, 320), 320), fc1_b=u(ks[5], (128,), 320),
        fc2_w=u(ks[6], (10, 128), 128), fc2_b=u(ks[7], (10,), 128),
    )


# ------------------------------ forward pass --------------------------------

def _tpu_defaults():
    # v7x: 2 TensorCores but only 64 MiB VMEM/TC -> tiles <=256, >=2 grid steps,
    # 48 MiB VMEM limit.  v5e/v6e: 1 TC, 128 MiB VMEM -> larger tiles, 64 MiB.
    try:
        kind = jax.devices()[0].device_kind.lower()
    except Exception:
        kind = ""
    is_v7 = ("v7" in kind) or ("7x" in kind)
    max_tile = 256 if is_v7 else 384
    vmem_bytes = (48 if is_v7 else 64) * 1024 * 1024
    return is_v7, max_tile, vmem_bytes


def net_forward(kp, x_nchw, tile_batch=None):
    n = x_nchw.shape[0]
    assert x_nchw.shape[1:] == (1, 28, 28), "Net requires 28x28 single-channel input"

    is_v7, max_tile, vmem_bytes = _tpu_defaults()
    if tile_batch is not None:                    # user override, forced to mult of 16
        max_tile = max(16, min((int(tile_batch) // 16) * 16, max_tile))
    if is_v7:
        want = -(-((n + 1) // 2) // 16) * 16      # round_up(ceil(n/2), 16): >=2 steps
    else:
        want = -(-n // 16) * 16                   # round_up(n, 16): single big tile
    tb = int(max(16, min(max_tile, want)))
    n_pad = -(-n // tb) * tb

    # Cheap input pre-arrangement (bf16): for every pooled output row i1 the
    # kernel needs image rows 2*i1 .. 2*i1+5.
    x2d = x_nchw[:, 0].astype(jnp.bfloat16)                             # (n, 28, 28)
    x1 = jnp.concatenate([x2d[:, d:d + 24:2, :] for d in range(6)], axis=-1)
    x1 = jnp.transpose(x1, (1, 0, 2))                                   # (12, n, 168)
    if n_pad != n:
        x1 = jnp.pad(x1, ((0, 0), (0, n_pad - n), (0, 0)))

    def wspec(shape):
        return pl.BlockSpec(shape, lambda i: (0, 0))

    feat, out = pl.pallas_call(
        _net_fused_kernel,
        out_shape=(jax.ShapeDtypeStruct((n_pad, 128), jnp.float32),
                   jax.ShapeDtypeStruct((n_pad, 128), jnp.float32)),
        grid=(n_pad // tb,),
        in_specs=[
            pl.BlockSpec((12, tb, 168), lambda i: (0, i, 0)),
            wspec((168, 512)), wspec((1, 128)), wspec((256, 256)),
            wspec((768, 512)), wspec((1, 128)), wspec((256, 256)),
            wspec((512, 128)), wspec((1, 128)),
            wspec((128, 128)), wspec((1, 128)),
        ],
        out_specs=(pl.BlockSpec((tb, 128), lambda i: (i, 0)),
                   pl.BlockSpec((tb, 128), lambda i: (i, 0))),
        scratch_shapes=[pltpu.VMEM((4 * tb, 768), jnp.bfloat16)],
        compiler_params=pltpu.CompilerParams(
            dimension_semantics=("parallel",),
            vmem_limit_bytes=vmem_bytes),
        cost_estimate=pl.CostEstimate(
            flops=7_400_000 * n_pad, transcendentals=0,
            bytes_accessed=5_056 * n_pad + 1_500_000),
    )(x1, kp["w1"], kp["pb1"], kp["s1"],
      kp["w2"], kp["pb2"], kp["s2"],
      kp["fc1w"], kp["fc1b"], kp["fc2w"], kp["fc2b"])
    return feat[:n], out[:n, :10]


if __name__ == "__main__":
    key = jax.random.PRNGKey(0)
    pkey, xkey = jax.random.split(key)
    params = init_params(pkey)
    kparams = prepare_params(params)

    x = jax.random.normal(xkey, (2, 1, 28, 28), jnp.float32)
    fwd = jax.jit(net_forward)
    feat, out = fwd(kparams, x)
    jax.block_until_ready((feat, out))

    assert feat.shape == (2, 128) and out.shape == (2, 10)
    assert bool(jnp.all(jnp.isfinite(feat))) and bool(jnp.all(jnp.isfinite(out)))
    print("KERNEL_OK")
</pallas_src>

<mosaic_0001>
module attributes {stable_mosaic.version = 11 : i64} {
  func.func @_net_fused_kernel(%arg0: i32, %arg1: memref<12x16x168xbf16, #tpu.memory_space<vmem>>, %arg2: memref<168x512xbf16, #tpu.memory_space<vmem>>, %arg3: memref<1x128xf32, #tpu.memory_space<vmem>>, %arg4: memref<256x256xbf16, #tpu.memory_space<vmem>>, %arg5: memref<768x512xbf16, #tpu.memory_space<vmem>>, %arg6: memref<1x128xf32, #tpu.memory_space<vmem>>, %arg7: memref<256x256xbf16, #tpu.memory_space<vmem>>, %arg8: memref<512x128xbf16, #tpu.memory_space<vmem>>, %arg9: memref<1x128xf32, #tpu.memory_space<vmem>>, %arg10: memref<128x128xbf16, #tpu.memory_space<vmem>>, %arg11: memref<1x128xf32, #tpu.memory_space<vmem>>, %arg12: memref<16x128xf32, #tpu.memory_space<vmem>>, %arg13: memref<16x128xf32, #tpu.memory_space<vmem>>, %arg14: memref<64x768xbf16, #tpu.memory_space<vmem>>) attributes {dimension_semantics = [#tpu.dimension_semantics<parallel>], iteration_bounds = array<i64: 1>, scalar_prefetch = 0 : i64, scratch_operands = 1 : i64, tpu.core_type = #tpu.core_type<tc>, window_params = [{transform_indices = @transform_0, window_bounds = array<i64: 12, 16, 168>}, {pipeline_mode = #tpu.pipeline_mode<synchronous>, transform_indices = @transform_1, window_bounds = array<i64: 168, 512>}, {pipeline_mode = #tpu.pipeline_mode<synchronous>, transform_indices = @transform_2, window_bounds = array<i64: 1, 128>}, {pipeline_mode = #tpu.pipeline_mode<synchronous>, transform_indices = @transform_3, window_bounds = array<i64: 256, 256>}, {pipeline_mode = #tpu.pipeline_mode<synchronous>, transform_indices = @transform_4, window_bounds = array<i64: 768, 512>}, {pipeline_mode = #tpu.pipeline_mode<synchronous>, transform_indices = @transform_5, window_bounds = array<i64: 1, 128>}, {pipeline_mode = #tpu.pipeline_mode<synchronous>, transform_indices = @transform_6, window_bounds = array<i64: 256, 256>}, {pipeline_mode = #tpu.pipeline_mode<synchronous>, transform_indices = @transform_7, window_bounds = array<i64: 512, 128>}, {pipeline_mode = #tpu.pipeline_mode<synchronous>, transform_indices = @transform_8, window_bounds = array<i64: 1, 128>}, {pipeline_mode = #tpu.pipeline_mode<synchronous>, transform_indices = @transform_9, window_bounds = array<i64: 128, 128>}, {pipeline_mode = #tpu.pipeline_mode<synchronous>, transform_indices = @transform_10, window_bounds = array<i64: 1, 128>}, {transform_indices = @transform_11, window_bounds = array<i64: 16, 128>}, {transform_indices = @transform_12, window_bounds = array<i64: 16, 128>}]} {
    %c0 = arith.constant 0 : index
    %c0_0 = arith.constant 0 : index
    %c0_1 = arith.constant 0 : index
    %0 = vector.load %arg1[%c0, %c0_0, %c0_1] : memref<12x16x168xbf16, #tpu.memory_space<vmem>>, vector<12x16x168xbf16>
    %1 = vector.shape_cast %0 : vector<12x16x168xbf16> to vector<192x168xbf16>
    %c0_2 = arith.constant 0 : index
    %c0_3 = arith.constant 0 : index
    %2 = vector.load %arg2[%c0_2, %c0_3] : memref<168x512xbf16, #tpu.memory_space<vmem>>, vector<168x512xbf16>
    %cst = arith.constant dense<0.000000e+00> : vector<192x512xf32>
    %3 = tpu.matmul %1, %2, %cst {dimension_numbers = #tpu.dot_dimension_numbers<[1], [0], [0], [1], [0, 0, 1, 1], [], []>} : vector<192x168xbf16>, vector<168x512xbf16>, vector<192x512xf32> -> vector<192x512xf32>
    %4 = vector.extract_strided_slice %3 {offsets = [0, 0], sizes = [192, 256], strides = [1, 1]} : vector<192x512xf32> to vector<192x256xf32>
    %5 = arith.truncf %4 : vector<192x256xf32> to vector<192x256xbf16>
    %6 = vector.extract_strided_slice %3 {offsets = [0, 256], sizes = [192, 256], strides = [1, 1]} : vector<192x512xf32> to vector<192x256xf32>
    %7 = arith.truncf %6 : vector<192x256xf32> to vector<192x256xbf16>
    %8 = arith.maximumf %5, %7 : vector<192x256xbf16>
    %c0_4 = arith.constant 0 : index
    %c0_5 = arith.constant 0 : index
    %9 = vector.load %arg4[%c0_4, %c0_5] : memref<256x256xbf16, #tpu.memory_space<vmem>>, vector<256x256xbf16>
    %cst_6 = arith.constant dense<0.000000e+00> : vector<192x256xf32>
    %10 = tpu.matmul %8, %9, %cst_6 {dimension_numbers = #tpu.dot_dimension_numbers<[1], [0], [0], [1], [0, 0, 1, 1], [], []>} : vector<192x256xbf16>, vector<256x256xbf16>, vector<192x256xf32> -> vector<192x256xf32>
    %11 = vector.extract_strided_slice %10 {offsets = [0, 0], sizes = [192, 128], strides = [1, 1]} : vector<192x256xf32> to vector<192x128xf32>
    %12 = vector.extract_strided_slice %10 {offsets = [0, 128], sizes = [192, 128], strides = [1, 1]} : vector<192x256xf32> to vector<192x128xf32>
    %13 = arith.maximumf %11, %12 : vector<192x128xf32>
    %c0_7 = arith.constant 0 : index
    %c0_8 = arith.constant 0 : index
    %14 = vector.load %arg3[%c0_7, %c0_8] : memref<1x128xf32, #tpu.memory_space<vmem>>, vector<1x128xf32>
    %15 = vector.broadcast %14 : vector<1x128xf32> to vector<192x128xf32>
    %16 = arith.addf %13, %15 : vector<192x128xf32>
    %cst_9 = arith.constant 0.000000e+00 : f32
    %17 = vector.broadcast %cst_9 : f32 to vector<192x128xf32>
    %18 = arith.maximumf %16, %17 : vector<192x128xf32>
    %19 = arith.truncf %18 : vector<192x128xf32> to vector<192x128xbf16>
    %20 = vector.extract_strided_slice %19 {offsets = [0, 0], sizes = [16, 128], strides = [1, 1]} : vector<192x128xbf16> to vector<16x128xbf16>
    %c0_10 = arith.constant 0 : index
    %c0_11 = arith.constant 0 : index
    %21 = vector.load %arg14[%c0_10, %c0_11] : memref<64x768xbf16, #tpu.memory_space<vmem>>, vector<16x128xbf16>
    tpu.vector_store %arg14[%c0_10, %c0_11], %20 {strides = array<i32>} : memref<64x768xbf16, #tpu.memory_space<vmem>>, vector<16x128xbf16>,
    %22 = vector.extract_strided_slice %19 {offsets = [16, 0], sizes = [16, 128], strides = [1, 1]} : vector<192x128xbf16> to vector<16x128xbf16>
    %c0_12 = arith.constant 0 : index
    %c128 = arith.constant 128 : index
    %23 = vector.load %arg14[%c0_12, %c128] : memref<64x768xbf16, #tpu.memory_space<vmem>>, vector<16x128xbf16>
    tpu.vector_store %arg14[%c0_12, %c128], %22 {strides = array<i32>} : memref<64x768xbf16, #tpu.memory_space<vmem>>, vector<16x128xbf16>,
    %24 = vector.extract_strided_slice %19 {offsets = [32, 0], sizes = [16, 128], strides = [1, 1]} : vector<192x128xbf16> to vector<16x128xbf16>
    %c0_13 = arith.constant 0 : index
    %c256 = arith.constant 256 : index
    %25 = vector.load %arg14[%c0_13, %c256] : memref<64x768xbf16, #tpu.memory_space<vmem>>, vector<16x128xbf16>
    tpu.vector_store %arg14[%c0_13, %c256], %24 {strides = array<i32>} : memref<64x768xbf16, #tpu.memory_space<vmem>>, vector<16x128xbf16>,
    %26 = vector.extract_strided_slice %19 {offsets = [48, 0], sizes = [16, 128], strides = [1, 1]} : vector<192x128xbf16> to vector<16x128xbf16>
    %c0_14 = arith.constant 0 : index
    %c384 = arith.constant 384 : index
    %27 = vector.load %arg14[%c0_14, %c384] : memref<64x768xbf16, #tpu.memory_space<vmem>>, vector<16x128xbf16>
    tpu.vector_store %arg14[%c0_14, %c384], %26 {strides = array<i32>} : memref<64x768xbf16, #tpu.memory_space<vmem>>, vector<16x128xbf16>,
    %28 = vector.extract_strided_slice %19 {offsets = [64, 0], sizes = [16, 128], strides = [1, 1]} : vector<192x128xbf16> to vector<16x128xbf16>
    %c0_15 = arith.constant 0 : index
    %c512 = arith.constant 512 : index
    %29 = vector.load %arg14[%c0_15, %c512] : memref<64x768xbf16, #tpu.memory_space<vmem>>, vector<16x128xbf16>
    tpu.vector_store %arg14[%c0_15, %c512], %28 {strides = array<i32>} : memref<64x768xbf16, #tpu.memory_space<vmem>>, vector<16x128xbf16>,
    %30 = vector.extract_strided_slice %19 {offsets = [80, 0], sizes = [16, 128], strides = [1, 1]} : vector<192x128xbf16> to vector<16x128xbf16>
    %c0_16 = arith.constant 0 : index
    %c640 = arith.constant 640 : index
    %31 = vector.load %arg14[%c0_16, %c640] : memref<64x768xbf16, #tpu.memory_space<vmem>>, vector<16x128xbf16>
    tpu.vector_store %arg14[%c0_16, %c640], %30 {strides = array<i32>} : memref<64x768xbf16, #tpu.memory_space<vmem>>, vector<16x128xbf16>,
    %32 = vector.extract_strided_slice %19 {offsets = [32, 0], sizes = [16, 128], strides = [1, 1]} : vector<192x128xbf16> to vector<16x128xbf16>
    %c16 = arith.constant 16 : index
    %c0_17 = arith.constant 0 : index
    %33 = vector.load %arg14[%c16, %c0_17] : memref<64x768xbf16, #tpu.memory_space<vmem>>, vector<16x128xbf16>
    tpu.vector_store %arg14[%c16, %c0_17], %32 {strides = array<i32>} : memref<64x768xbf16, #tpu.memory_space<vmem>>, vector<16x128xbf16>,
    %34 = vector.extract_strided_slice %19 {offsets = [48, 0], sizes = [16, 128], strides = [1, 1]} : vector<192x128xbf16> to vector<16x128xbf16>
    %c16_18 = arith.constant 16 : index
    %c128_19 = arith.constant 128 : index
    %35 = vector.load %arg14[%c16_18, %c128_19] : memref<64x768xbf16, #tpu.memory_space<vmem>>, vector<16x128xbf16>
    tpu.vector_store %arg14[%c16_18, %c128_19], %34 {strides = array<i32>} : memref<64x768xbf16, #tpu.memory_space<vmem>>, vector<16x128xbf16>,
    %36 = vector.extract_strided_slice %19 {offsets = [64, 0], sizes = [16, 128], strides = [1, 1]} : vector<192x128xbf16> to vector<16x128xbf16>
    %c16_20 = arith.constant 16 : index
    %c256_21 = arith.constant 256 : index
    %37 = vector.load %arg14[%c16_20, %c256_21] : memref<64x768xbf16, #tpu.memory_space<vmem>>, vector<16x128xbf16>
    tpu.vector_store %arg14[%c16_20, %c256_21], %36 {strides = array<i32>} : memref<64x768xbf16, #tpu.memory_space<vmem>>, vector<16x128xbf16>,
    %38 = vector.extract_strided_slice %19 {offsets = [80, 0], sizes = [16, 128], strides = [1, 1]} : vector<192x128xbf16> to vector<16x128xbf16>
    %c16_22 = arith.constant 16 : index
    %c384_23 = arith.constant 384 : index
    %39 = vector.load %arg14[%c16_22, %c384_23] : memref<64x768xbf16, #tpu.memory_space<vmem>>, vector<16x128xbf16>
    tpu.vector_store %arg14[%c16_22, %c384_23], %38 {strides = array<i32>} : memref<64x768xbf16, #tpu.memory_space<vmem>>, vector<16x128xbf16>,
    %40 = vector.extract_strided_slice %19 {offsets = [96, 0], sizes = [16, 128], strides = [1, 1]} : vector<192x128xbf16> to vector<16x128xbf16>
    %c16_24 = arith.constant 16 : index
    %c512_25 = arith.constant 512 : index
    %41 = vector.load %arg14[%c16_24, %c512_25] : memref<64x768xbf16, #tpu.memory_space<vmem>>, vector<16x128xbf16>
    tpu.vector_store %arg14[%c16_24, %c512_25], %40 {strides = array<i32>} : memref<64x768xbf16, #tpu.memory_space<vmem>>, vector<16x128xbf16>,
    %42 = vector.extract_strided_slice %19 {offsets = [112, 0], sizes = [16, 128], strides = [1, 1]} : vector<192x128xbf16> to vector<16x128xbf16>
    %c16_26 = arith.constant 16 : index
    %c640_27 = arith.constant 640 : index
    %43 = vector.load %arg14[%c16_26, %c640_27] : memref<64x768xbf16, #tpu.memory_space<vmem>>, vector<16x128xbf16>
    tpu.vector_store %arg14[%c16_26, %c640_27], %42 {strides = array<i32>} : memref<64x768xbf16, #tpu.memory_space<vmem>>, vector<16x128xbf16>,
    %44 = vector.extract_strided_slice %19 {offsets = [64, 0], sizes = [16, 128], strides = [1, 1]} : vector<192x128xbf16> to vector<16x128xbf16>
    %c32 = arith.constant 32 : index
    %c0_28 = arith.constant 0 : index
    %45 = vector.load %arg14[%c32, %c0_28] : memref<64x768xbf16, #tpu.memory_space<vmem>>, vector<16x128xbf16>
    tpu.vector_store %arg14[%c32, %c0_28], %44 {strides = array<i32>} : memref<64x768xbf16, #tpu.memory_space<vmem>>, vector<16x128xbf16>,
    %46 = vector.extract_strided_slice %19 {offsets = [80, 0], sizes = [16, 128], strides = [1, 1]} : vector<192x128xbf16> to vector<16x128xbf16>
    %c32_29 = arith.constant 32 : index
    %c128_30 = arith.constant 128 : index
    %47 = vector.load %arg14[%c32_29, %c128_30] : memref<64x768xbf16, #tpu.memory_space<vmem>>, vector<16x128xbf16>
    tpu.vector_store %arg14[%c32_29, %c128_30], %46 {strides = array<i32>} : memref<64x768xbf16, #tpu.memory_space<vmem>>, vector<16x128xbf16>,
    %48 = vector.extract_strided_slice %19 {offsets = [96, 0], sizes = [16, 128], strides = [1, 1]} : vector<192x128xbf16> to vector<16x128xbf16>
    %c32_31 = arith.constant 32 : index
    %c256_32 = arith.constant 256 : index
    %49 = vector.load %arg14[%c32_31, %c256_32] : memref<64x768xbf16, #tpu.memory_space<vmem>>, vector<16x128xbf16>
    tpu.vector_store %arg14[%c32_31, %c256_32], %48 {strides = array<i32>} : memref<64x768xbf16, #tpu.memory_space<vmem>>, vector<16x128xbf16>,
    %50 = vector.extract_strided_slice %19 {offsets = [112, 0], sizes = [16, 128], strides = [1, 1]} : vector<192x128xbf16> to vector<16x128xbf16>
    %c32_33 = arith.constant 32 : index
    %c384_34 = arith.constant 384 : index
    %51 = vector.load %arg14[%c32_33, %c384_34] : memref<64x768xbf16, #tpu.memory_space<vmem>>, vector<16x128xbf16>
    tpu.vector_store %arg14[%c32_33, %c384_34], %50 {strides = array<i32>} : memref<64x768xbf16, #tpu.memory_space<vmem>>, vector<16x128xbf16>,
    %52 = vector.extract_strided_slice %19 {offsets = [128, 0], sizes = [16, 128], strides = [1, 1]} : vector<192x128xbf16> to vector<16x128xbf16>
    %c32_35 = arith.constant 32 : index
    %c512_36 = arith.constant 512 : index
    %53 = vector.load %arg14[%c32_35, %c512_36] : memref<64x768xbf16, #tpu.memory_space<vmem>>, vector<16x128xbf16>
    tpu.vector_store %arg14[%c32_35, %c512_36], %52 {strides = array<i32>} : memref<64x768xbf16, #tpu.memory_space<vmem>>, vector<16x128xbf16>,
    %54 = vector.extract_strided_slice %19 {offsets = [144, 0], sizes = [16, 128], strides = [1, 1]} : vector<192x128xbf16> to vector<16x128xbf16>
    %c32_37 = arith.constant 32 : index
    %c640_38 = arith.constant 640 : index
    %55 = vector.load %arg14[%c32_37, %c640_38] : memref<64x768xbf16, #tpu.memory_space<vmem>>, vector<16x128xbf16>
    tpu.vector_store %arg14[%c32_37, %c640_38], %54 {strides = array<i32>} : memref<64x768xbf16, #tpu.memory_space<vmem>>, vector<16x128xbf16>,
    %56 = vector.extract_strided_slice %19 {offsets = [96, 0], sizes = [16, 128], strides = [1, 1]} : vector<192x128xbf16> to vector<16x128xbf16>
    %c48 = arith.constant 48 : index
    %c0_39 = arith.constant 0 : index
    %57 = vector.load %arg14[%c48, %c0_39] : memref<64x768xbf16, #tpu.memory_space<vmem>>, vector<16x128xbf16>
    tpu.vector_store %arg14[%c48, %c0_39], %56 {strides = array<i32>} : memref<64x768xbf16, #tpu.memory_space<vmem>>, vector<16x128xbf16>,
    %58 = vector.extract_strided_slice %19 {offsets = [112, 0], sizes = [16, 128], strides = [1, 1]} : vector<192x128xbf16> to vector<16x128xbf16>
    %c48_40 = arith.constant 48 : index
    %c128_41 = arith.constant 128 : index
    %59 = vector.load %arg14[%c48_40, %c128_41] : memref<64x768xbf16, #tpu.memory_space<vmem>>, vector<16x128xbf16>
    tpu.vector_store %arg14[%c48_40, %c128_41], %58 {strides = array<i32>} : memref<64x768xbf16, #tpu.memory_space<vmem>>, vector<16x128xbf16>,
    %60 = vector.extract_strided_slice %19 {offsets = [128, 0], sizes = [16, 128], strides = [1, 1]} : vector<192x128xbf16> to vector<16x128xbf16>
    %c48_42 = arith.constant 48 : index
    %c256_43 = arith.constant 256 : index
    %61 = vector.load %arg14[%c48_42, %c256_43] : memref<64x768xbf16, #tpu.memory_space<vmem>>, vector<16x128xbf16>
    tpu.vector_store %arg14[%c48_42, %c256_43], %60 {strides = array<i32>} : memref<64x768xbf16, #tpu.memory_space<vmem>>, vector<16x128xbf16>,
    %62 = vector.extract_strided_slice %19 {offsets = [144, 0], sizes = [16, 128], strides = [1, 1]} : vector<192x128xbf16> to vector<16x128xbf16>
    %c48_44 = arith.constant 48 : index
    %c384_45 = arith.constant 384 : index
    %63 = vector.load %arg14[%c48_44, %c384_45] : memref<64x768xbf16, #tpu.memory_space<vmem>>, vector<16x128xbf16>
    tpu.vector_store %arg14[%c48_44, %c384_45], %62 {strides = array<i32>} : memref<64x768xbf16, #tpu.memory_space<vmem>>, vector<16x128xbf16>,
    %64 = vector.extract_strided_slice %19 {offsets = [160, 0], sizes = [16, 128], strides = [1, 1]} : vector<192x128xbf16> to vector<16x128xbf16>
    %c48_46 = arith.constant 48 : index
    %c512_47 = arith.constant 512 : index
    %65 = vector.load %arg14[%c48_46, %c512_47] : memref<64x768xbf16, #tpu.memory_space<vmem>>, vector<16x128xbf16>
    tpu.vector_store %arg14[%c48_46, %c512_47], %64 {strides = array<i32>} : memref<64x768xbf16, #tpu.memory_space<vmem>>, vector<16x128xbf16>,
    %66 = vector.extract_strided_slice %19 {offsets = [176, 0], sizes = [16, 128], strides = [1, 1]} : vector<192x128xbf16> to vector<16x128xbf16>
    %c48_48 = arith.constant 48 : index
    %c640_49 = arith.constant 640 : index
    %67 = vector.load %arg14[%c48_48, %c640_49] : memref<64x768xbf16, #tpu.memory_space<vmem>>, vector<16x128xbf16>
    tpu.vector_store %arg14[%c48_48, %c640_49], %66 {strides = array<i32>} : memref<64x768xbf16, #tpu.memory_space<vmem>>, vector<16x128xbf16>,
    %c0_50 = arith.constant 0 : index
    %c0_51 = arith.constant 0 : index
    %68 = vector.load %arg14[%c0_50, %c0_51] : memref<64x768xbf16, #tpu.memory_space<vmem>>, vector<64x768xbf16>
    %c0_52 = arith.constant 0 : index
    %c0_53 = arith.constant 0 : index
    %69 = vector.load %arg5[%c0_52, %c0_53] : memref<768x512xbf16, #tpu.memory_space<vmem>>, vector<768x512xbf16>
    %cst_54 = arith.constant dense<0.000000e+00> : vector<64x512xf32>
    %70 = tpu.matmul %68, %69, %cst_54 {dimension_numbers = #tpu.dot_dimension_numbers<[1], [0], [0], [1], [0, 0, 1, 1], [], []>} : vector<64x768xbf16>, vector<768x512xbf16>, vector<64x512xf32> -> vector<64x512xf32>
    %71 = vector.extract_strided_slice %70 {offsets = [0, 0], sizes = [64, 256], strides = [1, 1]} : vector<64x512xf32> to vector<64x256xf32>
    %72 = arith.truncf %71 : vector<64x256xf32> to vector<64x256xbf16>
    %73 = vector.extract_strided_slice %70 {offsets = [0, 256], sizes = [64, 256], strides = [1, 1]} : vector<64x512xf32> to vector<64x256xf32>
    %74 = arith.truncf %73 : vector<64x256xf32> to vector<64x256xbf16>
    %75 = arith.maximumf %72, %74 : vector<64x256xbf16>
    %c0_55 = arith.constant 0 : index
    %c0_56 = arith.constant 0 : index
    %76 = vector.load %arg7[%c0_55, %c0_56] : memref<256x256xbf16, #tpu.memory_space<vmem>>, vector<256x256xbf16>
    %cst_57 = arith.constant dense<0.000000e+00> : vector<64x256xf32>
    %77 = tpu.matmul %75, %76, %cst_57 {dimension_numbers = #tpu.dot_dimension_numbers<[1], [0], [0], [1], [0, 0, 1, 1], [], []>} : vector<64x256xbf16>, vector<256x256xbf16>, vector<64x256xf32> -> vector<64x256xf32>
    %78 = vector.extract_strided_slice %77 {offsets = [0, 0], sizes = [64, 128], strides = [1, 1]} : vector<64x256xf32> to vector<64x128xf32>
    %79 = vector.extract_strided_slice %77 {offsets = [0, 128], sizes = [64, 128], strides = [1, 1]} : vector<64x256xf32> to vector<64x128xf32>
    %80 = arith.maximumf %78, %79 : vector<64x128xf32>
    %c0_58 = arith.constant 0 : index
    %c0_59 = arith.constant 0 : index
    %81 = vector.load %arg6[%c0_58, %c0_59] : memref<1x128xf32, #tpu.memory_space<vmem>>, vector<1x128xf32>
    %82 = vector.broadcast %81 : vector<1x128xf32> to vector<64x128xf32>
    %83 = arith.addf %80, %82 : vector<64x128xf32>
    %cst_60 = arith.constant 0.000000e+00 : f32
    %84 = vector.broadcast %cst_60 : f32 to vector<64x128xf32>
    %85 = arith.maximumf %83, %84 : vector<64x128xf32>
    %86 = vector.extract_strided_slice %85 {offsets = [0, 0], sizes = [16, 128], strides = [1, 1]} : vector<64x128xf32> to vector<16x128xf32>
    %87 = vector.extract_strided_slice %85 {offsets = [16, 0], sizes = [16, 128], strides = [1, 1]} : vector<64x128xf32> to vector<16x128xf32>
    %88 = vector.extract_strided_slice %85 {offsets = [32, 0], sizes = [16, 128], strides = [1, 1]} : vector<64x128xf32> to vector<16x128xf32>
    %89 = vector.extract_strided_slice %85 {offsets = [48, 0], sizes = [16, 128], strides = [1, 1]} : vector<64x128xf32> to vector<16x128xf32>
    %90 = tpu.concatenate %86, %87, %88, %89 in 1 : vector<16x128xf32>, vector<16x128xf32>, vector<16x128xf32>, vector<16x128xf32> -> vector<16x512xf32>
    %91 = arith.truncf %90 : vector<16x512xf32> to vector<16x512xbf16>
    %c0_61 = arith.constant 0 : index
    %c0_62 = arith.constant 0 : index
    %92 = vector.load %arg8[%c0_61, %c0_62] : memref<512x128xbf16, #tpu.memory_space<vmem>>, vector<512x128xbf16>
    %cst_63 = arith.constant dense<0.000000e+00> : vector<16x128xf32>
    %93 = tpu.matmul %91, %92, %cst_63 {dimension_numbers = #tpu.dot_dimension_numbers<[1], [0], [0], [1], [0, 0, 1, 1], [], []>} : vector<16x512xbf16>, vector<512x128xbf16>, vector<16x128xf32> -> vector<16x128xf32>
    %c0_64 = arith.constant 0 : index
    %c0_65 = arith.constant 0 : index
    %94 = vector.load %arg9[%c0_64, %c0_65] : memref<1x128xf32, #tpu.memory_space<vmem>>, vector<1x128xf32>
    %95 = vector.broadcast %94 : vector<1x128xf32> to vector<16x128xf32>
    %96 = arith.addf %93, %95 : vector<16x128xf32>
    %cst_66 = arith.constant 0.000000e+00 : f32
    %97 = vector.broadcast %cst_66 : f32 to vector<16x128xf32>
    %98 = arith.maximumf %96, %97 : vector<16x128xf32>
    %c0_67 = arith.constant 0 : index
    %c0_68 = arith.constant 0 : index
    %99 = vector.load %arg12[%c0_67, %c0_68] : memref<16x128xf32, #tpu.memory_space<vmem>>, vector<16x128xf32>
    tpu.vector_store %arg12[%c0_67, %c0_68], %98 {strides = array<i32>} : memref<16x128xf32, #tpu.memory_space<vmem>>, vector<16x128xf32>,
    %100 = arith.truncf %98 : vector<16x128xf32> to vector<16x128xbf16>
    %c0_69 = arith.constant 0 : index
    %c0_70 = arith.constant 0 : index
    %101 = vector.load %arg10[%c0_69, %c0_70] : memref<128x128xbf16, #tpu.memory_space<vmem>>, vector<128x128xbf16>
    %cst_71 = arith.constant dense<0.000000e+00> : vector<16x128xf32>
    %102 = tpu.matmul %100, %101, %cst_71 {dimension_numbers = #tpu.dot_dimension_numbers<[1], [0], [0], [1], [0, 0, 1, 1], [], []>} : vector<16x128xbf16>, vector<128x128xbf16>, vector<16x128xf32> -> vector<16x128xf32>
    %c0_72 = arith.constant 0 : index
    %c0_73 = arith.constant 0 : index
    %103 = vector.load %arg11[%c0_72, %c0_73] : memref<1x128xf32, #tpu.memory_space<vmem>>, vector<1x128xf32>
    %104 = vector.broadcast %103 : vector<1x128xf32> to vector<16x128xf32>
    %105 = arith.addf %102, %104 : vector<16x128xf32>
    %c0_74 = arith.constant 0 : index
    %c0_75 = arith.constant 0 : index
    %106 = vector.load %arg13[%c0_74, %c0_75] : memref<16x128xf32, #tpu.memory_space<vmem>>, vector<16x128xf32>
    tpu.vector_store %arg13[%c0_74, %c0_75], %105 {strides = array<i32>} : memref<16x128xf32, #tpu.memory_space<vmem>>, vector<16x128xf32>,
    return
  }
  func.func @transform_0(%arg0: i32) -> (i32, i32, i32) {
    %c0_i32 = arith.constant 0 : i32
    %c0_i32_0 = arith.constant 0 : i32
    %c0_i32_1 = arith.constant 0 : i32
    return %c0_i32, %arg0, %c0_i32_0 : i32, i32, i32
  }
  func.func @transform_1(%arg0: i32) -> (i32, i32) {
    %c0_i32 = arith.constant 0 : i32
    %c0_i32_0 = arith.constant 0 : i32
    %c0_i32_1 = arith.constant 0 : i32
    return %c0_i32, %c0_i32_0 : i32, i32
  }
  func.func @transform_2(%arg0: i32) -> (i32, i32) {
    %c0_i32 = arith.constant 0 : i32
    %c0_i32_0 = arith.constant 0 : i32
    %c0_i32_1 = arith.constant 0 : i32
    return %c0_i32, %c0_i32_0 : i32, i32
  }
  func.func @transform_3(%arg0: i32) -> (i32, i32) {
    %c0_i32 = arith.constant 0 : i32
    %c0_i32_0 = arith.constant 0 : i32
    %c0_i32_1 = arith.constant 0 : i32
    return %c0_i32, %c0_i32_0 : i32, i32
  }
  func.func @transform_4(%arg0: i32) -> (i32, i32) {
    %c0_i32 = arith.constant 0 : i32
    %c0_i32_0 = arith.constant 0 : i32
    %c0_i32_1 = arith.constant 0 : i32
    return %c0_i32, %c0_i32_0 : i32, i32
  }
  func.func @transform_5(%arg0: i32) -> (i32, i32) {
    %c0_i32 = arith.constant 0 : i32
    %c0_i32_0 = arith.constant 0 : i32
    %c0_i32_1 = arith.constant 0 : i32
    return %c0_i32, %c0_i32_0 : i32, i32
  }
  func.func @transform_6(%arg0: i32) -> (i32, i32) {
    %c0_i32 = arith.constant 0 : i32
    %c0_i32_0 = arith.constant 0 : i32
    %c0_i32_1 = arith.constant 0 : i32
    return %c0_i32, %c0_i32_0 : i32, i32
  }
  func.func @transform_7(%arg0: i32) -> (i32, i32) {
    %c0_i32 = arith.constant 0 : i32
    %c0_i32_0 = arith.constant 0 : i32
    %c0_i32_1 = arith.constant 0 : i32
    return %c0_i32, %c0_i32_0 : i32, i32
  }
  func.func @transform_8(%arg0: i32) -> (i32, i32) {
    %c0_i32 = arith.constant 0 : i32
    %c0_i32_0 = arith.constant 0 : i32
    %c0_i32_1 = arith.constant 0 : i32
    return %c0_i32, %c0_i32_0 : i32, i32
  }
  func.func @transform_9(%arg0: i32) -> (i32, i32) {
    %c0_i32 = arith.constant 0 : i32
    %c0_i32_0 = arith.constant 0 : i32
    %c0_i32_1 = arith.constant 0 : i32
    return %c0_i32, %c0_i32_0 : i32, i32
  }
  func.func @transform_10(%arg0: i32) -> (i32, i32) {
    %c0_i32 = arith.constant 0 : i32
    %c0_i32_0 = arith.constant 0 : i32
    %c0_i32_1 = arith.constant 0 : i32
    return %c0_i32, %c0_i32_0 : i32, i32
  }
  func.func @transform_11(%arg0: i32) -> (i32, i32) {
    %c0_i32 = arith.constant 0 : i32
    %c0_i32_0 = arith.constant 0 : i32
    return %arg0, %c0_i32 : i32, i32
  }
  func.func @transform_12(%arg0: i32) -> (i32, i32) {
    %c0_i32 = arith.constant 0 : i32
    %c0_i32_0 = arith.constant 0 : i32
    return %arg0, %c0_i32 : i32, i32
  }
}

</mosaic_0001>

<llo_original>
// kernel: net_forward.1
$region0: #{net_forward.1}
  #allocation0 [shape = 'u32[]', space=smem, size = 0x4, offset = 0x4, fixed_abs, tag = 'smem constant byte address 0x4 - core index']
  #allocation1 [shape = 'u32[144,128]{1,0:T(1,128)}', space=vmem, size = 0x12000, scoped, tag = 'internal scratch']
  #allocation2 [shape = 'bf16[64,768]{1,0:T(8,128)(2,1)}', space=vmem, size = 0x18000, scoped, tag = 'scratch operand']
  %s0 = inlined_call_operand.vmem [shape: bf16[12,16,168], index: 0, kind: input, shape index: {}]
  %s1 = inlined_call_operand.vmem [shape: bf16[168,512], index: 1, kind: input, shape index: {}]
  %s2 = inlined_call_operand.vmem [shape: f32[1,128], index: 2, kind: input, shape index: {}]
  %s3 = inlined_call_operand.hbm [shape: bf16[256,256], index: 3, kind: input, shape index: {}]
  %s4 = inlined_call_operand.hbm [shape: bf16[768,512], index: 4, kind: input, shape index: {}]
  %s5 = inlined_call_operand.vmem [shape: f32[1,128], index: 5, kind: input, shape index: {}]
  %s6 = inlined_call_operand.hbm [shape: bf16[256,256], index: 6, kind: input, shape index: {}]
  %s7 = inlined_call_operand.hbm [shape: bf16[512,128], index: 7, kind: input, shape index: {}]
  %s8 = inlined_call_operand.vmem [shape: f32[1,128], index: 8, kind: input, shape index: {}]
  %s9 = inlined_call_operand.vmem [shape: bf16[128,128], index: 9, kind: input, shape index: {}]
  %s10 = inlined_call_operand.vmem [shape: f32[1,128], index: 10, kind: input, shape index: {}]
  %s11 = inlined_call_operand.vmem [shape: f32[16,128], index: 11, kind: output, shape index: {0}]
  %s12 = inlined_call_operand.vmem [shape: f32[16,128], index: 12, kind: output, shape index: {1}]
  %13 = xla_tuple %s11, %s12
  %s14 = sld [smem:[#allocation0]]
  $region78: #{net_forward.1} parent=0
    _
  %s16 = ssub.s32 1, %s14
  %s17 = scalar_select 0, %s16, %s14
  $region1: #{net_forward.1} parent=0
    #allocation3 [shape = 'u8[131072]{0}', space=vmem, size = 0x20000, scoped, tag = 'input window, operand 3, single buffered']
    #allocation4 [shape = 's32[1]{0}', space=sflag, size = 0x4, scoped, tag = 'scoped memory for net_forward.1']
    #allocation5 [shape = 'u8[786432]{0}', space=vmem, size = 0xc0000, scoped, tag = 'input window, operand 4, single buffered']
    #allocation6 [shape = 's32[1]{0}', space=sflag, size = 0x4, scoped, tag = 'scoped memory for net_forward.1']
    #allocation7 [shape = 'u8[131072]{0}', space=vmem, size = 0x20000, scoped, tag = 'input window, operand 6, single buffered']
    #allocation8 [shape = 'u8[131072]{0}', space=vmem, size = 0x20000, scoped, tag = 'input window, operand 7, single buffered']
    #allocation9 [shape = 's32[1]{0}', space=sflag, size = 0x4, scoped, tag = 'scoped memory for net_forward.1']
    %18 = vsyncpa [#allocation4], 0
    %19 = vsyncpa [#allocation6], 0
    %20 = vsyncpa [#allocation9], 0
    // Predicated region
    $region2: #{net_forward.1} parent=1 // pred_check
      _
    $region3: #{net_forward.1} parent=1 // pred_check_branch
      %22 = sbr.rel (0) target = $region5
    $region4: #{net_forward.1} parent=1 // pred_region
      _
    $region5: #{net_forward.1} parent=1 // pred_fallthru
      _
    // Predicated region
    $region6: #{net_forward.1} parent=1 // pred_check
      _
    $region7: #{net_forward.1} parent=1 // pred_check_branch
      %24 = sbr.rel (0) target = $region9
    $region8: #{net_forward.1} parent=1 // pred_region
      _
    $region9: #{net_forward.1} parent=1 // pred_fallthru
      _
    // Predicated region
    $region10: #{net_forward.1} parent=1 // pred_check
      _
    $region11: #{net_forward.1} parent=1 // pred_check_branch
      %26 = sbr.rel (0) target = $region13
    $region12: #{net_forward.1} parent=1 // pred_region
      _
    $region13: #{net_forward.1} parent=1 // pred_fallthru
      _
    // Predicated region
    $region14: #{net_forward.1} parent=1 // pred_check
      _
    $region15: #{net_forward.1} parent=1 // pred_check_branch
      %28 = sbr.rel (0) target = $region17
    $region16: #{net_forward.1} parent=1 // pred_region
      %s30 = ssub.s32 4096, 4096
      %31 = vsyncadd [#allocation4], %s30
      %s32 = sshll.u32 [#allocation3], 4
      %s33 = int_to_ptr.vmem [resolvable:$true] %s32
      %38 = dma.hbm_to_vmem [thread:$0]  %s3, 4096, %s33, [#allocation4], 128, 128, 8
    $region17: #{net_forward.1} parent=1 // pred_fallthru
      _
    // Predicated region
    $region18: #{net_forward.1} parent=1 // pred_check
      _
    $region19: #{net_forward.1} parent=1 // pred_check_branch
      %40 = sbr.rel (0) target = $region21
    $region20: #{net_forward.1} parent=1 // pred_region
      %s42 = ssub.s32 24576, 24576
      %43 = vsyncadd [#allocation6], %s42
      %s44 = sshll.u32 [#allocation5], 4
      %s45 = int_to_ptr.vmem [resolvable:$true] %s44
      %50 = dma.hbm_to_vmem [thread:$0]  %s4, 24576, %s45, [#allocation6], 256, 256, 16
    $region21: #{net_forward.1} parent=1 // pred_fallthru
      _
    // Predicated region
    $region22: #{net_forward.1} parent=1 // pred_check
      _
    $region23: #{net_forward.1} parent=1 // pred_check_branch
      %52 = sbr.rel (0) target = $region25
    $region24: #{net_forward.1} parent=1 // pred_region
      _
    $region25: #{net_forward.1} parent=1 // pred_fallthru
      _
    // Predicated region
    $region26: #{net_forward.1} parent=1 // pred_check
      _
    $region27: #{net_forward.1} parent=1 // pred_check_branch
      %54 = sbr.rel (0) target = $region29
    $region28: #{net_forward.1} parent=1 // pred_region
      %s56 = ssub.s32 4096, 4096
      %57 = vsyncadd [#allocation6], %s56
      %s58 = sshll.u32 [#allocation7], 4
      %s59 = int_to_ptr.vmem [resolvable:$true] %s58
      %64 = dma.hbm_to_vmem [thread:$0]  %s6, 4096, %s59, [#allocation6], 128, 128, 8
    $region29: #{net_forward.1} parent=1 // pred_fallthru
      _
    // Predicated region
    $region30: #{net_forward.1} parent=1 // pred_check
      _
    $region31: #{net_forward.1} parent=1 // pred_check_branch
      %66 = sbr.rel (0) target = $region33
    $region32: #{net_forward.1} parent=1 // pred_region
      %s68 = ssub.s32 4096, 4096
      %69 = vsyncadd [#allocation9], %s68
      %s70 = sshll.u32 [#allocation8], 4
      %s71 = int_to_ptr.vmem [resolvable:$true] %s70
      %76 = dma.hbm_to_vmem [thread:$0]  %s7, 4096, %s71, [#allocation9], 64, 64, 4
    $region33: #{net_forward.1} parent=1 // pred_fallthru
      _
    // Predicated region
    $region34: #{net_forward.1} parent=1 // pred_check
      _
    $region35: #{net_forward.1} parent=1 // pred_check_branch
      %78 = sbr.rel (0) target = $region37
    $region36: #{net_forward.1} parent=1 // pred_region
      _
    $region37: #{net_forward.1} parent=1 // pred_fallthru
      _
    // Predicated region
    $region38: #{net_forward.1} parent=1 // pred_check
      _
    $region39: #{net_forward.1} parent=1 // pred_check_branch
      %80 = sbr.rel (0) target = $region41
    $region40: #{net_forward.1} parent=1 // pred_region
      _
    $region41: #{net_forward.1} parent=1 // pred_fallthru
      _
    // Predicated region
    $region42: #{net_forward.1} parent=1 // pred_check
      _
    $region43: #{net_forward.1} parent=1 // pred_check_branch
      %82 = sbr.rel (0) target = $region45
    $region44: #{net_forward.1} parent=1 // pred_region
      _
    $region45: #{net_forward.1} parent=1 // pred_fallthru
      _
    // Predicated region
    $region46: #{net_forward.1} parent=1 // pred_check
      _
    $region47: #{net_forward.1} parent=1 // pred_check_branch
      %84 = sbr.rel (0) target = $region49
    $region48: #{net_forward.1} parent=1 // pred_region
      %85 = dma.done [#allocation4], 4096
    $region49: #{net_forward.1} parent=1 // pred_fallthru
      _
    // Predicated region
    $region50: #{net_forward.1} parent=1 // pred_check
      _
    $region51: #{net_forward.1} parent=1 // pred_check_branch
      %87 = sbr.rel (0) target = $region53
    $region52: #{net_forward.1} parent=1 // pred_region
      %88 = dma.done [#allocation6], 24576
    $region53: #{net_forward.1} parent=1 // pred_fallthru
      _
    // Predicated region
    $region54: #{net_forward.1} parent=1 // pred_check
      _
    $region55: #{net_forward.1} parent=1 // pred_check_branch
      %90 = sbr.rel (0) target = $region57
    $region56: #{net_forward.1} parent=1 // pred_region
      %91 = dma.done [#allocation6], 4096
    $region57: #{net_forward.1} parent=1 // pred_fallthru
      _
    // Predicated region
    $region58: #{net_forward.1} parent=1 // pred_check
      _
    $region59: #{net_forward.1} parent=1 // pred_check_branch
      %93 = sbr.rel (0) target = $region61
    $region60: #{net_forward.1} parent=1 // pred_region
      %94 = dma.done [#allocation9], 4096
    $region61: #{net_forward.1} parent=1 // pred_fallthru
      _
    %v96 = vld [vmem:[%s0] sm:$0xff]
    %v97 = vld [vmem:[%s0 + $0x8] sm:$0xff]
    %v98 = vld [vmem:[%s0 + $0x10] sm:$0xff]
    %v99 = vld [vmem:[%s0 + $0x18] sm:$0xff]
    %v100 = vld [vmem:[%s0 + $0x20] sm:$0xff]
    %v101 = vld [vmem:[%s0 + $0x28] sm:$0xff]
    %v102 = vld [vmem:[%s0 + $0x30] sm:$0xff]
    %v103 = vld [vmem:[%s0 + $0x38] sm:$0xff]
    %v104 = vld [vmem:[%s0 + $0x40] sm:$0xff]
    %v105 = vld [vmem:[%s0 + $0x48] sm:$0xff]
    %v106 = vld [vmem:[%s0 + $0x50] sm:$0xff]
    %v107 = vld [vmem:[%s0 + $0x58] sm:$0xff]
    %v108 = vld [vmem:[%s0 + $0x60] sm:$0xff]
    %v109 = vld [vmem:[%s0 + $0x68] sm:$0xff]
    %v110 = vld [vmem:[%s0 + $0x70] sm:$0xff]
    %v111 = vld [vmem:[%s0 + $0x78] sm:$0xff]
    %v112 = vld [vmem:[%s0 + $0x80] sm:$0xff]
    %v113 = vld [vmem:[%s0 + $0x88] sm:$0xff]
    %v114 = vld [vmem:[%s0 + $0x90] sm:$0xff]
    %v115 = vld [vmem:[%s0 + $0x98] sm:$0xff]
    %v116 = vld [vmem:[%s0 + $0xa0] sm:$0xff]
    %v117 = vld [vmem:[%s0 + $0xa8] sm:$0xff]
    %v118 = vld [vmem:[%s0 + $0xb0] sm:$0xff]
    %v119 = vld [vmem:[%s0 + $0xb8] sm:$0xff]
    %v120 = vld [vmem:[%s1] sm:$0xff]
    %v121 = vld [vmem:[%s1 + $0x8] sm:$0xff]
    %v122 = vld [vmem:[%s1 + $0x10] sm:$0xff]
    %v123 = vld [vmem:[%s1 + $0x18] sm:$0xff]
    %v124 = vld [vmem:[%s1 + $0x20] sm:$0xff]
    %v125 = vld [vmem:[%s1 + $0x28] sm:$0xff]
    %v126 = vld [vmem:[%s1 + $0x30] sm:$0xff]
    %v127 = vld [vmem:[%s1 + $0x38] sm:$0xff]
    %v128 = vld [vmem:[%s1 + $0x40] sm:$0xff]
    %v129 = vld [vmem:[%s1 + $0x48] sm:$0xff]
    %v130 = vld [vmem:[%s1 + $0x50] sm:$0xff]
    %v131 = vld [vmem:[%s1 + $0x58] sm:$0xff]
    %v132 = vld [vmem:[%s1 + $0x60] sm:$0xff]
    %v133 = vld [vmem:[%s1 + $0x68] sm:$0xff]
    %v134 = vld [vmem:[%s1 + $0x70] sm:$0xff]
    %v135 = vld [vmem:[%s1 + $0x78] sm:$0xff]
    %v136 = vld [vmem:[%s1 + $0x80] sm:$0xff]
    %v137 = vld [vmem:[%s1 + $0x88] sm:$0xff]
    %v138 = vld [vmem:[%s1 + $0x90] sm:$0xff]
    %v139 = vld [vmem:[%s1 + $0x98] sm:$0xff]
    %v140 = vld [vmem:[%s1 + $0xa0] sm:$0xff]
    %v141 = vld [vmem:[%s1 + $0xa8] sm:$0xff]
    %v142 = vld [vmem:[%s1 + $0xb0] sm:$0xff]
    %v143 = vld [vmem:[%s1 + $0xb8] sm:$0xff]
    %v144 = vld [vmem:[%s1 + $0xc0] sm:$0xff]
    %v145 = vld [vmem:[%s1 + $0xc8] sm:$0xff]
    %v146 = vld [vmem:[%s1 + $0xd0] sm:$0xff]
    %v147 = vld [vmem:[%s1 + $0xd8] sm:$0xff]
    %v148 = vld [vmem:[%s1 + $0xe0] sm:$0xff]
    %v149 = vld [vmem:[%s1 + $0xe8] sm:$0xff]
    %v150 = vld [vmem:[%s1 + $0xf0] sm:$0xff]
    %v151 = vld [vmem:[%s1 + $0xf8] sm:$0xff]
    %v152 = vld [vmem:[%s1 + $0x100] sm:$0xff]
    %v153 = vld [vmem:[%s1 + $0x108] sm:$0xff]
    %v154 = vld [vmem:[%s1 + $0x110] sm:$0xff]
    %v155 = vld [vmem:[%s1 + $0x118] sm:$0xff]
    %v156 = vld [vmem:[%s1 + $0x120] sm:$0xff]
    %v157 = vld [vmem:[%s1 + $0x128] sm:$0xff]
    %v158 = vld [vmem:[%s1 + $0x130] sm:$0xff]
    %v159 = vld [vmem:[%s1 + $0x138] sm:$0xff]
    %v160 = vld [vmem:[%s1 + $0x140] sm:$0xff]
    %v161 = vld [vmem:[%s1 + $0x148] sm:$0xff]
    %v186 = vunpack.c.l.b16 %v96
    %v187 = vunpack.c.h.b16 %v96
    %v188 = vunpack.c.l.b16 %v97
    %v189 = vunpack.c.h.b16 %v97
    %v190 = vunpack.c.l.b16 %v98
    %v191 = vunpack.c.h.b16 %v98
    %v192 = vunpack.c.l.b16 %v99
    %v193 = vunpack.c.h.b16 %v99
    %v194 = vunpack.c.l.b16 %v100
    %v195 = vunpack.c.h.b16 %v100
    %v196 = vunpack.c.l.b16 %v101
    %v197 = vunpack.c.h.b16 %v101
    %v198 = vunpack.c.l.b16 %v102
    %v199 = vunpack.c.h.b16 %v102
    %v200 = vunpack.c.l.b16 %v103
    %v201 = vunpack.c.h.b16 %v103
    %v202 = vunpack.c.l.b16 %v104
    %v203 = vunpack.c.h.b16 %v104
    %v204 = vunpack.c.l.b16 %v105
    %v205 = vunpack.c.h.b16 %v105
    %v206 = vunpack.c.l.b16 %v106
    %v207 = vunpack.c.h.b16 %v106
    %v208 = vunpack.c.l.b16 %v107
    %v209 = vunpack.c.h.b16 %v107
    %v210 = vunpack.c.l.b16 %v108
    %v211 = vunpack.c.h.b16 %v108
    %v212 = vunpack.c.l.b16 %v109
    %v213 = vunpack.c.h.b16 %v109
    %v214 = vunpack.c.l.b16 %v110
    %v215 = vunpack.c.h.b16 %v110
    %v216 = vunpack.c.l.b16 %v111
    %v217 = vunpack.c.h.b16 %v111
    %v218 = vunpack.c.l.b16 %v112
    %v219 = vunpack.c.h.b16 %v112
    %v220 = vunpack.c.l.b16 %v113
    %v221 = vunpack.c.h.b16 %v113
    %v222 = vunpack.c.l.b16 %v114
    %v223 = vunpack.c.h.b16 %v114
    %v224 = vunpack.c.l.b16 %v115
    %v225 = vunpack.c.h.b16 %v115
    %v226 = vunpack.c.l.b16 %v116
    %v227 = vunpack.c.h.b16 %v116
    %v228 = vunpack.c.l.b16 %v117
    %v229 = vunpack.c.h.b16 %v117
    %v230 = vunpack.c.l.b16 %v118
    %v231 = vunpack.c.h.b16 %v118
    %v232 = vunpack.c.l.b16 %v119
    %v233 = vunpack.c.h.b16 %v119
    %v234 = vpack.c.b16 %v188, %v186
    %v235 = vpack.c.b16 %v189, %v187
    %v236 = vpack.c.b16 %v192, %v190
    %v237 = vpack.c.b16 %v193, %v191
    %v238 = vpack.c.b16 %v196, %v194
    %v239 = vpack.c.b16 %v197, %v195
    %v240 = vpack.c.b16 %v200, %v198
    %v241 = vpack.c.b16 %v201, %v199
    %v242 = vpack.c.b16 %v204, %v202
    %v243 = vpack.c.b16 %v205, %v203
    %v244 = vpack.c.b16 %v208, %v206
    %v245 = vpack.c.b16 %v209, %v207
    %v246 = vpack.c.b16 %v212, %v210
    %v247 = vpack.c.b16 %v213, %v211
    %v248 = vpack.c.b16 %v216, %v214
    %v249 = vpack.c.b16 %v217, %v215
    %v250 = vpack.c.b16 %v220, %v218
    %v251 = vpack.c.b16 %v221, %v219
    %v252 = vpack.c.b16 %v224, %v222
    %v253 = vpack.c.b16 %v225, %v223
    %v254 = vpack.c.b16 %v228, %v226
    %v255 = vpack.c.b16 %v229, %v227
    %v256 = vpack.c.b16 %v232, %v230
    %v257 = vpack.c.b16 %v233, %v231
    %v312 = vunpack.c.l.b16 %v120
    %v313 = vunpack.c.h.b16 %v120
    %v314 = vunpack.c.l.b16 %v121
    %v315 = vunpack.c.h.b16 %v121
    %v316 = vunpack.c.l.b16 %v122
    %v317 = vunpack.c.h.b16 %v122
    %v318 = vunpack.c.l.b16 %v123
    %v319 = vunpack.c.h.b16 %v123
    %v320 = vunpack.c.l.b16 %v124
    %v321 = vunpack.c.h.b16 %v124
    %v322 = vunpack.c.l.b16 %v125
    %v323 = vunpack.c.h.b16 %v125
    %v324 = vunpack.c.l.b16 %v126
    %v325 = vunpack.c.h.b16 %v126
    %v326 = vunpack.c.l.b16 %v127
    %v327 = vunpack.c.h.b16 %v127
    %v328 = vunpack.c.l.b16 %v128
    %v329 = vunpack.c.h.b16 %v128
    %v330 = vunpack.c.l.b16 %v129
    %v331 = vunpack.c.h.b16 %v129
    %v332 = vunpack.c.l.b16 %v130
    %v333 = vunpack.c.h.b16 %v130
    %v334 = vunpack.c.l.b16 %v131
    %v335 = vunpack.c.h.b16 %v131
    %v336 = vunpack.c.l.b16 %v132
    %v337 = vunpack.c.h.b16 %v132
    %v338 = vunpack.c.l.b16 %v133
    %v339 = vunpack.c.h.b16 %v133
    %v340 = vunpack.c.l.b16 %v134
    %v341 = vunpack.c.h.b16 %v134
    %v342 = vunpack.c.l.b16 %v135
    %v343 = vunpack.c.h.b16 %v135
    %v344 = vunpack.c.l.b16 %v136
    %v345 = vunpack.c.h.b16 %v136
    %v346 = vunpack.c.l.b16 %v137
    %v347 = vunpack.c.h.b16 %v137
    %v348 = vunpack.c.l.b16 %v138
    %v349 = vunpack.c.h.b16 %v138
    %v350 = vunpack.c.l.b16 %v139
    %v351 = vunpack.c.h.b16 %v139
    %v352 = vunpack.c.l.b16 %v140
    %v353 = vunpack.c.h.b16 %v140
    %v354 = vunpack.c.l.b16 %v141
    %v355 = vunpack.c.h.b16 %v141
    %v356 = vunpack.c.l.b16 %v142
    %v357 = vunpack.c.h.b16 %v142
    %v358 = vunpack.c.l.b16 %v143
    %v359 = vunpack.c.h.b16 %v143
    %v360 = vunpack.c.l.b16 %v144
    %v361 = vunpack.c.h.b16 %v144
    %v362 = vunpack.c.l.b16 %v145
    %v363 = vunpack.c.h.b16 %v145
    %v364 = vunpack.c.l.b16 %v146
    %v365 = vunpack.c.h.b16 %v146
    %v366 = vunpack.c.l.b16 %v147
    %v367 = vunpack.c.h.b16 %v147
    %v368 = vunpack.c.l.b16 %v148
    %v369 = vunpack.c.h.b16 %v148
    %v370 = vunpack.c.l.b16 %v149
    %v371 = vunpack.c.h.b16 %v149
    %v372 = vunpack.c.l.b16 %v150
    %v373 = vunpack.c.h.b16 %v150
    %v374 = vunpack.c.l.b16 %v151
    %v375 = vunpack.c.h.b16 %v151
    %v376 = vunpack.c.l.b16 %v152
    %v377 = vunpack.c.h.b16 %v152
    %v378 = vunpack.c.l.b16 %v153
    %v379 = vunpack.c.h.b16 %v153
    %v380 = vunpack.c.l.b16 %v154
    %v381 = vunpack.c.h.b16 %v154
    %v382 = vunpack.c.l.b16 %v155
    %v383 = vunpack.c.h.b16 %v155
    %v384 = vunpack.c.l.b16 %v156
    %v385 = vunpack.c.h.b16 %v156
    %v386 = vunpack.c.l.b16 %v157
    %v387 = vunpack.c.h.b16 %v157
    %v388 = vunpack.c.l.b16 %v158
    %v389 = vunpack.c.h.b16 %v158
    %v390 = vunpack.c.l.b16 %v159
    %v391 = vunpack.c.h.b16 %v159
    %v392 = vunpack.c.l.b16 %v160
    %v393 = vunpack.c.h.b16 %v160
    %v394 = vunpack.c.l.b16 %v161
    %v395 = vunpack.c.h.b16 %v161
    %v396 = vpack.c.b16 %v316, %v312
    %v397 = vpack.c.b16 %v317, %v313
    %v398 = vpack.c.b16 %v318, %v314
    %v399 = vpack.c.b16 %v319, %v315
    %v400 = vpack.c.b16 %v324, %v320
    %v401 = vpack.c.b16 %v325, %v321
    %v402 = vpack.c.b16 %v326, %v322
    %v403 = vpack.c.b16 %v327, %v323
    %v404 = vpack.c.b16 %v332, %v328
    %v405 = vpack.c.b16 %v333, %v329
    %v406 = vpack.c.b16 %v334, %v330
    %v407 = vpack.c.b16 %v335, %v331
    %v408 = vpack.c.b16 %v340, %v336
    %v409 = vpack.c.b16 %v341, %v337
    %v410 = vpack.c.b16 %v342, %v338
    %v411 = vpack.c.b16 %v343, %v339
    %v412 = vpack.c.b16 %v348, %v344
    %v413 = vpack.c.b16 %v349, %v345
    %v414 = vpack.c.b16 %v350, %v346
    %v415 = vpack.c.b16 %v351, %v347
    %v416 = vpack.c.b16 %v356, %v352
    %v417 = vpack.c.b16 %v357, %v353
    %v418 = vpack.c.b16 %v358, %v354
    %v419 = vpack.c.b16 %v359, %v355
    %v420 = vpack.c.b16 %v364, %v360
    %v421 = vpack.c.b16 %v365, %v361
    %v422 = vpack.c.b16 %v366, %v362
    %v423 = vpack.c.b16 %v367, %v363
    %v424 = vpack.c.b16 %v372, %v368
    %v425 = vpack.c.b16 %v373, %v369
    %v426 = vpack.c.b16 %v374, %v370
    %v427 = vpack.c.b16 %v375, %v371
    %v428 = vpack.c.b16 %v380, %v376
    %v429 = vpack.c.b16 %v381, %v377
    %v430 = vpack.c.b16 %v382, %v378
    %v431 = vpack.c.b16 %v383, %v379
    %v432 = vpack.c.b16 %v388, %v384
    %v433 = vpack.c.b16 %v389, %v385
    %v434 = vpack.c.b16 %v390, %v386
    %v435 = vpack.c.b16 %v391, %v387
    %v436 = vpack.c.b16 %v392, %v392
    %v437 = vpack.c.b16 %v393, %v393
    %v438 = vpack.c.b16 %v394, %v394
    %v439 = vpack.c.b16 %v395, %v395
    %vm480 = vcmask 326656
    %v482 = vsel %vm480, %v235, 0
    %v485 = vsel %vm480, %v237, 0
    %v488 = vsel %vm480, %v239, 0
    %v491 = vsel %vm480, %v241, 0
    %v494 = vsel %vm480, %v243, 0
    %v497 = vsel %vm480, %v245, 0
    %v500 = vsel %vm480, %v247, 0
    %v503 = vsel %vm480, %v249, 0
    %v506 = vsel %vm480, %v251, 0
    %v509 = vsel %vm480, %v253, 0
    %v512 = vsel %vm480, %v255, 0
    %v515 = vsel %vm480, %v257, 0
    %vm517 = vcmask 1043456
    %v519 = vsel %vm517, %v436, 0
    %v522 = vsel %vm517, %v437, 0
    %v525 = vsel %vm517, %v438, 0
    %v528 = vsel %vm517, %v439, 0
    %530 = vmatprep.subr.bf16.mxu0 %v425
    %531 = vmatpush1.bf16.msra.mxu0 %v424
    %532 = vmatprep.subr.bf16.mxu0 %v421
    %533 = vmatpush1.bf16.msra.mxu0 %v420
    %534 = vmatprep.subr.bf16.mxu0 %v417
    %535 = vmatpush1.bf16.msra.mxu0 %v416
    %536 = vmatprep.subr.bf16.mxu0 %v413
    %537 = vmatpush1.bf16.msra.mxu0 %v412
    %538 = vmatprep.subr.bf16.mxu0 %v409
    %539 = vmatpush1.bf16.msra.mxu0 %v408
    %540 = vmatprep.subr.bf16.mxu0 %v405
    %541 = vmatpush1.bf16.msra.mxu0 %v404
    %542 = vmatprep.subr.bf16.mxu0 %v401
    %543 = vmatpush1.bf16.msra.mxu0 %v400
    %544 = vmatprep.subr.bf16.mxu0 %v397
    %545 = vmatpush1.bf16.msra.mxu0 %v396
    %546 = vmatprep.subr.bf16.mxu0 0
    %547 = vmatpush2.bf16.msra.mxu0 0
    %548 = vmatprep.subr.bf16.mxu0 0
    %549 = vmatpush2.bf16.msra.mxu0 0
    %550 = vmatprep.subr.bf16.mxu0 0
    %551 = vmatpush2.bf16.msra.mxu0 0
    %552 = vmatprep.subr.bf16.mxu0 0
    %553 = vmatpush2.bf16.msra.mxu0 0
    %554 = vmatprep.subr.bf16.mxu0 0
    %555 = vmatpush2.bf16.msra.mxu0 0
    %556 = vmatprep.subr.bf16.mxu0 %v522
    %557 = vmatpush2.bf16.msra.mxu0 %v519
    %558 = vmatprep.subr.bf16.mxu0 %v433
    %559 = vmatpush2.bf16.msra.mxu0 %v432
    %560 = vmatprep.subr.bf16.mxu0 %v429
    %561 = vmatpush2.bf16.msra.mxu0 %v428
    %562 = vmatprep.mubr.bf16.mxu0 %v482
    %563 = vmatmul.mubr.bf16.gmra.mxu0 %v234
    %v564 = vpop.f32.mrf.mxu0
    %v565 = vadd.f32 0.0, %v564
    %v566 = vpop.f32.mrf.mxu0
    %v567 = vadd.f32 0.0, %v566
    %v568 = vpop.f32.mrf.mxu0
    %v569 = vadd.f32 0.0, %v568
    %v570 = vpop.f32.mrf.mxu0
    %v571 = vadd.f32 0.0, %v570
    %572 = vmatprep.mubr.bf16.mxu0 %v485
    %573 = vmatmul.mubr.bf16.gmra.mxu0 %v236
    %v574 = vpop.f32.mrf.mxu0
    %v575 = vadd.f32 0.0, %v574
    %v576 = vpop.f32.mrf.mxu0
    %v577 = vadd.f32 0.0, %v576
    %v578 = vpop.f32.mrf.mxu0
    %v579 = vadd.f32 0.0, %v578
    %v580 = vpop.f32.mrf.mxu0
    %v581 = vadd.f32 0.0, %v580
    %582 = vmatprep.mubr.bf16.mxu0 %v488
    %583 = vmatmul.mubr.bf16.gmra.mxu0 %v238
    %v584 = vpop.f32.mrf.mxu0
    %v585 = vadd.f32 0.0, %v584
    %v586 = vpop.f32.mrf.mxu0
    %v587 = vadd.f32 0.0, %v586
    %v588 = vpop.f32.mrf.mxu0
    %v589 = vadd.f32 0.0, %v588
    %v590 = vpop.f32.mrf.mxu0
    %v591 = vadd.f32 0.0, %v590
    %592 = vmatprep.mubr.bf16.mxu0 %v491
    %593 = vmatmul.mubr.bf16.gmra.mxu0 %v240
    %v594 = vpop.f32.mrf.mxu0
    %v595 = vadd.f32 0.0, %v594
    %v596 = vpop.f32.mrf.mxu0
    %v597 = vadd.f32 0.0, %v596
    %v598 = vpop.f32.mrf.mxu0
    %v599 = vadd.f32 0.0, %v598
    %v600 = vpop.f32.mrf.mxu0
    %v601 = vadd.f32 0.0, %v600
    %602 = vmatprep.mubr.bf16.mxu0 %v494
    %603 = vmatmul.mubr.bf16.gmra.mxu0 %v242
    %v604 = vpop.f32.mrf.mxu0
    %v605 = vadd.f32 0.0, %v604
    %v606 = vpop.f32.mrf.mxu0
    %v607 = vadd.f32 0.0, %v606
    %v608 = vpop.f32.mrf.mxu0
    %v609 = vadd.f32 0.0, %v608
    %v610 = vpop.f32.mrf.mxu0
    %v611 = vadd.f32 0.0, %v610
    %612 = vmatprep.mubr.bf16.mxu0 %v497
    %613 = vmatmul.mubr.bf16.gmra.mxu0 %v244
    %v614 = vpop.f32.mrf.mxu0
    %v615 = vadd.f32 0.0, %v614
    %v616 = vpop.f32.mrf.mxu0
    %v617 = vadd.f32 0.0, %v616
    %v618 = vpop.f32.mrf.mxu0
    %v619 = vadd.f32 0.0, %v618
    %v620 = vpop.f32.mrf.mxu0
    %v621 = vadd.f32 0.0, %v620
    %622 = vmatprep.mubr.bf16.mxu0 %v500
    %623 = vmatmul.mubr.bf16.gmra.mxu0 %v246
    %v624 = vpop.f32.mrf.mxu0
    %v625 = vadd.f32 0.0, %v624
    %v626 = vpop.f32.mrf.mxu0
    %v627 = vadd.f32 0.0, %v626
    %v628 = vpop.f32.mrf.mxu0
    %v629 = vadd.f32 0.0, %v628
    %v630 = vpop.f32.mrf.mxu0
    %v631 = vadd.f32 0.0, %v630
    %632 = vmatprep.mubr.bf16.mxu0 %v503
    %633 = vmatmul.mubr.bf16.gmra.mxu0 %v248
    %v634 = vpop.f32.mrf.mxu0
    %v635 = vadd.f32 0.0, %v634
    %v636 = vpop.f32.mrf.mxu0
    %v637 = vadd.f32 0.0, %v636
    %v638 = vpop.f32.mrf.mxu0
    %v639 = vadd.f32 0.0, %v638
    %v640 = vpop.f32.mrf.mxu0
    %v641 = vadd.f32 0.0, %v640
    %642 = vmatprep.mubr.bf16.mxu0 %v506
    %643 = vmatmul.mubr.bf16.gmra.mxu0 %v250
    %v644 = vpop.f32.mrf.mxu0
    %v645 = vadd.f32 0.0, %v644
    %v646 = vpop.f32.mrf.mxu0
    %v647 = vadd.f32 0.0, %v646
    %v648 = vpop.f32.mrf.mxu0
    %v649 = vadd.f32 0.0, %v648
    %v650 = vpop.f32.mrf.mxu0
    %v651 = vadd.f32 0.0, %v650
    %652 = vmatprep.mubr.bf16.mxu0 %v509
    %653 = vmatmul.mubr.bf16.gmra.mxu0 %v252
    %v654 = vpop.f32.mrf.mxu0
    %v655 = vadd.f32 0.0, %v654
    %v656 = vpop.f32.mrf.mxu0
    %v657 = vadd.f32 0.0, %v656
    %v658 = vpop.f32.mrf.mxu0
    %v659 = vadd.f32 0.0, %v658
    %v660 = vpop.f32.mrf.mxu0
    %v661 = vadd.f32 0.0, %v660
    %662 = vmatprep.mubr.bf16.mxu0 %v512
    %663 = vmatmul.mubr.bf16.gmra.mxu0 %v254
    %v664 = vpop.f32.mrf.mxu0
    %v665 = vadd.f32 0.0, %v664
    %v666 = vpop.f32.mrf.mxu0
    %v667 = vadd.f32 0.0, %v666
    %v668 = vpop.f32.mrf.mxu0
    %v669 = vadd.f32 0.0, %v668
    %v670 = vpop.f32.mrf.mxu0
    %v671 = vadd.f32 0.0, %v670
    %672 = vmatprep.mubr.bf16.mxu0 %v515
    %673 = vmatmul.mubr.bf16.gmra.mxu0 %v256
    %v674 = vpop.f32.mrf.mxu0
    %v675 = vadd.f32 0.0, %v674
    %v676 = vpop.f32.mrf.mxu0
    %v677 = vadd.f32 0.0, %v676
    %v678 = vpop.f32.mrf.mxu0
    %v679 = vadd.f32 0.0, %v678
    %v680 = vpop.f32.mrf.mxu0
    %v681 = vadd.f32 0.0, %v680
    %682 = vdwg.mxu0
    %683 = vmatprep.subr.bf16.mxu0 %v427
    %684 = vmatpush1.bf16.msra.mxu0 %v426
    %685 = vmatprep.subr.bf16.mxu0 %v423
    %686 = vmatpush1.bf16.msra.mxu0 %v422
    %687 = vmatprep.subr.bf16.mxu0 %v419
    %688 = vmatpush1.bf16.msra.mxu0 %v418
    %689 = vmatprep.subr.bf16.mxu0 %v415
    %690 = vmatpush1.bf16.msra.mxu0 %v414
    %691 = vmatprep.subr.bf16.mxu0 %v411
    %692 = vmatpush1.bf16.msra.mxu0 %v410
    %693 = vmatprep.subr.bf16.mxu0 %v407
    %694 = vmatpush1.bf16.msra.mxu0 %v406
    %695 = vmatprep.subr.bf16.mxu0 %v403
    %696 = vmatpush1.bf16.msra.mxu0 %v402
    %697 = vmatprep.subr.bf16.mxu0 %v399
    %698 = vmatpush1.bf16.msra.mxu0 %v398
    %699 = vmatprep.subr.bf16.mxu0 0
    %700 = vmatpush2.bf16.msra.mxu0 0
    %701 = vmatprep.subr.bf16.mxu0 0
    %702 = vmatpush2.bf16.msra.mxu0 0
    %703 = vmatprep.subr.bf16.mxu0 0
    %704 = vmatpush2.bf16.msra.mxu0 0
    %705 = vmatprep.subr.bf16.mxu0 0
    %706 = vmatpush2.bf16.msra.mxu0 0
    %707 = vmatprep.subr.bf16.mxu0 0
    %708 = vmatpush2.bf16.msra.mxu0 0
    %709 = vmatprep.subr.bf16.mxu0 %v528
    %710 = vmatpush2.bf16.msra.mxu0 %v525
    %711 = vmatprep.subr.bf16.mxu0 %v435
    %712 = vmatpush2.bf16.msra.mxu0 %v434
    %713 = vmatprep.subr.bf16.mxu0 %v431
    %714 = vmatpush2.bf16.msra.mxu0 %v430
    %715 = vmatprep.mubr.bf16.mxu0 %v482
    %716 = vmatmul.mubr.bf16.gmra.mxu0 %v234
    %v717 = vpop.f32.mrf.mxu0
    %v718 = vadd.f32 0.0, %v717
    %v719 = vpop.f32.mrf.mxu0
    %v720 = vadd.f32 0.0, %v719
    %v721 = vpop.f32.mrf.mxu0
    %v722 = vadd.f32 0.0, %v721
    %v723 = vpop.f32.mrf.mxu0
    %v724 = vadd.f32 0.0, %v723
    %725 = vmatprep.mubr.bf16.mxu0 %v485
    %726 = vmatmul.mubr.bf16.gmra.mxu0 %v236
    %v727 = vpop.f32.mrf.mxu0
    %v728 = vadd.f32 0.0, %v727
    %v729 = vpop.f32.mrf.mxu0
    %v730 = vadd.f32 0.0, %v729
    %v731 = vpop.f32.mrf.mxu0
    %v732 = vadd.f32 0.0, %v731
    %v733 = vpop.f32.mrf.mxu0
    %v734 = vadd.f32 0.0, %v733
    %735 = vmatprep.mubr.bf16.mxu0 %v488
    %736 = vmatmul.mubr.bf16.gmra.mxu0 %v238
    %v737 = vpop.f32.mrf.mxu0
    %v738 = vadd.f32 0.0, %v737
    %v739 = vpop.f32.mrf.mxu0
    %v740 = vadd.f32 0.0, %v739
    %v741 = vpop.f32.mrf.mxu0
    %v742 = vadd.f32 0.0, %v741
    %v743 = vpop.f32.mrf.mxu0
    %v744 = vadd.f32 0.0, %v743
    %745 = vmatprep.mubr.bf16.mxu0 %v491
    %746 = vmatmul.mubr.bf16.gmra.mxu0 %v240
    %v747 = vpop.f32.mrf.mxu0
    %v748 = vadd.f32 0.0, %v747
    %v749 = vpop.f32.mrf.mxu0
    %v750 = vadd.f32 0.0, %v749
    %v751 = vpop.f32.mrf.mxu0
    %v752 = vadd.f32 0.0, %v751
    %v753 = vpop.f32.mrf.mxu0
    %v754 = vadd.f32 0.0, %v753
    %755 = vmatprep.mubr.bf16.mxu0 %v494
    %756 = vmatmul.mubr.bf16.gmra.mxu0 %v242
    %v757 = vpop.f32.mrf.mxu0
    %v758 = vadd.f32 0.0, %v757
    %v759 = vpop.f32.mrf.mxu0
    %v760 = vadd.f32 0.0, %v759
    %v761 = vpop.f32.mrf.mxu0
    %v762 = vadd.f32 0.0, %v761
    %v763 = vpop.f32.mrf.mxu0
    %v764 = vadd.f32 0.0, %v763
    %765 = vmatprep.mubr.bf16.mxu0 %v497
    %766 = vmatmul.mubr.bf16.gmra.mxu0 %v244
    %v767 = vpop.f32.mrf.mxu0
    %v768 = vadd.f32 0.0, %v767
    %v769 = vpop.f32.mrf.mxu0
    %v770 = vadd.f32 0.0, %v769
    %v771 = vpop.f32.mrf.mxu0
    %v772 = vadd.f32 0.0, %v771
    %v773 = vpop.f32.mrf.mxu0
    %v774 = vadd.f32 0.0, %v773
    %775 = vmatprep.mubr.bf16.mxu0 %v500
    %776 = vmatmul.mubr.bf16.gmra.mxu0 %v246
    %v777 = vpop.f32.mrf.mxu0
    %v778 = vadd.f32 0.0, %v777
    %v779 = vpop.f32.mrf.mxu0
    %v780 = vadd.f32 0.0, %v779
    %v781 = vpop.f32.mrf.mxu0
    %v782 = vadd.f32 0.0, %v781
    %v783 = vpop.f32.mrf.mxu0
    %v784 = vadd.f32 0.0, %v783
    %785 = vmatprep.mubr.bf16.mxu0 %v503
    %786 = vmatmul.mubr.bf16.gmra.mxu0 %v248
    %v787 = vpop.f32.mrf.mxu0
    %v788 = vadd.f32 0.0, %v787
    %v789 = vpop.f32.mrf.mxu0
    %v790 = vadd.f32 0.0, %v789
    %v791 = vpop.f32.mrf.mxu0
    %v792 = vadd.f32 0.0, %v791
    %v793 = vpop.f32.mrf.mxu0
    %v794 = vadd.f32 0.0, %v793
    %795 = vmatprep.mubr.bf16.mxu0 %v506
    %796 = vmatmul.mubr.bf16.gmra.mxu0 %v250
    %v797 = vpop.f32.mrf.mxu0
    %v798 = vadd.f32 0.0, %v797
    %v799 = vpop.f32.mrf.mxu0
    %v800 = vadd.f32 0.0, %v799
    %v801 = vpop.f32.mrf.mxu0
    %v802 = vadd.f32 0.0, %v801
    %v803 = vpop.f32.mrf.mxu0
    %v804 = vadd.f32 0.0, %v803
    %805 = vmatprep.mubr.bf16.mxu0 %v509
    %806 = vmatmul.mubr.bf16.gmra.mxu0 %v252
    %v807 = vpop.f32.mrf.mxu0
    %v808 = vadd.f32 0.0, %v807
    %v809 = vpop.f32.mrf.mxu0
    %v810 = vadd.f32 0.0, %v809
    %v811 = vpop.f32.mrf.mxu0
    %v812 = vadd.f32 0.0, %v811
    %v813 = vpop.f32.mrf.mxu0
    %v814 = vadd.f32 0.0, %v813
    %815 = vmatprep.mubr.bf16.mxu0 %v512
    %816 = vmatmul.mubr.bf16.gmra.mxu0 %v254
    %v817 = vpop.f32.mrf.mxu0
    %v818 = vadd.f32 0.0, %v817
    %v819 = vpop.f32.mrf.mxu0
    %v820 = vadd.f32 0.0, %v819
    %v821 = vpop.f32.mrf.mxu0
    %v822 = vadd.f32 0.0, %v821
    %v823 = vpop.f32.mrf.mxu0
    %v824 = vadd.f32 0.0, %v823
    %825 = vmatprep.mubr.bf16.mxu0 %v515
    %826 = vmatmul.mubr.bf16.gmra.mxu0 %v256
    %v827 = vpop.f32.mrf.mxu0
    %v828 = vadd.f32 0.0, %v827
    %v829 = vpop.f32.mrf.mxu0
    %v830 = vadd.f32 0.0, %v829
    %v831 = vpop.f32.mrf.mxu0
    %v832 = vadd.f32 0.0, %v831
    %v833 = vpop.f32.mrf.mxu0
    %v834 = vadd.f32 0.0, %v833
    %835 = vdwg.mxu0
    %v836 = vpack.c.bf16 %v569, %v565
    %v837 = vpack.c.bf16 %v571, %v567
    %v838 = vpack.c.bf16 %v579, %v575
    %v839 = vpack.c.bf16 %v581, %v577
    %v840 = vpack.c.bf16 %v589, %v585
    %v841 = vpack.c.bf16 %v591, %v587
    %v842 = vpack.c.bf16 %v599, %v595
    %v843 = vpack.c.bf16 %v601, %v597
    %v844 = vpack.c.bf16 %v609, %v605
    %v845 = vpack.c.bf16 %v611, %v607
    %v846 = vpack.c.bf16 %v619, %v615
    %v847 = vpack.c.bf16 %v621, %v617
    %v848 = vpack.c.bf16 %v629, %v625
    %v849 = vpack.c.bf16 %v631, %v627
    %v850 = vpack.c.bf16 %v639, %v635
    %v851 = vpack.c.bf16 %v641, %v637
    %v852 = vpack.c.bf16 %v649, %v645
    %v853 = vpack.c.bf16 %v651, %v647
    %v854 = vpack.c.bf16 %v659, %v655
    %v855 = vpack.c.bf16 %v661, %v657
    %v856 = vpack.c.bf16 %v669, %v665
    %v857 = vpack.c.bf16 %v671, %v667
    %v858 = vpack.c.bf16 %v679, %v675
    %v859 = vpack.c.bf16 %v681, %v677
    %v860 = vpack.c.bf16 %v722, %v718
    %v861 = vpack.c.bf16 %v724, %v720
    %v862 = vpack.c.bf16 %v732, %v728
    %v863 = vpack.c.bf16 %v734, %v730
    %v864 = vpack.c.bf16 %v742, %v738
    %v865 = vpack.c.bf16 %v744, %v740
    %v866 = vpack.c.bf16 %v752, %v748
    %v867 = vpack.c.bf16 %v754, %v750
    %v868 = vpack.c.bf16 %v762, %v758
    %v869 = vpack.c.bf16 %v764, %v760
    %v870 = vpack.c.bf16 %v772, %v768
    %v871 = vpack.c.bf16 %v774, %v770
    %v872 = vpack.c.bf16 %v782, %v778
    %v873 = vpack.c.bf16 %v784, %v780
    %v874 = vpack.c.bf16 %v792, %v788
    %v875 = vpack.c.bf16 %v794, %v790
    %v876 = vpack.c.bf16 %v802, %v798
    %v877 = vpack.c.bf16 %v804, %v800
    %v878 = vpack.c.bf16 %v812, %v808
    %v879 = vpack.c.bf16 %v814, %v810
    %v880 = vpack.c.bf16 %v822, %v818
    %v881 = vpack.c.bf16 %v824, %v820
    %v882 = vpack.c.bf16 %v832, %v828
    %v883 = vpack.c.bf16 %v834, %v830
    %v884 = vmax.bf16 %v836, %v860
    %v885 = vmax.bf16 %v837, %v861
    %v886 = vmax.bf16 %v838, %v862
    %v887 = vmax.bf16 %v839, %v863
    %v888 = vmax.bf16 %v840, %v864
    %v889 = vmax.bf16 %v841, %v865
    %v890 = vmax.bf16 %v842, %v866
    %v891 = vmax.bf16 %v843, %v867
    %v892 = vmax.bf16 %v844, %v868
    %v893 = vmax.bf16 %v845, %v869
    %v894 = vmax.bf16 %v846, %v870
    %v895 = vmax.bf16 %v847, %v871
    %v896 = vmax.bf16 %v848, %v872
    %v897 = vmax.bf16 %v849, %v873
    %v898 = vmax.bf16 %v850, %v874
    %v899 = vmax.bf16 %v851, %v875
    %v900 = vmax.bf16 %v852, %v876
    %v901 = vmax.bf16 %v853, %v877
    %v902 = vmax.bf16 %v854, %v878
    %v903 = vmax.bf16 %v855, %v879
    %v904 = vmax.bf16 %v856, %v880
    %v905 = vmax.bf16 %v857, %v881
    %v906 = vmax.bf16 %v858, %v882
    %v907 = vmax.bf16 %v859, %v883
    %v908 = vld [vmem:[#allocation3] sm:$0xff]
    %v909 = vld [vmem:[#allocation3 + $0x8] sm:$0xff]
    %v910 = vld [vmem:[#allocation3 + $0x10] sm:$0xff]
    %v911 = vld [vmem:[#allocation3 + $0x18] sm:$0xff]
    %v912 = vld [vmem:[#allocation3 + $0x20] sm:$0xff]
    %v913 = vld [vmem:[#allocation3 + $0x28] sm:$0xff]
    %v914 = vld [vmem:[#allocation3 + $0x30] sm:$0xff]
    %v915 = vld [vmem:[#allocation3 + $0x38] sm:$0xff]
    %v916 = vld [vmem:[#allocation3 + $0x40] sm:$0xff]
    %v917 = vld [vmem:[#allocation3 + $0x48] sm:$0xff]
    %v918 = vld [vmem:[#allocation3 + $0x50] sm:$0xff]
    %v919 = vld [vmem:[#allocation3 + $0x58] sm:$0xff]
    %v920 = vld [vmem:[#allocation3 + $0x60] sm:$0xff]
    %v921 = vld [vmem:[#allocation3 + $0x68] sm:$0xff]
    %v922 = vld [vmem:[#allocation3 + $0x70] sm:$0xff]
    %v923 = vld [vmem:[#allocation3 + $0x78] sm:$0xff]
    %v924 = vld [vmem:[#allocation3 + $0x80] sm:$0xff]
    %v925 = vld [vmem:[#allocation3 + $0x88] sm:$0xff]
    %v926 = vld [vmem:[#allocation3 + $0x90] sm:$0xff]
    %v927 = vld [vmem:[#allocation3 + $0x98] sm:$0xff]
    %v928 = vld [vmem:[#allocation3 + $0xa0] sm:$0xff]
    %v929 = vld [vmem:[#allocation3 + $0xa8] sm:$0xff]
    %v930 = vld [vmem:[#allocation3 + $0xb0] sm:$0xff]
    %v931 = vld [vmem:[#allocation3 + $0xb8] sm:$0xff]
    %v932 = vld [vmem:[#allocation3 + $0xc0] sm:$0xff]
    %v933 = vld [vmem:[#allocation3 + $0xc8] sm:$0xff]
    %v934 = vld [vmem:[#allocation3 + $0xd0] sm:$0xff]
    %v935 = vld [vmem:[#allocation3 + $0xd8] sm:$0xff]
    %v936 = vld [vmem:[#allocation3 + $0xe0] sm:$0xff]
    %v937 = vld [vmem:[#allocation3 + $0xe8] sm:$0xff]
    %v938 = vld [vmem:[#allocation3 + $0xf0] sm:$0xff]
    %v939 = vld [vmem:[#allocation3 + $0xf8] sm:$0xff]
    %v972 = vunpack.c.l.b16 %v908
    %v973 = vunpack.c.h.b16 %v908
    %v974 = vunpack.c.l.b16 %v909
    %v975 = vunpack.c.h.b16 %v909
    %v976 = vunpack.c.l.b16 %v910
    %v977 = vunpack.c.h.b16 %v910
    %v978 = vunpack.c.l.b16 %v911
    %v979 = vunpack.c.h.b16 %v911
    %v980 = vunpack.c.l.b16 %v912
    %v981 = vunpack.c.h.b16 %v912
    %v982 = vunpack.c.l.b16 %v913
    %v983 = vunpack.c.h.b16 %v913
    %v984 = vunpack.c.l.b16 %v914
    %v985 = vunpack.c.h.b16 %v914
    %v986 = vunpack.c.l.b16 %v915
    %v987 = vunpack.c.h.b16 %v915
    %v988 = vunpack.c.l.b16 %v916
    %v989 = vunpack.c.h.b16 %v916
    %v990 = vunpack.c.l.b16 %v917
    %v991 = vunpack.c.h.b16 %v917
    %v992 = vunpack.c.l.b16 %v918
    %v993 = vunpack.c.h.b16 %v918
    %v994 = vunpack.c.l.b16 %v919
    %v995 = vunpack.c.h.b16 %v919
    %v996 = vunpack.c.l.b16 %v920
    %v997 = vunpack.c.h.b16 %v920
    %v998 = vunpack.c.l.b16 %v921
    %v999 = vunpack.c.h.b16 %v921
    %v1000 = vunpack.c.l.b16 %v922
    %v1001 = vunpack.c.h.b16 %v922
    %v1002 = vunpack.c.l.b16 %v923
    %v1003 = vunpack.c.h.b16 %v923
    %v1004 = vunpack.c.l.b16 %v924
    %v1005 = vunpack.c.h.b16 %v924
    %v1006 = vunpack.c.l.b16 %v925
    %v1007 = vunpack.c.h.b16 %v925
    %v1008 = vunpack.c.l.b16 %v926
    %v1009 = vunpack.c.h.b16 %v926
    %v1010 = vunpack.c.l.b16 %v927
    %v1011 = vunpack.c.h.b16 %v927
    %v1012 = vunpack.c.l.b16 %v928
    %v1013 = vunpack.c.h.b16 %v928
    %v1014 = vunpack.c.l.b16 %v929
    %v1015 = vunpack.c.h.b16 %v929
    %v1016 = vunpack.c.l.b16 %v930
    %v1017 = vunpack.c.h.b16 %v930
    %v1018 = vunpack.c.l.b16 %v931
    %v1019 = vunpack.c.h.b16 %v931
    %v1020 = vunpack.c.l.b16 %v932
    %v1021 = vunpack.c.h.b16 %v932
    %v1022 = vunpack.c.l.b16 %v933
    %v1023 = vunpack.c.h.b16 %v933
    %v1024 = vunpack.c.l.b16 %v934
    %v1025 = vunpack.c.h.b16 %v934
    %v1026 = vunpack.c.l.b16 %v935
    %v1027 = vunpack.c.h.b16 %v935
    %v1028 = vunpack.c.l.b16 %v936
    %v1029 = vunpack.c.h.b16 %v936
    %v1030 = vunpack.c.l.b16 %v937
    %v1031 = vunpack.c.h.b16 %v937
    %v1032 = vunpack.c.l.b16 %v938
    %v1033 = vunpack.c.h.b16 %v938
    %v1034 = vunpack.c.l.b16 %v939
    %v1035 = vunpack.c.h.b16 %v939
    %v1036 = vpack.c.b16 %v974, %v972
    %v1037 = vpack.c.b16 %v975, %v973
    %v1038 = vpack.c.b16 %v978, %v976
    %v1039 = vpack.c.b16 %v979, %v977
    %v1040 = vpack.c.b16 %v982, %v980
    %v1041 = vpack.c.b16 %v983, %v981
    %v1042 = vpack.c.b16 %v986, %v984
    %v1043 = vpack.c.b16 %v987, %v985
    %v1044 = vpack.c.b16 %v990, %v988
    %v1045 = vpack.c.b16 %v991, %v989
    %v1046 = vpack.c.b16 %v994, %v992
    %v1047 = vpack.c.b16 %v995, %v993
    %v1048 = vpack.c.b16 %v998, %v996
    %v1049 = vpack.c.b16 %v999, %v997
    %v1050 = vpack.c.b16 %v1002, %v1000
    %v1051 = vpack.c.b16 %v1003, %v1001
    %v1052 = vpack.c.b16 %v1006, %v1004
    %v1053 = vpack.c.b16 %v1007, %v1005
    %v1054 = vpack.c.b16 %v1010, %v1008
    %v1055 = vpack.c.b16 %v1011, %v1009
    %v1056 = vpack.c.b16 %v1014, %v1012
    %v1057 = vpack.c.b16 %v1015, %v1013
    %v1058 = vpack.c.b16 %v1018, %v1016
    %v1059 = vpack.c.b16 %v1019, %v1017
    %v1060 = vpack.c.b16 %v1022, %v1020
    %v1061 = vpack.c.b16 %v1023, %v1021
    %v1062 = vpack.c.b16 %v1026, %v1024
    %v1063 = vpack.c.b16 %v1027, %v1025
    %v1064 = vpack.c.b16 %v1030, %v1028
    %v1065 = vpack.c.b16 %v1031, %v1029
    %v1066 = vpack.c.b16 %v1034, %v1032
    %v1067 = vpack.c.b16 %v1035, %v1033
    %1100 = vmatprep.subr.bf16.mxu0 %v1051
    %1101 = vmatpush1.bf16.msra.mxu0 %v1050
    %1102 = vmatprep.subr.bf16.mxu0 %v1049
    %1103 = vmatpush1.bf16.msra.mxu0 %v1048
    %1104 = vmatprep.subr.bf16.mxu0 %v1047
    %1105 = vmatpush1.bf16.msra.mxu0 %v1046
    %1106 = vmatprep.subr.bf16.mxu0 %v1045
    %1107 = vmatpush1.bf16.msra.mxu0 %v1044
    %1108 = vmatprep.subr.bf16.mxu0 %v1043
    %1109 = vmatpush1.bf16.msra.mxu0 %v1042
    %1110 = vmatprep.subr.bf16.mxu0 %v1041
    %1111 = vmatpush1.bf16.msra.mxu0 %v1040
    %1112 = vmatprep.subr.bf16.mxu0 %v1039
    %1113 = vmatpush1.bf16.msra.mxu0 %v1038
    %1114 = vmatprep.subr.bf16.mxu0 %v1037
    %1115 = vmatpush1.bf16.msra.mxu0 %v1036
    %1116 = vmatprep.subr.bf16.mxu0 %v1067
    %1117 = vmatpush2.bf16.msra.mxu0 %v1066
    %1118 = vmatprep.subr.bf16.mxu0 %v1065
    %1119 = vmatpush2.bf16.msra.mxu0 %v1064
    %1120 = vmatprep.subr.bf16.mxu0 %v1063
    %1121 = vmatpush2.bf16.msra.mxu0 %v1062
    %1122 = vmatprep.subr.bf16.mxu0 %v1061
    %1123 = vmatpush2.bf16.msra.mxu0 %v1060
    %1124 = vmatprep.subr.bf16.mxu0 %v1059
    %1125 = vmatpush2.bf16.msra.mxu0 %v1058
    %1126 = vmatprep.subr.bf16.mxu0 %v1057
    %1127 = vmatpush2.bf16.msra.mxu0 %v1056
    %1128 = vmatprep.subr.bf16.mxu0 %v1055
    %1129 = vmatpush2.bf16.msra.mxu0 %v1054
    %1130 = vmatprep.subr.bf16.mxu0 %v1053
    %1131 = vmatpush2.bf16.msra.mxu0 %v1052
    %1132 = vmatprep.mubr.bf16.mxu0 %v885
    %1133 = vmatmul.mubr.bf16.gmra.mxu0 %v884
    %v1134 = vpop.f32.mrf.mxu0
    %v1135 = vadd.f32 0.0, %v1134
    %v1136 = vpop.f32.mrf.mxu0
    %v1137 = vadd.f32 0.0, %v1136
    %v1138 = vpop.f32.mrf.mxu0
    %v1139 = vadd.f32 0.0, %v1138
    %v1140 = vpop.f32.mrf.mxu0
    %v1141 = vadd.f32 0.0, %v1140
    %1142 = vmatprep.mubr.bf16.mxu0 %v887
    %1143 = vmatmul.mubr.bf16.gmra.mxu0 %v886
    %v1144 = vpop.f32.mrf.mxu0
    %v1145 = vadd.f32 0.0, %v1144
    %v1146 = vpop.f32.mrf.mxu0
    %v1147 = vadd.f32 0.0, %v1146
    %v1148 = vpop.f32.mrf.mxu0
    %v1149 = vadd.f32 0.0, %v1148
    %v1150 = vpop.f32.mrf.mxu0
    %v1151 = vadd.f32 0.0, %v1150
    %1152 = vmatprep.mubr.bf16.mxu0 %v889
    %1153 = vmatmul.mubr.bf16.gmra.mxu0 %v888
    %v1154 = vpop.f32.mrf.mxu0
    %v1155 = vadd.f32 0.0, %v1154
    %v1156 = vpop.f32.mrf.mxu0
    %v1157 = vadd.f32 0.0, %v1156
    %v1158 = vpop.f32.mrf.mxu0
    %v1159 = vadd.f32 0.0, %v1158
    %v1160 = vpop.f32.mrf.mxu0
    %v1161 = vadd.f32 0.0, %v1160
    %1162 = vmatprep.mubr.bf16.mxu0 %v891
    %1163 = vmatmul.mubr.bf16.gmra.mxu0 %v890
    %v1164 = vpop.f32.mrf.mxu0
    %v1165 = vadd.f32 0.0, %v1164
    %v1166 = vpop.f32.mrf.mxu0
    %v1167 = vadd.f32 0.0, %v1166
    %v1168 = vpop.f32.mrf.mxu0
    %v1169 = vadd.f32 0.0, %v1168
    %v1170 = vpop.f32.mrf.mxu0
    %v1171 = vadd.f32 0.0, %v1170
    %1172 = vmatprep.mubr.bf16.mxu0 %v893
    %1173 = vmatmul.mubr.bf16.gmra.mxu0 %v892
    %v1174 = vpop.f32.mrf.mxu0
    %v1175 = vadd.f32 0.0, %v1174
    %v1176 = vpop.f32.mrf.mxu0
    %v1177 = vadd.f32 0.0, %v1176
    %v1178 = vpop.f32.mrf.mxu0
    %v1179 = vadd.f32 0.0, %v1178
    %v1180 = vpop.f32.mrf.mxu0
    %v1181 = vadd.f32 0.0, %v1180
    %1182 = vmatprep.mubr.bf16.mxu0 %v895
    %1183 = vmatmul.mubr.bf16.gmra.mxu0 %v894
    %v1184 = vpop.f32.mrf.mxu0
    %v1185 = vadd.f32 0.0, %v1184
    %v1186 = vpop.f32.mrf.mxu0
    %v1187 = vadd.f32 0.0, %v1186
    %v1188 = vpop.f32.mrf.mxu0
    %v1189 = vadd.f32 0.0, %v1188
    %v1190 = vpop.f32.mrf.mxu0
    %v1191 = vadd.f32 0.0, %v1190
    %1192 = vmatprep.mubr.bf16.mxu0 %v897
    %1193 = vmatmul.mubr.bf16.gmra.mxu0 %v896
    %v1194 = vpop.f32.mrf.mxu0
    %v1195 = vadd.f32 0.0, %v1194
    %v1196 = vpop.f32.mrf.mxu0
    %v1197 = vadd.f32 0.0, %v1196
    %v1198 = vpop.f32.mrf.mxu0
    %v1199 = vadd.f32 0.0, %v1198
    %v1200 = vpop.f32.mrf.mxu0
    %v1201 = vadd.f32 0.0, %v1200
    %1202 = vmatprep.mubr.bf16.mxu0 %v899
    %1203 = vmatmul.mubr.bf16.gmra.mxu0 %v898
    %v1204 = vpop.f32.mrf.mxu0
    %v1205 = vadd.f32 0.0, %v1204
    %v1206 = vpop.f32.mrf.mxu0
    %v1207 = vadd.f32 0.0, %v1206
    %v1208 = vpop.f32.mrf.mxu0
    %v1209 = vadd.f32 0.0, %v1208
    %v1210 = vpop.f32.mrf.mxu0
    %v1211 = vadd.f32 0.0, %v1210
    %1212 = vmatprep.mubr.bf16.mxu0 %v901
    %1213 = vmatmul.mubr.bf16.gmra.mxu0 %v900
    %v1214 = vpop.f32.mrf.mxu0
    %v1215 = vadd.f32 0.0, %v1214
    %v1216 = vpop.f32.mrf.mxu0
    %v1217 = vadd.f32 0.0, %v1216
    %v1218 = vpop.f32.mrf.mxu0
    %v1219 = vadd.f32 0.0, %v1218
    %v1220 = vpop.f32.mrf.mxu0
    %v1221 = vadd.f32 0.0, %v1220
    %1222 = vmatprep.mubr.bf16.mxu0 %v903
    %1223 = vmatmul.mubr.bf16.gmra.mxu0 %v902
    %v1224 = vpop.f32.mrf.mxu0
    %v1225 = vadd.f32 0.0, %v1224
    %v1226 = vpop.f32.mrf.mxu0
    %v1227 = vadd.f32 0.0, %v1226
    %v1228 = vpop.f32.mrf.mxu0
    %v1229 = vadd.f32 0.0, %v1228
    %v1230 = vpop.f32.mrf.mxu0
    %v1231 = vadd.f32 0.0, %v1230
    %1232 = vmatprep.mubr.bf16.mxu0 %v905
    %1233 = vmatmul.mubr.bf16.gmra.mxu0 %v904
    %v1234 = vpop.f32.mrf.mxu0
    %v1235 = vadd.f32 0.0, %v1234
    %v1236 = vpop.f32.mrf.mxu0
    %v1237 = vadd.f32 0.0, %v1236
    %v1238 = vpop.f32.mrf.mxu0
    %v1239 = vadd.f32 0.0, %v1238
    %v1240 = vpop.f32.mrf.mxu0
    %v1241 = vadd.f32 0.0, %v1240
    %1242 = vmatprep.mubr.bf16.mxu0 %v907
    %1243 = vmatmul.mubr.bf16.gmra.mxu0 %v906
    %v1244 = vpop.f32.mrf.mxu0
    %v1245 = vadd.f32 0.0, %v1244
    %v1246 = vpop.f32.mrf.mxu0
    %v1247 = vadd.f32 0.0, %v1246
    %v1248 = vpop.f32.mrf.mxu0
    %v1249 = vadd.f32 0.0, %v1248
    %v1250 = vpop.f32.mrf.mxu0
    %v1251 = vadd.f32 0.0, %v1250
    %1252 = vdwg.mxu0
    %v1253 = vmax.f32 %v1135, %v1137
    %v1254 = vmax.f32 %v1139, %v1141
    %v1255 = vmax.f32 %v1145, %v1147
    %v1256 = vmax.f32 %v1149, %v1151
    %v1257 = vmax.f32 %v1155, %v1157
    %v1258 = vmax.f32 %v1159, %v1161
    %v1259 = vmax.f32 %v1165, %v1167
    %v1260 = vmax.f32 %v1169, %v1171
    %v1261 = vmax.f32 %v1175, %v1177
    %v1262 = vmax.f32 %v1179, %v1181
    %v1263 = vmax.f32 %v1185, %v1187
    %v1264 = vmax.f32 %v1189, %v1191
    %v1265 = vmax.f32 %v1195, %v1197
    %v1266 = vmax.f32 %v1199, %v1201
    %v1267 = vmax.f32 %v1205, %v1207
    %v1268 = vmax.f32 %v1209, %v1211
    %v1269 = vmax.f32 %v1215, %v1217
    %v1270 = vmax.f32 %v1219, %v1221
    %v1271 = vmax.f32 %v1225, %v1227
    %v1272 = vmax.f32 %v1229, %v1231
    %v1273 = vmax.f32 %v1235, %v1237
    %v1274 = vmax.f32 %v1239, %v1241
    %v1275 = vmax.f32 %v1245, %v1247
    %v1276 = vmax.f32 %v1249, %v1251
    %v1277 = vld [vmem:[%s2] sm:$0x1]
    %v1279 = vlaneseq
    %v1280 = vshrl.u32 %v1279, 7
    %v1281 = vsub.s32 0, %v1280
    %v1282 = vrot.slane %v1277, %v1281
    %v1284 = vadd.f32 %v1253, %v1282
    %v1285 = vadd.f32 %v1254, %v1282
    %v1286 = vadd.f32 %v1255, %v1282
    %v1287 = vadd.f32 %v1256, %v1282
    %v1288 = vadd.f32 %v1257, %v1282
    %v1289 = vadd.f32 %v1258, %v1282
    %v1290 = vadd.f32 %v1259, %v1282
    %v1291 = vadd.f32 %v1260, %v1282
    %v1292 = vadd.f32 %v1261, %v1282
    %v1293 = vadd.f32 %v1262, %v1282
    %v1294 = vadd.f32 %v1263, %v1282
    %v1295 = vadd.f32 %v1264, %v1282
    %v1296 = vadd.f32 %v1265, %v1282
    %v1297 = vadd.f32 %v1266, %v1282
    %v1298 = vadd.f32 %v1267, %v1282
    %v1299 = vadd.f32 %v1268, %v1282
    %v1300 = vadd.f32 %v1269, %v1282
    %v1301 = vadd.f32 %v1270, %v1282
    %v1302 = vadd.f32 %v1271, %v1282
    %v1303 = vadd.f32 %v1272, %v1282
    %v1304 = vadd.f32 %v1273, %v1282
    %v1305 = vadd.f32 %v1274, %v1282
    %v1306 = vadd.f32 %v1275, %v1282
    %v1307 = vadd.f32 %v1276, %v1282
    %v1308 = vmax.f32 %v1284, 0.0
    %v1309 = vmax.f32 %v1285, 0.0
    %v1310 = vmax.f32 %v1286, 0.0
    %v1311 = vmax.f32 %v1287, 0.0
    %v1312 = vmax.f32 %v1288, 0.0
    %v1313 = vmax.f32 %v1289, 0.0
    %v1314 = vmax.f32 %v1290, 0.0
    %v1315 = vmax.f32 %v1291, 0.0
    %v1316 = vmax.f32 %v1292, 0.0
    %v1317 = vmax.f32 %v1293, 0.0
    %v1318 = vmax.f32 %v1294, 0.0
    %v1319 = vmax.f32 %v1295, 0.0
    %v1320 = vmax.f32 %v1296, 0.0
    %v1321 = vmax.f32 %v1297, 0.0
    %v1322 = vmax.f32 %v1298, 0.0
    %v1323 = vmax.f32 %v1299, 0.0
    %v1324 = vmax.f32 %v1300, 0.0
    %v1325 = vmax.f32 %v1301, 0.0
    %v1326 = vmax.f32 %v1302, 0.0
    %v1327 = vmax.f32 %v1303, 0.0
    %v1328 = vmax.f32 %v1304, 0.0
    %v1329 = vmax.f32 %v1305, 0.0
    %v1330 = vmax.f32 %v1306, 0.0
    %v1331 = vmax.f32 %v1307, 0.0
    %v1332 = vpack.c.bf16 %v1309, %v1308
    %v1333 = vpack.c.bf16 %v1311, %v1310
    %v1334 = vpack.c.bf16 %v1313, %v1312
    %v1335 = vpack.c.bf16 %v1315, %v1314
    %v1336 = vpack.c.bf16 %v1317, %v1316
    %v1337 = vpack.c.bf16 %v1319, %v1318
    %v1338 = vpack.c.bf16 %v1321, %v1320
    %v1339 = vpack.c.bf16 %v1323, %v1322
    %v1340 = vpack.c.bf16 %v1325, %v1324
    %v1341 = vpack.c.bf16 %v1327, %v1326
    %v1342 = vpack.c.bf16 %v1329, %v1328
    %v1343 = vpack.c.bf16 %v1331, %v1330
    %v1345 = vunpack.c.l.b16 %v1332
    %v1346 = vunpack.c.h.b16 %v1332
    %v1347 = vpack.c.b16 %v1345, %v1345
    %v1348 = vpack.c.b16 %v1346, %v1346
    %1351 = vst [vmem:[#allocation2] sm:$0xf] %v1347
    %1352 = vst [vmem:[#allocation2 + $0x18] sm:$0xf] %v1348
    %v1354 = vunpack.c.l.b16 %v1333
    %v1355 = vunpack.c.h.b16 %v1333
    %v1356 = vpack.c.b16 %v1354, %v1354
    %v1357 = vpack.c.b16 %v1355, %v1355
    %1360 = vst [vmem:[#allocation2 + $0x4] sm:$0xf] %v1356
    %1361 = vst [vmem:[#allocation2 + $0x1c] sm:$0xf] %v1357
    %v1363 = vunpack.c.l.b16 %v1334
    %v1364 = vunpack.c.h.b16 %v1334
    %v1365 = vpack.c.b16 %v1363, %v1363
    %v1366 = vpack.c.b16 %v1364, %v1364
    %1369 = vst [vmem:[#allocation2 + $0x8] sm:$0xf] %v1365
    %1370 = vst [vmem:[#allocation2 + $0x20] sm:$0xf] %v1366
    %v1372 = vunpack.c.l.b16 %v1335
    %v1373 = vunpack.c.h.b16 %v1335
    %v1374 = vpack.c.b16 %v1372, %v1372
    %v1375 = vpack.c.b16 %v1373, %v1373
    %1378 = vst [vmem:[#allocation2 + $0xc] sm:$0xf] %v1374
    %1379 = vst [vmem:[#allocation2 + $0x24] sm:$0xf] %v1375
    %v1381 = vunpack.c.l.b16 %v1336
    %v1382 = vunpack.c.h.b16 %v1336
    %v1383 = vpack.c.b16 %v1381, %v1381
    %v1384 = vpack.c.b16 %v1382, %v1382
    %1387 = vst [vmem:[#allocation2 + $0x10] sm:$0xf] %v1383
    %1388 = vst [vmem:[#allocation2 + $0x28] sm:$0xf] %v1384
    %v1390 = vunpack.c.l.b16 %v1337
    %v1391 = vunpack.c.h.b16 %v1337
    %v1392 = vpack.c.b16 %v1390, %v1390
    %v1393 = vpack.c.b16 %v1391, %v1391
    %1396 = vst [vmem:[#allocation2 + $0x14] sm:$0xf] %v1392
    %1397 = vst [vmem:[#allocation2 + $0x2c] sm:$0xf] %v1393
    %1398 = vst [vmem:[#allocation2 + $0x30] sm:$0xf] %v1365
    %1399 = vst [vmem:[#allocation2 + $0x48] sm:$0xf] %v1366
    %1400 = vst [vmem:[#allocation2 + $0x34] sm:$0xf] %v1374
    %1401 = vst [vmem:[#allocation2 + $0x4c] sm:$0xf] %v1375
    %1402 = vst [vmem:[#allocation2 + $0x38] sm:$0xf] %v1383
    %1403 = vst [vmem:[#allocation2 + $0x50] sm:$0xf] %v1384
    %1404 = vst [vmem:[#allocation2 + $0x3c] sm:$0xf] %v1392
    %1405 = vst [vmem:[#allocation2 + $0x54] sm:$0xf] %v1393
    %v1407 = vunpack.c.l.b16 %v1338
    %v1408 = vunpack.c.h.b16 %v1338
    %v1409 = vpack.c.b16 %v1407, %v1407
    %v1410 = vpack.c.b16 %v1408, %v1408
    %1413 = vst [vmem:[#allocation2 + $0x40] sm:$0xf] %v1409
    %1414 = vst [vmem:[#allocation2 + $0x58] sm:$0xf] %v1410
    %v1416 = vunpack.c.l.b16 %v1339
    %v1417 = vunpack.c.h.b16 %v1339
    %v1418 = vpack.c.b16 %v1416, %v1416
    %v1419 = vpack.c.b16 %v1417, %v1417
    %1422 = vst [vmem:[#allocation2 + $0x44] sm:$0xf] %v1418
    %1423 = vst [vmem:[#allocation2 + $0x5c] sm:$0xf] %v1419
    %1424 = vst [vmem:[#allocation2 + $0x60] sm:$0xf] %v1383
    %1425 = vst [vmem:[#allocation2 + $0x78] sm:$0xf] %v1384
    %1426 = vst [vmem:[#allocation2 + $0x64] sm:$0xf] %v1392
    %1427 = vst [vmem:[#allocation2 + $0x7c] sm:$0xf] %v1393
    %1428 = vst [vmem:[#allocation2 + $0x68] sm:$0xf] %v1409
    %1429 = vst [vmem:[#allocation2 + $0x80] sm:$0xf] %v1410
    %1430 = vst [vmem:[#allocation2 + $0x6c] sm:$0xf] %v1418
    %1431 = vst [vmem:[#allocation2 + $0x84] sm:$0xf] %v1419
    %v1433 = vunpack.c.l.b16 %v1340
    %v1434 = vunpack.c.h.b16 %v1340
    %v1435 = vpack.c.b16 %v1433, %v1433
    %v1436 = vpack.c.b16 %v1434, %v1434
    %1439 = vst [vmem:[#allocation2 + $0x70] sm:$0xf] %v1435
    %1440 = vst [vmem:[#allocation2 + $0x88] sm:$0xf] %v1436
    %v1442 = vunpack.c.l.b16 %v1341
    %v1443 = vunpack.c.h.b16 %v1341
    %v1444 = vpack.c.b16 %v1442, %v1442
    %v1445 = vpack.c.b16 %v1443, %v1443
    %1448 = vst [vmem:[#allocation2 + $0x74] sm:$0xf] %v1444
    %1449 = vst [vmem:[#allocation2 + $0x8c] sm:$0xf] %v1445
    %1450 = vst [vmem:[#allocation2 + $0x90] sm:$0xf] %v1409
    %1451 = vst [vmem:[#allocation2 + $0xa8] sm:$0xf] %v1410
    %1452 = vst [vmem:[#allocation2 + $0x94] sm:$0xf] %v1418
    %1453 = vst [vmem:[#allocation2 + $0xac] sm:$0xf] %v1419
    %1454 = vst [vmem:[#allocation2 + $0x98] sm:$0xf] %v1435
    %1455 = vst [vmem:[#allocation2 + $0xb0] sm:$0xf] %v1436
    %1456 = vst [vmem:[#allocation2 + $0x9c] sm:$0xf] %v1444
    %1457 = vst [vmem:[#allocation2 + $0xb4] sm:$0xf] %v1445
    %v1459 = vunpack.c.l.b16 %v1342
    %v1460 = vunpack.c.h.b16 %v1342
    %v1461 = vpack.c.b16 %v1459, %v1459
    %v1462 = vpack.c.b16 %v1460, %v1460
    %1465 = vst [vmem:[#allocation2 + $0xa0] sm:$0xf] %v1461
    %1466 = vst [vmem:[#allocation2 + $0xb8] sm:$0xf] %v1462
    %v1468 = vunpack.c.l.b16 %v1343
    %v1469 = vunpack.c.h.b16 %v1343
    %v1470 = vpack.c.b16 %v1468, %v1468
    %v1471 = vpack.c.b16 %v1469, %v1469
    %1474 = vst [vmem:[#allocation2 + $0xa4] sm:$0xf] %v1470
    %1475 = vst [vmem:[#allocation2 + $0xbc] sm:$0xf] %v1471
    %v1476 = vld [vmem:[#allocation2] sm:$0xff]
    %v1477 = vld [vmem:[#allocation2 + $0x8] sm:$0xff]
    %v1478 = vld [vmem:[#allocation2 + $0x10] sm:$0xff]
    %v1479 = vld [vmem:[#allocation2 + $0x18] sm:$0xff]
    %v1480 = vld [vmem:[#allocation2 + $0x20] sm:$0xff]
    %v1481 = vld [vmem:[#allocation2 + $0x28] sm:$0xff]
    %v1482 = vld [vmem:[#allocation2 + $0x30] sm:$0xff]
    %v1483 = vld [vmem:[#allocation2 + $0x38] sm:$0xff]
    %v1484 = vld [vmem:[#allocation2 + $0x40] sm:$0xff]
    %v1485 = vld [vmem:[#allocation2 + $0x48] sm:$0xff]
    %v1486 = vld [vmem:[#allocation2 + $0x50] sm:$0xff]
    %v1487 = vld [vmem:[#allocation2 + $0x58] sm:$0xff]
    %v1488 = vld [vmem:[#allocation2 + $0x60] sm:$0xff]
    %v1489 = vld [vmem:[#allocation2 + $0x68] sm:$0xff]
    %v1490 = vld [vmem:[#allocation2 + $0x70] sm:$0xff]
    %v1491 = vld [vmem:[#allocation2 + $0x78] sm:$0xff]
    %v1492 = vld [vmem:[#allocation2 + $0x80] sm:$0xff]
    %v1493 = vld [vmem:[#allocation2 + $0x88] sm:$0xff]
    %v1494 = vld [vmem:[#allocation2 + $0x90] sm:$0xff]
    %v1495 = vld [vmem:[#allocation2 + $0x98] sm:$0xff]
    %v1496 = vld [vmem:[#allocation2 + $0xa0] sm:$0xff]
    %v1497 = vld [vmem:[#allocation2 + $0xa8] sm:$0xff]
    %v1498 = vld [vmem:[#allocation2 + $0xb0] sm:$0xff]
    %v1499 = vld [vmem:[#allocation2 + $0xb8] sm:$0xff]
    %v1500 = vld [vmem:[#allocation5] sm:$0xff]
    %v1501 = vld [vmem:[#allocation5 + $0x8] sm:$0xff]
    %v1502 = vld [vmem:[#allocation5 + $0x10] sm:$0xff]
    %v1503 = vld [vmem:[#allocation5 + $0x18] sm:$0xff]
    %v1504 = vld [vmem:[#allocation5 + $0x20] sm:$0xff]
    %v1505 = vld [vmem:[#allocation5 + $0x28] sm:$0xff]
    %v1506 = vld [vmem:[#allocation5 + $0x30] sm:$0xff]
    %v1507 = vld [vmem:[#allocation5 + $0x38] sm:$0xff]
    %v1508 = vld [vmem:[#allocation5 + $0x40] sm:$0xff]
    %v1509 = vld [vmem:[#allocation5 + $0x48] sm:$0xff]
    %v1510 = vld [vmem:[#allocation5 + $0x50] sm:$0xff]
    %v1511 = vld [vmem:[#allocation5 + $0x58] sm:$0xff]
    %v1512 = vld [vmem:[#allocation5 + $0x60] sm:$0xff]
    %v1513 = vld [vmem:[#allocation5 + $0x68] sm:$0xff]
    %v1514 = vld [vmem:[#allocation5 + $0x70] sm:$0xff]
    %v1515 = vld [vmem:[#allocation5 + $0x78] sm:$0xff]
    %v1516 = vld [vmem:[#allocation5 + $0x80] sm:$0xff]
    %v1517 = vld [vmem:[#allocation5 + $0x88] sm:$0xff]
    %v1518 = vld [vmem:[#allocation5 + $0x90] sm:$0xff]
    %v1519 = vld [vmem:[#allocation5 + $0x98] sm:$0xff]
    %v1520 = vld [vmem:[#allocation5 + $0xa0] sm:$0xff]
    %v1521 = vld [vmem:[#allocation5 + $0xa8] sm:$0xff]
    %v1522 = vld [vmem:[#allocation5 + $0xb0] sm:$0xff]
    %v1523 = vld [vmem:[#allocation5 + $0xb8] sm:$0xff]
    %v1524 = vld [vmem:[#allocation5 + $0xc0] sm:$0xff]
    %v1525 = vld [vmem:[#allocation5 + $0xc8] sm:$0xff]
    %v1526 = vld [vmem:[#allocation5 + $0xd0] sm:$0xff]
    %v1527 = vld [vmem:[#allocation5 + $0xd8] sm:$0xff]
    %v1528 = vld [vmem:[#allocation5 + $0xe0] sm:$0xff]
    %v1529 = vld [vmem:[#allocation5 + $0xe8] sm:$0xff]
    %v1530 = vld [vmem:[#allocation5 + $0xf0] sm:$0xff]
    %v1531 = vld [vmem:[#allocation5 + $0xf8] sm:$0xff]
    %v1532 = vld [vmem:[#allocation5 + $0x100] sm:$0xff]
    %v1533 = vld [vmem:[#allocation5 + $0x108] sm:$0xff]
    %v1534 = vld [vmem:[#allocation5 + $0x110] sm:$0xff]
    %v1535 = vld [vmem:[#allocation5 + $0x118] sm:$0xff]
    %v1536 = vld [vmem:[#allocation5 + $0x120] sm:$0xff]
    %v1537 = vld [vmem:[#allocation5 + $0x128] sm:$0xff]
    %v1538 = vld [vmem:[#allocation5 + $0x130] sm:$0xff]
    %v1539 = vld [vmem:[#allocation5 + $0x138] sm:$0xff]
    %v1540 = vld [vmem:[#allocation5 + $0x140] sm:$0xff]
    %v1541 = vld [vmem:[#allocation5 + $0x148] sm:$0xff]
    %v1542 = vld [vmem:[#allocation5 + $0x150] sm:$0xff]
    %v1543 = vld [vmem:[#allocation5 + $0x158] sm:$0xff]
    %v1544 = vld [vmem:[#allocation5 + $0x160] sm:$0xff]
    %v1545 = vld [vmem:[#allocation5 + $0x168] sm:$0xff]
    %v1546 = vld [vmem:[#allocation5 + $0x170] sm:$0xff]
    %v1547 = vld [vmem:[#allocation5 + $0x178] sm:$0xff]
    %v1548 = vld [vmem:[#allocation5 + $0x180] sm:$0xff]
    %v1549 = vld [vmem:[#allocation5 + $0x188] sm:$0xff]
    %v1550 = vld [vmem:[#allocation5 + $0x190] sm:$0xff]
    %v1551 = vld [vmem:[#allocation5 + $0x198] sm:$0xff]
    %v1552 = vld [vmem:[#allocation5 + $0x1a0] sm:$0xff]
    %v1553 = vld [vmem:[#allocation5 + $0x1a8] sm:$0xff]
    %v1554 = vld [vmem:[#allocation5 + $0x1b0] sm:$0xff]
    %v1555 = vld [vmem:[#allocation5 + $0x1b8] sm:$0xff]
    %v1556 = vld [vmem:[#allocation5 + $0x1c0] sm:$0xff]
    %v1557 = vld [vmem:[#allocation5 + $0x1c8] sm:$0xff]
    %v1558 = vld [vmem:[#allocation5 + $0x1d0] sm:$0xff]
    %v1559 = vld [vmem:[#allocation5 + $0x1d8] sm:$0xff]
    %v1560 = vld [vmem:[#allocation5 + $0x1e0] sm:$0xff]
    %v1561 = vld [vmem:[#allocation5 + $0x1e8] sm:$0xff]
    %v1562 = vld [vmem:[#allocation5 + $0x1f0] sm:$0xff]
    %v1563 = vld [vmem:[#allocation5 + $0x1f8] sm:$0xff]
    %v1564 = vld [vmem:[#allocation5 + $0x200] sm:$0xff]
    %v1565 = vld [vmem:[#allocation5 + $0x208] sm:$0xff]
    %v1566 = vld [vmem:[#allocation5 + $0x210] sm:$0xff]
    %v1567 = vld [vmem:[#allocation5 + $0x218] sm:$0xff]
    %v1568 = vld [vmem:[#allocation5 + $0x220] sm:$0xff]
    %v1569 = vld [vmem:[#allocation5 + $0x228] sm:$0xff]
    %v1570 = vld [vmem:[#allocation5 + $0x230] sm:$0xff]
    %v1571 = vld [vmem:[#allocation5 + $0x238] sm:$0xff]
    %v1572 = vld [vmem:[#allocation5 + $0x240] sm:$0xff]
    %v1573 = vld [vmem:[#allocation5 + $0x248] sm:$0xff]
    %v1574 = vld [vmem:[#allocation5 + $0x250] sm:$0xff]
    %v1575 = vld [vmem:[#allocation5 + $0x258] sm:$0xff]
    %v1576 = vld [vmem:[#allocation5 + $0x260] sm:$0xff]
    %v1577 = vld [vmem:[#allocation5 + $0x268] sm:$0xff]
    %v1578 = vld [vmem:[#allocation5 + $0x270] sm:$0xff]
    %v1579 = vld [vmem:[#allocation5 + $0x278] sm:$0xff]
    %v1580 = vld [vmem:[#allocation5 + $0x280] sm:$0xff]
    %v1581 = vld [vmem:[#allocation5 + $0x288] sm:$0xff]
    %v1582 = vld [vmem:[#allocation5 + $0x290] sm:$0xff]
    %v1583 = vld [vmem:[#allocation5 + $0x298] sm:$0xff]
    %v1584 = vld [vmem:[#allocation5 + $0x2a0] sm:$0xff]
    %v1585 = vld [vmem:[#allocation5 + $0x2a8] sm:$0xff]
    %v1586 = vld [vmem:[#allocation5 + $0x2b0] sm:$0xff]
    %v1587 = vld [vmem:[#allocation5 + $0x2b8] sm:$0xff]
    %v1588 = vld [vmem:[#allocation5 + $0x2c0] sm:$0xff]
    %v1589 = vld [vmem:[#allocation5 + $0x2c8] sm:$0xff]
    %v1590 = vld [vmem:[#allocation5 + $0x2d0] sm:$0xff]
    %v1591 = vld [vmem:[#allocation5 + $0x2d8] sm:$0xff]
    %v1592 = vld [vmem:[#allocation5 + $0x2e0] sm:$0xff]
    %v1593 = vld [vmem:[#allocation5 + $0x2e8] sm:$0xff]
    %v1594 = vld [vmem:[#allocation5 + $0x2f0] sm:$0xff]
    %v1595 = vld [vmem:[#allocation5 + $0x2f8] sm:$0xff]
    %v1596 = vld [vmem:[#allocation5 + $0x300] sm:$0xff]
    %v1597 = vld [vmem:[#allocation5 + $0x308] sm:$0xff]
    %v1598 = vld [vmem:[#allocation5 + $0x310] sm:$0xff]
    %v1599 = vld [vmem:[#allocation5 + $0x318] sm:$0xff]
    %v1600 = vld [vmem:[#allocation5 + $0x320] sm:$0xff]
    %v1601 = vld [vmem:[#allocation5 + $0x328] sm:$0xff]
    %v1602 = vld [vmem:[#allocation5 + $0x330] sm:$0xff]
    %v1603 = vld [vmem:[#allocation5 + $0x338] sm:$0xff]
    %v1604 = vld [vmem:[#allocation5 + $0x340] sm:$0xff]
    %v1605 = vld [vmem:[#allocation5 + $0x348] sm:$0xff]
    %v1606 = vld [vmem:[#allocation5 + $0x350] sm:$0xff]
    %v1607 = vld [vmem:[#allocation5 + $0x358] sm:$0xff]
    %v1608 = vld [vmem:[#allocation5 + $0x360] sm:$0xff]
    %v1609 = vld [vmem:[#allocation5 + $0x368] sm:$0xff]
    %v1610 = vld [vmem:[#allocation5 + $0x370] sm:$0xff]
    %v1611 = vld [vmem:[#allocation5 + $0x378] sm:$0xff]
    %v1612 = vld [vmem:[#allocation5 + $0x380] sm:$0xff]
    %v1613 = vld [vmem:[#allocation5 + $0x388] sm:$0xff]
    %v1614 = vld [vmem:[#allocation5 + $0x390] sm:$0xff]
    %v1615 = vld [vmem:[#allocation5 + $0x398] sm:$0xff]
    %v1616 = vld [vmem:[#allocation5 + $0x3a0] sm:$0xff]
    %v1617 = vld [vmem:[#allocation5 + $0x3a8] sm:$0xff]
    %v1618 = vld [vmem:[#allocation5 + $0x3b0] sm:$0xff]
    %v1619 = vld [vmem:[#allocation5 + $0x3b8] sm:$0xff]
    %v1620 = vld [vmem:[#allocation5 + $0x3c0] sm:$0xff]
    %v1621 = vld [vmem:[#allocation5 + $0x3c8] sm:$0xff]
    %v1622 = vld [vmem:[#allocation5 + $0x3d0] sm:$0xff]
    %v1623 = vld [vmem:[#allocation5 + $0x3d8] sm:$0xff]
    %v1624 = vld [vmem:[#allocation5 + $0x3e0] sm:$0xff]
    %v1625 = vld [vmem:[#allocation5 + $0x3e8] sm:$0xff]
    %v1626 = vld [vmem:[#allocation5 + $0x3f0] sm:$0xff]
    %v1627 = vld [vmem:[#allocation5 + $0x3f8] sm:$0xff]
    %v1628 = vld [vmem:[#allocation5 + $0x400] sm:$0xff]
    %v1629 = vld [vmem:[#allocation5 + $0x408] sm:$0xff]
    %v1630 = vld [vmem:[#allocation5 + $0x410] sm:$0xff]
    %v1631 = vld [vmem:[#allocation5 + $0x418] sm:$0xff]
    %v1632 = vld [vmem:[#allocation5 + $0x420] sm:$0xff]
    %v1633 = vld [vmem:[#allocation5 + $0x428] sm:$0xff]
    %v1634 = vld [vmem:[#allocation5 + $0x430] sm:$0xff]
    %v1635 = vld [vmem:[#allocation5 + $0x438] sm:$0xff]
    %v1636 = vld [vmem:[#allocation5 + $0x440] sm:$0xff]
    %v1637 = vld [vmem:[#allocation5 + $0x448] sm:$0xff]
    %v1638 = vld [vmem:[#allocation5 + $0x450] sm:$0xff]
    %v1639 = vld [vmem:[#allocation5 + $0x458] sm:$0xff]
    %v1640 = vld [vmem:[#allocation5 + $0x460] sm:$0xff]
    %v1641 = vld [vmem:[#allocation5 + $0x468] sm:$0xff]
    %v1642 = vld [vmem:[#allocation5 + $0x470] sm:$0xff]
    %v1643 = vld [vmem:[#allocation5 + $0x478] sm:$0xff]
    %v1644 = vld [vmem:[#allocation5 + $0x480] sm:$0xff]
    %v1645 = vld [vmem:[#allocation5 + $0x488] sm:$0xff]
    %v1646 = vld [vmem:[#allocation5 + $0x490] sm:$0xff]
    %v1647 = vld [vmem:[#allocation5 + $0x498] sm:$0xff]
    %v1648 = vld [vmem:[#allocation5 + $0x4a0] sm:$0xff]
    %v1649 = vld [vmem:[#allocation5 + $0x4a8] sm:$0xff]
    %v1650 = vld [vmem:[#allocation5 + $0x4b0] sm:$0xff]
    %v1651 = vld [vmem:[#allocation5 + $0x4b8] sm:$0xff]
    %v1652 = vld [vmem:[#allocation5 + $0x4c0] sm:$0xff]
    %v1653 = vld [vmem:[#allocation5 + $0x4c8] sm:$0xff]
    %v1654 = vld [vmem:[#allocation5 + $0x4d0] sm:$0xff]
    %v1655 = vld [vmem:[#allocation5 + $0x4d8] sm:$0xff]
    %v1656 = vld [vmem:[#allocation5 + $0x4e0] sm:$0xff]
    %v1657 = vld [vmem:[#allocation5 + $0x4e8] sm:$0xff]
    %v1658 = vld [vmem:[#allocation5 + $0x4f0] sm:$0xff]
    %v1659 = vld [vmem:[#allocation5 + $0x4f8] sm:$0xff]
    %v1660 = vld [vmem:[#allocation5 + $0x500] sm:$0xff]
    %v1661 = vld [vmem:[#allocation5 + $0x508] sm:$0xff]
    %v1662 = vld [vmem:[#allocation5 + $0x510] sm:$0xff]
    %v1663 = vld [vmem:[#allocation5 + $0x518] sm:$0xff]
    %v1664 = vld [vmem:[#allocation5 + $0x520] sm:$0xff]
    %v1665 = vld [vmem:[#allocation5 + $0x528] sm:$0xff]
    %v1666 = vld [vmem:[#allocation5 + $0x530] sm:$0xff]
    %v1667 = vld [vmem:[#allocation5 + $0x538] sm:$0xff]
    %v1668 = vld [vmem:[#allocation5 + $0x540] sm:$0xff]
    %v1669 = vld [vmem:[#allocation5 + $0x548] sm:$0xff]
    %v1670 = vld [vmem:[#allocation5 + $0x550] sm:$0xff]
    %v1671 = vld [vmem:[#allocation5 + $0x558] sm:$0xff]
    %v1672 = vld [vmem:[#allocation5 + $0x560] sm:$0xff]
    %v1673 = vld [vmem:[#allocation5 + $0x568] sm:$0xff]
    %v1674 = vld [vmem:[#allocation5 + $0x570] sm:$0xff]
    %v1675 = vld [vmem:[#allocation5 + $0x578] sm:$0xff]
    %v1676 = vld [vmem:[#allocation5 + $0x580] sm:$0xff]
    %v1677 = vld [vmem:[#allocation5 + $0x588] sm:$0xff]
    %v1678 = vld [vmem:[#allocation5 + $0x590] sm:$0xff]
    %v1679 = vld [vmem:[#allocation5 + $0x598] sm:$0xff]
    %v1680 = vld [vmem:[#allocation5 + $0x5a0] sm:$0xff]
    %v1681 = vld [vmem:[#allocation5 + $0x5a8] sm:$0xff]
    %v1682 = vld [vmem:[#allocation5 + $0x5b0] sm:$0xff]
    %v1683 = vld [vmem:[#allocation5 + $0x5b8] sm:$0xff]
    %v1684 = vld [vmem:[#allocation5 + $0x5c0] sm:$0xff]
    %v1685 = vld [vmem:[#allocation5 + $0x5c8] sm:$0xff]
    %v1686 = vld [vmem:[#allocation5 + $0x5d0] sm:$0xff]
    %v1687 = vld [vmem:[#allocation5 + $0x5d8] sm:$0xff]
    %v1688 = vld [vmem:[#allocation5 + $0x5e0] sm:$0xff]
    %v1689 = vld [vmem:[#allocation5 + $0x5e8] sm:$0xff]
    %v1690 = vld [vmem:[#allocation5 + $0x5f0] sm:$0xff]
    %v1691 = vld [vmem:[#allocation5 + $0x5f8] sm:$0xff]
    %v1716 = vunpack.c.l.b16 %v1476
    %v1717 = vunpack.c.h.b16 %v1476
    %v1718 = vunpack.c.l.b16 %v1477
    %v1719 = vunpack.c.h.b16 %v1477
    %v1720 = vunpack.c.l.b16 %v1478
    %v1721 = vunpack.c.h.b16 %v1478
    %v1722 = vunpack.c.l.b16 %v1479
    %v1723 = vunpack.c.h.b16 %v1479
    %v1724 = vunpack.c.l.b16 %v1480
    %v1725 = vunpack.c.h.b16 %v1480
    %v1726 = vunpack.c.l.b16 %v1481
    %v1727 = vunpack.c.h.b16 %v1481
    %v1728 = vunpack.c.l.b16 %v1482
    %v1729 = vunpack.c.h.b16 %v1482
    %v1730 = vunpack.c.l.b16 %v1483
    %v1731 = vunpack.c.h.b16 %v1483
    %v1732 = vunpack.c.l.b16 %v1484
    %v1733 = vunpack.c.h.b16 %v1484
    %v1734 = vunpack.c.l.b16 %v1485
    %v1735 = vunpack.c.h.b16 %v1485
    %v1736 = vunpack.c.l.b16 %v1486
    %v1737 = vunpack.c.h.b16 %v1486
    %v1738 = vunpack.c.l.b16 %v1487
    %v1739 = vunpack.c.h.b16 %v1487
    %v1740 = vunpack.c.l.b16 %v1488
    %v1741 = vunpack.c.h.b16 %v1488
    %v1742 = vunpack.c.l.b16 %v1489
    %v1743 = vunpack.c.h.b16 %v1489
    %v1744 = vunpack.c.l.b16 %v1490
    %v1745 = vunpack.c.h.b16 %v1490
    %v1746 = vunpack.c.l.b16 %v1491
    %v1747 = vunpack.c.h.b16 %v1491
    %v1748 = vunpack.c.l.b16 %v1492
    %v1749 = vunpack.c.h.b16 %v1492
    %v1750 = vunpack.c.l.b16 %v1493
    %v1751 = vunpack.c.h.b16 %v1493
    %v1752 = vunpack.c.l.b16 %v1494
    %v1753 = vunpack.c.h.b16 %v1494
    %v1754 = vunpack.c.l.b16 %v1495
    %v1755 = vunpack.c.h.b16 %v1495
    %v1756 = vunpack.c.l.b16 %v1496
    %v1757 = vunpack.c.h.b16 %v1496
    %v1758 = vunpack.c.l.b16 %v1497
    %v1759 = vunpack.c.h.b16 %v1497
    %v1760 = vunpack.c.l.b16 %v1498
    %v1761 = vunpack.c.h.b16 %v1498
    %v1762 = vunpack.c.l.b16 %v1499
    %v1763 = vunpack.c.h.b16 %v1499
    %v1764 = vpack.c.b16 %v1722, %v1716
    %v1765 = vpack.c.b16 %v1723, %v1717
    %v1766 = vpack.c.b16 %v1724, %v1718
    %v1767 = vpack.c.b16 %v1725, %v1719
    %v1768 = vpack.c.b16 %v1726, %v1720
    %v1769 = vpack.c.b16 %v1727, %v1721
    %v1770 = vpack.c.b16 %v1734, %v1728
    %v1771 = vpack.c.b16 %v1735, %v1729
    %v1772 = vpack.c.b16 %v1736, %v1730
    %v1773 = vpack.c.b16 %v1737, %v1731
    %v1774 = vpack.c.b16 %v1738, %v1732
    %v1775 = vpack.c.b16 %v1739, %v1733
    %v1776 = vpack.c.b16 %v1746, %v1740
    %v1777 = vpack.c.b16 %v1747, %v1741
    %v1778 = vpack.c.b16 %v1748, %v1742
    %v1779 = vpack.c.b16 %v1749, %v1743
    %v1780 = vpack.c.b16 %v1750, %v1744
    %v1781 = vpack.c.b16 %v1751, %v1745
    %v1782 = vpack.c.b16 %v1758, %v1752
    %v1783 = vpack.c.b16 %v1759, %v1753
    %v1784 = vpack.c.b16 %v1760, %v1754
    %v1785 = vpack.c.b16 %v1761, %v1755
    %v1786 = vpack.c.b16 %v1762, %v1756
    %v1787 = vpack.c.b16 %v1763, %v1757
    %v2004 = vunpack.c.l.b16 %v1500
    %v2005 = vunpack.c.h.b16 %v1500
    %v2006 = vunpack.c.l.b16 %v1501
    %v2007 = vunpack.c.h.b16 %v1501
    %v2008 = vunpack.c.l.b16 %v1502
    %v2009 = vunpack.c.h.b16 %v1502
    %v2010 = vunpack.c.l.b16 %v1503
    %v2011 = vunpack.c.h.b16 %v1503
    %v2012 = vunpack.c.l.b16 %v1504
    %v2013 = vunpack.c.h.b16 %v1504
    %v2014 = vunpack.c.l.b16 %v1505
    %v2015 = vunpack.c.h.b16 %v1505
    %v2016 = vunpack.c.l.b16 %v1506
    %v2017 = vunpack.c.h.b16 %v1506
    %v2018 = vunpack.c.l.b16 %v1507
    %v2019 = vunpack.c.h.b16 %v1507
    %v2020 = vunpack.c.l.b16 %v1508
    %v2021 = vunpack.c.h.b16 %v1508
    %v2022 = vunpack.c.l.b16 %v1509
    %v2023 = vunpack.c.h.b16 %v1509
    %v2024 = vunpack.c.l.b16 %v1510
    %v2025 = vunpack.c.h.b16 %v1510
    %v2026 = vunpack.c.l.b16 %v1511
    %v2027 = vunpack.c.h.b16 %v1511
    %v2028 = vunpack.c.l.b16 %v1512
    %v2029 = vunpack.c.h.b16 %v1512
    %v2030 = vunpack.c.l.b16 %v1513
    %v2031 = vunpack.c.h.b16 %v1513
    %v2032 = vunpack.c.l.b16 %v1514
    %v2033 = vunpack.c.h.b16 %v1514
    %v2034 = vunpack.c.l.b16 %v1515
    %v2035 = vunpack.c.h.b16 %v1515
    %v2036 = vunpack.c.l.b16 %v1516
    %v2037 = vunpack.c.h.b16 %v1516
    %v2038 = vunpack.c.l.b16 %v1517
    %v2039 = vunpack.c.h.b16 %v1517
    %v2040 = vunpack.c.l.b16 %v1518
    %v2041 = vunpack.c.h.b16 %v1518
    %v2042 = vunpack.c.l.b16 %v1519
    %v2043 = vunpack.c.h.b16 %v1519
    %v2044 = vunpack.c.l.b16 %v1520
    %v2045 = vunpack.c.h.b16 %v1520
    %v2046 = vunpack.c.l.b16 %v1521
    %v2047 = vunpack.c.h.b16 %v1521
    %v2048 = vunpack.c.l.b16 %v1522
    %v2049 = vunpack.c.h.b16 %v1522
    %v2050 = vunpack.c.l.b16 %v1523
    %v2051 = vunpack.c.h.b16 %v1523
    %v2052 = vunpack.c.l.b16 %v1524
    %v2053 = vunpack.c.h.b16 %v1524
    %v2054 = vunpack.c.l.b16 %v1525
    %v2055 = vunpack.c.h.b16 %v1525
    %v2056 = vunpack.c.l.b16 %v1526
    %v2057 = vunpack.c.h.b16 %v1526
    %v2058 = vunpack.c.l.b16 %v1527
    %v2059 = vunpack.c.h.b16 %v1527
    %v2060 = vunpack.c.l.b16 %v1528
    %v2061 = vunpack.c.h.b16 %v1528
    %v2062 = vunpack.c.l.b16 %v1529
    %v2063 = vunpack.c.h.b16 %v1529
    %v2064 = vunpack.c.l.b16 %v1530
    %v2065 = vunpack.c.h.b16 %v1530
    %v2066 = vunpack.c.l.b16 %v1531
    %v2067 = vunpack.c.h.b16 %v1531
    %v2068 = vunpack.c.l.b16 %v1532
    %v2069 = vunpack.c.h.b16 %v1532
    %v2070 = vunpack.c.l.b16 %v1533
    %v2071 = vunpack.c.h.b16 %v1533
    %v2072 = vunpack.c.l.b16 %v1534
    %v2073 = vunpack.c.h.b16 %v1534
    %v2074 = vunpack.c.l.b16 %v1535
    %v2075 = vunpack.c.h.b16 %v1535
    %v2076 = vunpack.c.l.b16 %v1536
    %v2077 = vunpack.c.h.b16 %v1536
    %v2078 = vunpack.c.l.b16 %v1537
    %v2079 = vunpack.c.h.b16 %v1537
    %v2080 = vunpack.c.l.b16 %v1538
    %v2081 = vunpack.c.h.b16 %v1538
    %v2082 = vunpack.c.l.b16 %v1539
    %v2083 = vunpack.c.h.b16 %v1539
    %v2084 = vunpack.c.l.b16 %v1540
    %v2085 = vunpack.c.h.b16 %v1540
    %v2086 = vunpack.c.l.b16 %v1541
    %v2087 = vunpack.c.h.b16 %v1541
    %v2088 = vunpack.c.l.b16 %v1542
    %v2089 = vunpack.c.h.b16 %v1542
    %v2090 = vunpack.c.l.b16 %v1543
    %v2091 = vunpack.c.h.b16 %v1543
    %v2092 = vunpack.c.l.b16 %v1544
    %v2093 = vunpack.c.h.b16 %v1544
    %v2094 = vunpack.c.l.b16 %v1545
    %v2095 = vunpack.c.h.b16 %v1545
    %v2096 = vunpack.c.l.b16 %v1546
    %v2097 = vunpack.c.h.b16 %v1546
    %v2098 = vunpack.c.l.b16 %v1547
    %v2099 = vunpack.c.h.b16 %v1547
    %v2100 = vunpack.c.l.b16 %v1548
    %v2101 = vunpack.c.h.b16 %v1548
    %v2102 = vunpack.c.l.b16 %v1549
    %v2103 = vunpack.c.h.b16 %v1549
    %v2104 = vunpack.c.l.b16 %v1550
    %v2105 = vunpack.c.h.b16 %v1550
    %v2106 = vunpack.c.l.b16 %v1551
    %v2107 = vunpack.c.h.b16 %v1551
    %v2108 = vunpack.c.l.b16 %v1552
    %v2109 = vunpack.c.h.b16 %v1552
    %v2110 = vunpack.c.l.b16 %v1553
    %v2111 = vunpack.c.h.b16 %v1553
    %v2112 = vunpack.c.l.b16 %v1554
    %v2113 = vunpack.c.h.b16 %v1554
    %v2114 = vunpack.c.l.b16 %v1555
    %v2115 = vunpack.c.h.b16 %v1555
    %v2116 = vunpack.c.l.b16 %v1556
    %v2117 = vunpack.c.h.b16 %v1556
    %v2118 = vunpack.c.l.b16 %v1557
    %v2119 = vunpack.c.h.b16 %v1557
    %v2120 = vunpack.c.l.b16 %v1558
    %v2121 = vunpack.c.h.b16 %v1558
    %v2122 = vunpack.c.l.b16 %v1559
    %v2123 = vunpack.c.h.b16 %v1559
    %v2124 = vunpack.c.l.b16 %v1560
    %v2125 = vunpack.c.h.b16 %v1560
    %v2126 = vunpack.c.l.b16 %v1561
    %v2127 = vunpack.c.h.b16 %v1561
    %v2128 = vunpack.c.l.b16 %v1562
    %v2129 = vunpack.c.h.b16 %v1562
    %v2130 = vunpack.c.l.b16 %v1563
    %v2131 = vunpack.c.h.b16 %v1563
    %v2132 = vunpack.c.l.b16 %v1564
    %v2133 = vunpack.c.h.b16 %v1564
    %v2134 = vunpack.c.l.b16 %v1565
    %v2135 = vunpack.c.h.b16 %v1565
    %v2136 = vunpack.c.l.b16 %v1566
    %v2137 = vunpack.c.h.b16 %v1566
    %v2138 = vunpack.c.l.b16 %v1567
    %v2139 = vunpack.c.h.b16 %v1567
    %v2140 = vunpack.c.l.b16 %v1568
    %v2141 = vunpack.c.h.b16 %v1568
    %v2142 = vunpack.c.l.b16 %v1569
    %v2143 = vunpack.c.h.b16 %v1569
    %v2144 = vunpack.c.l.b16 %v1570
    %v2145 = vunpack.c.h.b16 %v1570
    %v2146 = vunpack.c.l.b16 %v1571
    %v2147 = vunpack.c.h.b16 %v1571
    %v2148 = vunpack.c.l.b16 %v1572
    %v2149 = vunpack.c.h.b16 %v1572
    %v2150 = vunpack.c.l.b16 %v1573
    %v2151 = vunpack.c.h.b16 %v1573
    %v2152 = vunpack.c.l.b16 %v1574
    %v2153 = vunpack.c.h.b16 %v1574
    %v2154 = vunpack.c.l.b16 %v1575
    %v2155 = vunpack.c.h.b16 %v1575
    %v2156 = vunpack.c.l.b16 %v1576
    %v2157 = vunpack.c.h.b16 %v1576
    %v2158 = vunpack.c.l.b16 %v1577
    %v2159 = vunpack.c.h.b16 %v1577
    %v2160 = vunpack.c.l.b16 %v1578
    %v2161 = vunpack.c.h.b16 %v1578
    %v2162 = vunpack.c.l.b16 %v1579
    %v2163 = vunpack.c.h.b16 %v1579
    %v2164 = vunpack.c.l.b16 %v1580
    %v2165 = vunpack.c.h.b16 %v1580
    %v2166 = vunpack.c.l.b16 %v1581
    %v2167 = vunpack.c.h.b16 %v1581
    %v2168 = vunpack.c.l.b16 %v1582
    %v2169 = vunpack.c.h.b16 %v1582
    %v2170 = vunpack.c.l.b16 %v1583
    %v2171 = vunpack.c.h.b16 %v1583
    %v2172 = vunpack.c.l.b16 %v1584
    %v2173 = vunpack.c.h.b16 %v1584
    %v2174 = vunpack.c.l.b16 %v1585
    %v2175 = vunpack.c.h.b16 %v1585
    %v2176 = vunpack.c.l.b16 %v1586
    %v2177 = vunpack.c.h.b16 %v1586
    %v2178 = vunpack.c.l.b16 %v1587
    %v2179 = vunpack.c.h.b16 %v1587
    %v2180 = vunpack.c.l.b16 %v1588
    %v2181 = vunpack.c.h.b16 %v1588
    %v2182 = vunpack.c.l.b16 %v1589
    %v2183 = vunpack.c.h.b16 %v1589
    %v2184 = vunpack.c.l.b16 %v1590
    %v2185 = vunpack.c.h.b16 %v1590
    %v2186 = vunpack.c.l.b16 %v1591
    %v2187 = vunpack.c.h.b16 %v1591
    %v2188 = vunpack.c.l.b16 %v1592
    %v2189 = vunpack.c.h.b16 %v1592
    %v2190 = vunpack.c.l.b16 %v1593
    %v2191 = vunpack.c.h.b16 %v1593
    %v2192 = vunpack.c.l.b16 %v1594
    %v2193 = vunpack.c.h.b16 %v1594
    %v2194 = vunpack.c.l.b16 %v1595
    %v2195 = vunpack.c.h.b16 %v1595
    %v2196 = vunpack.c.l.b16 %v1596
    %v2197 = vunpack.c.h.b16 %v1596
    %v2198 = vunpack.c.l.b16 %v1597
    %v2199 = vunpack.c.h.b16 %v1597
    %v2200 = vunpack.c.l.b16 %v1598
    %v2201 = vunpack.c.h.b16 %v1598
    %v2202 = vunpack.c.l.b16 %v1599
    %v2203 = vunpack.c.h.b16 %v1599
    %v2204 = vunpack.c.l.b16 %v1600
    %v2205 = vunpack.c.h.b16 %v1600
    %v2206 = vunpack.c.l.b16 %v1601
    %v2207 = vunpack.c.h.b16 %v1601
    %v2208 = vunpack.c.l.b16 %v1602
    %v2209 = vunpack.c.h.b16 %v1602
    %v2210 = vunpack.c.l.b16 %v1603
    %v2211 = vunpack.c.h.b16 %v1603
    %v2212 = vunpack.c.l.b16 %v1604
    %v2213 = vunpack.c.h.b16 %v1604
    %v2214 = vunpack.c.l.b16 %v1605
    %v2215 = vunpack.c.h.b16 %v1605
    %v2216 = vunpack.c.l.b16 %v1606
    %v2217 = vunpack.c.h.b16 %v1606
    %v2218 = vunpack.c.l.b16 %v1607
    %v2219 = vunpack.c.h.b16 %v1607
    %v2220 = vunpack.c.l.b16 %v1608
    %v2221 = vunpack.c.h.b16 %v1608
    %v2222 = vunpack.c.l.b16 %v1609
    %v2223 = vunpack.c.h.b16 %v1609
    %v2224 = vunpack.c.l.b16 %v1610
    %v2225 = vunpack.c.h.b16 %v1610
    %v2226 = vunpack.c.l.b16 %v1611
    %v2227 = vunpack.c.h.b16 %v1611
    %v2228 = vunpack.c.l.b16 %v1612
    %v2229 = vunpack.c.h.b16 %v1612
    %v2230 = vunpack.c.l.b16 %v1613
    %v2231 = vunpack.c.h.b16 %v1613
    %v2232 = vunpack.c.l.b16 %v1614
    %v2233 = vunpack.c.h.b16 %v1614
    %v2234 = vunpack.c.l.b16 %v1615
    %v2235 = vunpack.c.h.b16 %v1615
    %v2236 = vunpack.c.l.b16 %v1616
    %v2237 = vunpack.c.h.b16 %v1616
    %v2238 = vunpack.c.l.b16 %v1617
    %v2239 = vunpack.c.h.b16 %v1617
    %v2240 = vunpack.c.l.b16 %v1618
    %v2241 = vunpack.c.h.b16 %v1618
    %v2242 = vunpack.c.l.b16 %v1619
    %v2243 = vunpack.c.h.b16 %v1619
    %v2244 = vunpack.c.l.b16 %v1620
    %v2245 = vunpack.c.h.b16 %v1620
    %v2246 = vunpack.c.l.b16 %v1621
    %v2247 = vunpack.c.h.b16 %v1621
    %v2248 = vunpack.c.l.b16 %v1622
    %v2249 = vunpack.c.h.b16 %v1622
    %v2250 = vunpack.c.l.b16 %v1623
    %v2251 = vunpack.c.h.b16 %v1623
    %v2252 = vunpack.c.l.b16 %v1624
    %v2253 = vunpack.c.h.b16 %v1624
    %v2254 = vunpack.c.l.b16 %v1625
    %v2255 = vunpack.c.h.b16 %v1625
    %v2256 = vunpack.c.l.b16 %v1626
    %v2257 = vunpack.c.h.b16 %v1626
    %v2258 = vunpack.c.l.b16 %v1627
    %v2259 = vunpack.c.h.b16 %v1627
    %v2260 = vunpack.c.l.b16 %v1628
    %v2261 = vunpack.c.h.b16 %v1628
    %v2262 = vunpack.c.l.b16 %v1629
    %v2263 = vunpack.c.h.b16 %v1629
    %v2264 = vunpack.c.l.b16 %v1630
    %v2265 = vunpack.c.h.b16 %v1630
    %v2266 = vunpack.c.l.b16 %v1631
    %v2267 = vunpack.c.h.b16 %v1631
    %v2268 = vunpack.c.l.b16 %v1632
    %v2269 = vunpack.c.h.b16 %v1632
    %v2270 = vunpack.c.l.b16 %v1633
    %v2271 = vunpack.c.h.b16 %v1633
    %v2272 = vunpack.c.l.b16 %v1634
    %v2273 = vunpack.c.h.b16 %v1634
    %v2274 = vunpack.c.l.b16 %v1635
    %v2275 = vunpack.c.h.b16 %v1635
    %v2276 = vunpack.c.l.b16 %v1636
    %v2277 = vunpack.c.h.b16 %v1636
    %v2278 = vunpack.c.l.b16 %v1637
    %v2279 = vunpack.c.h.b16 %v1637
    %v2280 = vunpack.c.l.b16 %v1638
    %v2281 = vunpack.c.h.b16 %v1638
    %v2282 = vunpack.c.l.b16 %v1639
    %v2283 = vunpack.c.h.b16 %v1639
    %v2284 = vunpack.c.l.b16 %v1640
    %v2285 = vunpack.c.h.b16 %v1640
    %v2286 = vunpack.c.l.b16 %v1641
    %v2287 = vunpack.c.h.b16 %v1641
    %v2288 = vunpack.c.l.b16 %v1642
    %v2289 = vunpack.c.h.b16 %v1642
    %v2290 = vunpack.c.l.b16 %v1643
    %v2291 = vunpack.c.h.b16 %v1643
    %v2292 = vunpack.c.l.b16 %v1644
    %v2293 = vunpack.c.h.b16 %v1644
    %v2294 = vunpack.c.l.b16 %v1645
    %v2295 = vunpack.c.h.b16 %v1645
    %v2296 = vunpack.c.l.b16 %v1646
    %v2297 = vunpack.c.h.b16 %v1646
    %v2298 = vunpack.c.l.b16 %v1647
    %v2299 = vunpack.c.h.b16 %v1647
    %v2300 = vunpack.c.l.b16 %v1648
    %v2301 = vunpack.c.h.b16 %v1648
    %v2302 = vunpack.c.l.b16 %v1649
    %v2303 = vunpack.c.h.b16 %v1649
    %v2304 = vunpack.c.l.b16 %v1650
    %v2305 = vunpack.c.h.b16 %v1650
    %v2306 = vunpack.c.l.b16 %v1651
    %v2307 = vunpack.c.h.b16 %v1651
    %v2308 = vunpack.c.l.b16 %v1652
    %v2309 = vunpack.c.h.b16 %v1652
    %v2310 = vunpack.c.l.b16 %v1653
    %v2311 = vunpack.c.h.b16 %v1653
    %v2312 = vunpack.c.l.b16 %v1654
    %v2313 = vunpack.c.h.b16 %v1654
    %v2314 = vunpack.c.l.b16 %v1655
    %v2315 = vunpack.c.h.b16 %v1655
    %v2316 = vunpack.c.l.b16 %v1656
    %v2317 = vunpack.c.h.b16 %v1656
    %v2318 = vunpack.c.l.b16 %v1657
    %v2319 = vunpack.c.h.b16 %v1657
    %v2320 = vunpack.c.l.b16 %v1658
    %v2321 = vunpack.c.h.b16 %v1658
    %v2322 = vunpack.c.l.b16 %v1659
    %v2323 = vunpack.c.h.b16 %v1659
    %v2324 = vunpack.c.l.b16 %v1660
    %v2325 = vunpack.c.h.b16 %v1660
    %v2326 = vunpack.c.l.b16 %v1661
    %v2327 = vunpack.c.h.b16 %v1661
    %v2328 = vunpack.c.l.b16 %v1662
    %v2329 = vunpack.c.h.b16 %v1662
    %v2330 = vunpack.c.l.b16 %v1663
    %v2331 = vunpack.c.h.b16 %v1663
    %v2332 = vunpack.c.l.b16 %v1664
    %v2333 = vunpack.c.h.b16 %v1664
    %v2334 = vunpack.c.l.b16 %v1665
    %v2335 = vunpack.c.h.b16 %v1665
    %v2336 = vunpack.c.l.b16 %v1666
    %v2337 = vunpack.c.h.b16 %v1666
    %v2338 = vunpack.c.l.b16 %v1667
    %v2339 = vunpack.c.h.b16 %v1667
    %v2340 = vunpack.c.l.b16 %v1668
    %v2341 = vunpack.c.h.b16 %v1668
    %v2342 = vunpack.c.l.b16 %v1669
    %v2343 = vunpack.c.h.b16 %v1669
    %v2344 = vunpack.c.l.b16 %v1670
    %v2345 = vunpack.c.h.b16 %v1670
    %v2346 = vunpack.c.l.b16 %v1671
    %v2347 = vunpack.c.h.b16 %v1671
    %v2348 = vunpack.c.l.b16 %v1672
    %v2349 = vunpack.c.h.b16 %v1672
    %v2350 = vunpack.c.l.b16 %v1673
    %v2351 = vunpack.c.h.b16 %v1673
    %v2352 = vunpack.c.l.b16 %v1674
    %v2353 = vunpack.c.h.b16 %v1674
    %v2354 = vunpack.c.l.b16 %v1675
    %v2355 = vunpack.c.h.b16 %v1675
    %v2356 = vunpack.c.l.b16 %v1676
    %v2357 = vunpack.c.h.b16 %v1676
    %v2358 = vunpack.c.l.b16 %v1677
    %v2359 = vunpack.c.h.b16 %v1677
    %v2360 = vunpack.c.l.b16 %v1678
    %v2361 = vunpack.c.h.b16 %v1678
    %v2362 = vunpack.c.l.b16 %v1679
    %v2363 = vunpack.c.h.b16 %v1679
    %v2364 = vunpack.c.l.b16 %v1680
    %v2365 = vunpack.c.h.b16 %v1680
    %v2366 = vunpack.c.l.b16 %v1681
    %v2367 = vunpack.c.h.b16 %v1681
    %v2368 = vunpack.c.l.b16 %v1682
    %v2369 = vunpack.c.h.b16 %v1682
    %v2370 = vunpack.c.l.b16 %v1683
    %v2371 = vunpack.c.h.b16 %v1683
    %v2372 = vunpack.c.l.b16 %v1684
    %v2373 = vunpack.c.h.b16 %v1684
    %v2374 = vunpack.c.l.b16 %v1685
    %v2375 = vunpack.c.h.b16 %v1685
    %v2376 = vunpack.c.l.b16 %v1686
    %v2377 = vunpack.c.h.b16 %v1686
    %v2378 = vunpack.c.l.b16 %v1687
    %v2379 = vunpack.c.h.b16 %v1687
    %v2380 = vunpack.c.l.b16 %v1688
    %v2381 = vunpack.c.h.b16 %v1688
    %v2382 = vunpack.c.l.b16 %v1689
    %v2383 = vunpack.c.h.b16 %v1689
    %v2384 = vunpack.c.l.b16 %v1690
    %v2385 = vunpack.c.h.b16 %v1690
    %v2386 = vunpack.c.l.b16 %v1691
    %v2387 = vunpack.c.h.b16 %v1691
    %v2388 = vpack.c.b16 %v2008, %v2004
    %v2389 = vpack.c.b16 %v2009, %v2005
    %v2390 = vpack.c.b16 %v2010, %v2006
    %v2391 = vpack.c.b16 %v2011, %v2007
    %v2392 = vpack.c.b16 %v2016, %v2012
    %v2393 = vpack.c.b16 %v2017, %v2013
    %v2394 = vpack.c.b16 %v2018, %v2014
    %v2395 = vpack.c.b16 %v2019, %v2015
    %v2396 = vpack.c.b16 %v2024, %v2020
    %v2397 = vpack.c.b16 %v2025, %v2021
    %v2398 = vpack.c.b16 %v2026, %v2022
    %v2399 = vpack.c.b16 %v2027, %v2023
    %v2400 = vpack.c.b16 %v2032, %v2028
    %v2401 = vpack.c.b16 %v2033, %v2029
    %v2402 = vpack.c.b16 %v2034, %v2030
    %v2403 = vpack.c.b16 %v2035, %v2031
    %v2404 = vpack.c.b16 %v2040, %v2036
    %v2405 = vpack.c.b16 %v2041, %v2037
    %v2406 = vpack.c.b16 %v2042, %v2038
    %v2407 = vpack.c.b16 %v2043, %v2039
    %v2408 = vpack.c.b16 %v2048, %v2044
    %v2409 = vpack.c.b16 %v2049, %v2045
    %v2410 = vpack.c.b16 %v2050, %v2046
    %v2411 = vpack.c.b16 %v2051, %v2047
    %v2412 = vpack.c.b16 %v2056, %v2052
    %v2413 = vpack.c.b16 %v2057, %v2053
    %v2414 = vpack.c.b16 %v2058, %v2054
    %v2415 = vpack.c.b16 %v2059, %v2055
    %v2416 = vpack.c.b16 %v2064, %v2060
    %v2417 = vpack.c.b16 %v2065, %v2061
    %v2418 = vpack.c.b16 %v2066, %v2062
    %v2419 = vpack.c.b16 %v2067, %v2063
    %v2420 = vpack.c.b16 %v2072, %v2068
    %v2421 = vpack.c.b16 %v2073, %v2069
    %v2422 = vpack.c.b16 %v2074, %v2070
    %v2423 = vpack.c.b16 %v2075, %v2071
    %v2424 = vpack.c.b16 %v2080, %v2076
    %v2425 = vpack.c.b16 %v2081, %v2077
    %v2426 = vpack.c.b16 %v2082, %v2078
    %v2427 = vpack.c.b16 %v2083, %v2079
    %v2428 = vpack.c.b16 %v2088, %v2084
    %v2429 = vpack.c.b16 %v2089, %v2085
    %v2430 = vpack.c.b16 %v2090, %v2086
    %v2431 = vpack.c.b16 %v2091, %v2087
    %v2432 = vpack.c.b16 %v2096, %v2092
    %v2433 = vpack.c.b16 %v2097, %v2093
    %v2434 = vpack.c.b16 %v2098, %v2094
    %v2435 = vpack.c.b16 %v2099, %v2095
    %v2436 = vpack.c.b16 %v2104, %v2100
    %v2437 = vpack.c.b16 %v2105, %v2101
    %v2438 = vpack.c.b16 %v2106, %v2102
    %v2439 = vpack.c.b16 %v2107, %v2103
    %v2440 = vpack.c.b16 %v2112, %v2108
    %v2441 = vpack.c.b16 %v2113, %v2109
    %v2442 = vpack.c.b16 %v2114, %v2110
    %v2443 = vpack.c.b16 %v2115, %v2111
    %v2444 = vpack.c.b16 %v2120, %v2116
    %v2445 = vpack.c.b16 %v2121, %v2117
    %v2446 = vpack.c.b16 %v2122, %v2118
    %v2447 = vpack.c.b16 %v2123, %v2119
    %v2448 = vpack.c.b16 %v2128, %v2124
    %v2449 = vpack.c.b16 %v2129, %v2125
    %v2450 = vpack.c.b16 %v2130, %v2126
    %v2451 = vpack.c.b16 %v2131, %v2127
    %v2452 = vpack.c.b16 %v2136, %v2132
    %v2453 = vpack.c.b16 %v2137, %v2133
    %v2454 = vpack.c.b16 %v2138, %v2134
    %v2455 = vpack.c.b16 %v2139, %v2135
    %v2456 = vpack.c.b16 %v2144, %v2140
    %v2457 = vpack.c.b16 %v2145, %v2141
    %v2458 = vpack.c.b16 %v2146, %v2142
    %v2459 = vpack.c.b16 %v2147, %v2143
    %v2460 = vpack.c.b16 %v2152, %v2148
    %v2461 = vpack.c.b16 %v2153, %v2149
    %v2462 = vpack.c.b16 %v2154, %v2150
    %v2463 = vpack.c.b16 %v2155, %v2151
    %v2464 = vpack.c.b16 %v2160, %v2156
    %v2465 = vpack.c.b16 %v2161, %v2157
    %v2466 = vpack.c.b16 %v2162, %v2158
    %v2467 = vpack.c.b16 %v2163, %v2159
    %v2468 = vpack.c.b16 %v2168, %v2164
    %v2469 = vpack.c.b16 %v2169, %v2165
    %v2470 = vpack.c.b16 %v2170, %v2166
    %v2471 = vpack.c.b16 %v2171, %v2167
    %v2472 = vpack.c.b16 %v2176, %v2172
    %v2473 = vpack.c.b16 %v2177, %v2173
    %v2474 = vpack.c.b16 %v2178, %v2174
    %v2475 = vpack.c.b16 %v2179, %v2175
    %v2476 = vpack.c.b16 %v2184, %v2180
    %v2477 = vpack.c.b16 %v2185, %v2181
    %v2478 = vpack.c.b16 %v2186, %v2182
    %v2479 = vpack.c.b16 %v2187, %v2183
    %v2480 = vpack.c.b16 %v2192, %v2188
    %v2481 = vpack.c.b16 %v2193, %v2189
    %v2482 = vpack.c.b16 %v2194, %v2190
    %v2483 = vpack.c.b16 %v2195, %v2191
    %v2484 = vpack.c.b16 %v2200, %v2196
    %v2485 = vpack.c.b16 %v2201, %v2197
    %v2486 = vpack.c.b16 %v2202, %v2198
    %v2487 = vpack.c.b16 %v2203, %v2199
    %v2488 = vpack.c.b16 %v2208, %v2204
    %v2489 = vpack.c.b16 %v2209, %v2205
    %v2490 = vpack.c.b16 %v2210, %v2206
    %v2491 = vpack.c.b16 %v2211, %v2207
    %v2492 = vpack.c.b16 %v2216, %v2212
    %v2493 = vpack.c.b16 %v2217, %v2213
    %v2494 = vpack.c.b16 %v2218, %v2214
    %v2495 = vpack.c.b16 %v2219, %v2215
    %v2496 = vpack.c.b16 %v2224, %v2220
    %v2497 = vpack.c.b16 %v2225, %v2221
    %v2498 = vpack.c.b16 %v2226, %v2222
    %v2499 = vpack.c.b16 %v2227, %v2223
    %v2500 = vpack.c.b16 %v2232, %v2228
    %v2501 = vpack.c.b16 %v2233, %v2229
    %v2502 = vpack.c.b16 %v2234, %v2230
    %v2503 = vpack.c.b16 %v2235, %v2231
    %v2504 = vpack.c.b16 %v2240, %v2236
    %v2505 = vpack.c.b16 %v2241, %v2237
    %v2506 = vpack.c.b16 %v2242, %v2238
    %v2507 = vpack.c.b16 %v2243, %v2239
    %v2508 = vpack.c.b16 %v2248, %v2244
    %v2509 = vpack.c.b16 %v2249, %v2245
    %v2510 = vpack.c.b16 %v2250, %v2246
    %v2511 = vpack.c.b16 %v2251, %v2247
    %v2512 = vpack.c.b16 %v2256, %v2252
    %v2513 = vpack.c.b16 %v2257, %v2253
    %v2514 = vpack.c.b16 %v2258, %v2254
    %v2515 = vpack.c.b16 %v2259, %v2255
    %v2516 = vpack.c.b16 %v2264, %v2260
    %v2517 = vpack.c.b16 %v2265, %v2261
    %v2518 = vpack.c.b16 %v2266, %v2262
    %v2519 = vpack.c.b16 %v2267, %v2263
    %v2520 = vpack.c.b16 %v2272, %v2268
    %v2521 = vpack.c.b16 %v2273, %v2269
    %v2522 = vpack.c.b16 %v2274, %v2270
    %v2523 = vpack.c.b16 %v2275, %v2271
    %v2524 = vpack.c.b16 %v2280, %v2276
    %v2525 = vpack.c.b16 %v2281, %v2277
    %v2526 = vpack.c.b16 %v2282, %v2278
    %v2527 = vpack.c.b16 %v2283, %v2279
    %v2528 = vpack.c.b16 %v2288, %v2284
    %v2529 = vpack.c.b16 %v2289, %v2285
    %v2530 = vpack.c.b16 %v2290, %v2286
    %v2531 = vpack.c.b16 %v2291, %v2287
    %v2532 = vpack.c.b16 %v2296, %v2292
    %v2533 = vpack.c.b16 %v2297, %v2293
    %v2534 = vpack.c.b16 %v2298, %v2294
    %v2535 = vpack.c.b16 %v2299, %v2295
    %v2536 = vpack.c.b16 %v2304, %v2300
    %v2537 = vpack.c.b16 %v2305, %v2301
    %v2538 = vpack.c.b16 %v2306, %v2302
    %v2539 = vpack.c.b16 %v2307, %v2303
    %v2540 = vpack.c.b16 %v2312, %v2308
    %v2541 = vpack.c.b16 %v2313, %v2309
    %v2542 = vpack.c.b16 %v2314, %v2310
    %v2543 = vpack.c.b16 %v2315, %v2311
    %v2544 = vpack.c.b16 %v2320, %v2316
    %v2545 = vpack.c.b16 %v2321, %v2317
    %v2546 = vpack.c.b16 %v2322, %v2318
    %v2547 = vpack.c.b16 %v2323, %v2319
    %v2548 = vpack.c.b16 %v2328, %v2324
    %v2549 = vpack.c.b16 %v2329, %v2325
    %v2550 = vpack.c.b16 %v2330, %v2326
    %v2551 = vpack.c.b16 %v2331, %v2327
    %v2552 = vpack.c.b16 %v2336, %v2332
    %v2553 = vpack.c.b16 %v2337, %v2333
    %v2554 = vpack.c.b16 %v2338, %v2334
    %v2555 = vpack.c.b16 %v2339, %v2335
    %v2556 = vpack.c.b16 %v2344, %v2340
    %v2557 = vpack.c.b16 %v2345, %v2341
    %v2558 = vpack.c.b16 %v2346, %v2342
    %v2559 = vpack.c.b16 %v2347, %v2343
    %v2560 = vpack.c.b16 %v2352, %v2348
    %v2561 = vpack.c.b16 %v2353, %v2349
    %v2562 = vpack.c.b16 %v2354, %v2350
    %v2563 = vpack.c.b16 %v2355, %v2351
    %v2564 = vpack.c.b16 %v2360, %v2356
    %v2565 = vpack.c.b16 %v2361, %v2357
    %v2566 = vpack.c.b16 %v2362, %v2358
    %v2567 = vpack.c.b16 %v2363, %v2359
    %v2568 = vpack.c.b16 %v2368, %v2364
    %v2569 = vpack.c.b16 %v2369, %v2365
    %v2570 = vpack.c.b16 %v2370, %v2366
    %v2571 = vpack.c.b16 %v2371, %v2367
    %v2572 = vpack.c.b16 %v2376, %v2372
    %v2573 = vpack.c.b16 %v2377, %v2373
    %v2574 = vpack.c.b16 %v2378, %v2374
    %v2575 = vpack.c.b16 %v2379, %v2375
    %v2576 = vpack.c.b16 %v2384, %v2380
    %v2577 = vpack.c.b16 %v2385, %v2381
    %v2578 = vpack.c.b16 %v2386, %v2382
    %v2579 = vpack.c.b16 %v2387, %v2383
    %2772 = vmatprep.subr.bf16.mxu0 %v2417
    %2773 = vmatpush1.bf16.msra.mxu0 %v2416
    %2774 = vmatprep.subr.bf16.mxu0 %v2413
    %2775 = vmatpush1.bf16.msra.mxu0 %v2412
    %2776 = vmatprep.subr.bf16.mxu0 %v2409
    %2777 = vmatpush1.bf16.msra.mxu0 %v2408
    %2778 = vmatprep.subr.bf16.mxu0 %v2405
    %2779 = vmatpush1.bf16.msra.mxu0 %v2404
    %2780 = vmatprep.subr.bf16.mxu0 %v2401
    %2781 = vmatpush1.bf16.msra.mxu0 %v2400
    %2782 = vmatprep.subr.bf16.mxu0 %v2397
    %2783 = vmatpush1.bf16.msra.mxu0 %v2396
    %2784 = vmatprep.subr.bf16.mxu0 %v2393
    %2785 = vmatpush1.bf16.msra.mxu0 %v2392
    %2786 = vmatprep.subr.bf16.mxu0 %v2389
    %2787 = vmatpush1.bf16.msra.mxu0 %v2388
    %2788 = vmatprep.subr.bf16.mxu0 %v2449
    %2789 = vmatpush2.bf16.msra.mxu0 %v2448
    %2790 = vmatprep.subr.bf16.mxu0 %v2445
    %2791 = vmatpush2.bf16.msra.mxu0 %v2444
    %2792 = vmatprep.subr.bf16.mxu0 %v2441
    %2793 = vmatpush2.bf16.msra.mxu0 %v2440
    %2794 = vmatprep.subr.bf16.mxu0 %v2437
    %2795 = vmatpush2.bf16.msra.mxu0 %v2436
    %2796 = vmatprep.subr.bf16.mxu0 %v2433
    %2797 = vmatpush2.bf16.msra.mxu0 %v2432
    %2798 = vmatprep.subr.bf16.mxu0 %v2429
    %2799 = vmatpush2.bf16.msra.mxu0 %v2428
    %2800 = vmatprep.subr.bf16.mxu0 %v2425
    %2801 = vmatpush2.bf16.msra.mxu0 %v2424
    %2802 = vmatprep.subr.bf16.mxu0 %v2421
    %2803 = vmatpush2.bf16.msra.mxu0 %v2420
    %2804 = vmatprep.mubr.bf16.mxu0 %v1765
    %2805 = vmatmul.mubr.bf16.gmra.mxu0 %v1764
    %v2806 = vpop.f32.mrf.mxu0
    %v2807 = vadd.f32 0.0, %v2806
    %v2808 = vpop.f32.mrf.mxu0
    %v2809 = vadd.f32 0.0, %v2808
    %v2810 = vpop.f32.mrf.mxu0
    %v2811 = vadd.f32 0.0, %v2810
    %v2812 = vpop.f32.mrf.mxu0
    %v2813 = vadd.f32 0.0, %v2812
    %2814 = vmatprep.mubr.bf16.mxu0 %v1771
    %2815 = vmatmul.mubr.bf16.gmra.mxu0 %v1770
    %v2816 = vpop.f32.mrf.mxu0
    %v2817 = vadd.f32 0.0, %v2816
    %v2818 = vpop.f32.mrf.mxu0
    %v2819 = vadd.f32 0.0, %v2818
    %v2820 = vpop.f32.mrf.mxu0
    %v2821 = vadd.f32 0.0, %v2820
    %v2822 = vpop.f32.mrf.mxu0
    %v2823 = vadd.f32 0.0, %v2822
    %2824 = vmatprep.mubr.bf16.mxu0 %v1777
    %2825 = vmatmul.mubr.bf16.gmra.mxu0 %v1776
    %v2826 = vpop.f32.mrf.mxu0
    %v2827 = vadd.f32 0.0, %v2826
    %v2828 = vpop.f32.mrf.mxu0
    %v2829 = vadd.f32 0.0, %v2828
    %v2830 = vpop.f32.mrf.mxu0
    %v2831 = vadd.f32 0.0, %v2830
    %v2832 = vpop.f32.mrf.mxu0
    %v2833 = vadd.f32 0.0, %v2832
    %2834 = vmatprep.mubr.bf16.mxu0 %v1783
    %2835 = vmatmul.mubr.bf16.gmra.mxu0 %v1782
    %v2836 = vpop.f32.mrf.mxu0
    %v2837 = vadd.f32 0.0, %v2836
    %v2838 = vpop.f32.mrf.mxu0
    %v2839 = vadd.f32 0.0, %v2838
    %v2840 = vpop.f32.mrf.mxu0
    %v2841 = vadd.f32 0.0, %v2840
    %v2842 = vpop.f32.mrf.mxu0
    %v2843 = vadd.f32 0.0, %v2842
    %2844 = vdwg.mxu0
    %2845 = vmatprep.subr.bf16.mxu0 %v2481
    %2846 = vmatpush1.bf16.msra.mxu0 %v2480
    %2847 = vmatprep.subr.bf16.mxu0 %v2477
    %2848 = vmatpush1.bf16.msra.mxu0 %v2476
    %2849 = vmatprep.subr.bf16.mxu0 %v2473
    %2850 = vmatpush1.bf16.msra.mxu0 %v2472
    %2851 = vmatprep.subr.bf16.mxu0 %v2469
    %2852 = vmatpush1.bf16.msra.mxu0 %v2468
    %2853 = vmatprep.subr.bf16.mxu0 %v2465
    %2854 = vmatpush1.bf16.msra.mxu0 %v2464
    %2855 = vmatprep.subr.bf16.mxu0 %v2461
    %2856 = vmatpush1.bf16.msra.mxu0 %v2460
    %2857 = vmatprep.subr.bf16.mxu0 %v2457
    %2858 = vmatpush1.bf16.msra.mxu0 %v2456
    %2859 = vmatprep.subr.bf16.mxu0 %v2453
    %2860 = vmatpush1.bf16.msra.mxu0 %v2452
    %2861 = vmatprep.subr.bf16.mxu0 %v2513
    %2862 = vmatpush2.bf16.msra.mxu0 %v2512
    %2863 = vmatprep.subr.bf16.mxu0 %v2509
    %2864 = vmatpush2.bf16.msra.mxu0 %v2508
    %2865 = vmatprep.subr.bf16.mxu0 %v2505
    %2866 = vmatpush2.bf16.msra.mxu0 %v2504
    %2867 = vmatprep.subr.bf16.mxu0 %v2501
    %2868 = vmatpush2.bf16.msra.mxu0 %v2500
    %2869 = vmatprep.subr.bf16.mxu0 %v2497
    %2870 = vmatpush2.bf16.msra.mxu0 %v2496
    %2871 = vmatprep.subr.bf16.mxu0 %v2493
    %2872 = vmatpush2.bf16.msra.mxu0 %v2492
    %2873 = vmatprep.subr.bf16.mxu0 %v2489
    %2874 = vmatpush2.bf16.msra.mxu0 %v2488
    %2875 = vmatprep.subr.bf16.mxu0 %v2485
    %2876 = vmatpush2.bf16.msra.mxu0 %v2484
    %2877 = vmatprep.mubr.bf16.mxu0 %v1767
    %2878 = vmatmul.mubr.bf16.gmra.mxu0 %v1766
    %v2879 = vpop.f32.mrf.mxu0
    %v2880 = vadd.f32 %v2807, %v2879
    %v2881 = vpop.f32.mrf.mxu0
    %v2882 = vadd.f32 %v2809, %v2881
    %v2883 = vpop.f32.mrf.mxu0
    %v2884 = vadd.f32 %v2811, %v2883
    %v2885 = vpop.f32.mrf.mxu0
    %v2886 = vadd.f32 %v2813, %v2885
    %2887 = vmatprep.mubr.bf16.mxu0 %v1773
    %2888 = vmatmul.mubr.bf16.gmra.mxu0 %v1772
    %v2889 = vpop.f32.mrf.mxu0
    %v2890 = vadd.f32 %v2817, %v2889
    %v2891 = vpop.f32.mrf.mxu0
    %v2892 = vadd.f32 %v2819, %v2891
    %v2893 = vpop.f32.mrf.mxu0
    %v2894 = vadd.f32 %v2821, %v2893
    %v2895 = vpop.f32.mrf.mxu0
    %v2896 = vadd.f32 %v2823, %v2895
    %2897 = vmatprep.mubr.bf16.mxu0 %v1779
    %2898 = vmatmul.mubr.bf16.gmra.mxu0 %v1778
    %v2899 = vpop.f32.mrf.mxu0
    %v2900 = vadd.f32 %v2827, %v2899
    %v2901 = vpop.f32.mrf.mxu0
    %v2902 = vadd.f32 %v2829, %v2901
    %v2903 = vpop.f32.mrf.mxu0
    %v2904 = vadd.f32 %v2831, %v2903
    %v2905 = vpop.f32.mrf.mxu0
    %v2906 = vadd.f32 %v2833, %v2905
    %2907 = vmatprep.mubr.bf16.mxu0 %v1785
    %2908 = vmatmul.mubr.bf16.gmra.mxu0 %v1784
    %v2909 = vpop.f32.mrf.mxu0
    %v2910 = vadd.f32 %v2837, %v2909
    %v2911 = vpop.f32.mrf.mxu0
    %v2912 = vadd.f32 %v2839, %v2911
    %v2913 = vpop.f32.mrf.mxu0
    %v2914 = vadd.f32 %v2841, %v2913
    %v2915 = vpop.f32.mrf.mxu0
    %v2916 = vadd.f32 %v2843, %v2915
    %2917 = vdwg.mxu0
    %2918 = vmatprep.subr.bf16.mxu0 %v2545
    %2919 = vmatpush1.bf16.msra.mxu0 %v2544
    %2920 = vmatprep.subr.bf16.mxu0 %v2541
    %2921 = vmatpush1.bf16.msra.mxu0 %v2540
    %2922 = vmatprep.subr.bf16.mxu0 %v2537
    %2923 = vmatpush1.bf16.msra.mxu0 %v2536
    %2924 = vmatprep.subr.bf16.mxu0 %v2533
    %2925 = vmatpush1.bf16.msra.mxu0 %v2532
    %2926 = vmatprep.subr.bf16.mxu0 %v2529
    %2927 = vmatpush1.bf16.msra.mxu0 %v2528
    %2928 = vmatprep.subr.bf16.mxu0 %v2525
    %2929 = vmatpush1.bf16.msra.mxu0 %v2524
    %2930 = vmatprep.subr.bf16.mxu0 %v2521
    %2931 = vmatpush1.bf16.msra.mxu0 %v2520
    %2932 = vmatprep.subr.bf16.mxu0 %v2517
    %2933 = vmatpush1.bf16.msra.mxu0 %v2516
    %2934 = vmatprep.subr.bf16.mxu0 %v2577
    %2935 = vmatpush2.bf16.msra.mxu0 %v2576
    %2936 = vmatprep.subr.bf16.mxu0 %v2573
    %2937 = vmatpush2.bf16.msra.mxu0 %v2572
    %2938 = vmatprep.subr.bf16.mxu0 %v2569
    %2939 = vmatpush2.bf16.msra.mxu0 %v2568
    %2940 = vmatprep.subr.bf16.mxu0 %v2565
    %2941 = vmatpush2.bf16.msra.mxu0 %v2564
    %2942 = vmatprep.subr.bf16.mxu0 %v2561
    %2943 = vmatpush2.bf16.msra.mxu0 %v2560
    %2944 = vmatprep.subr.bf16.mxu0 %v2557
    %2945 = vmatpush2.bf16.msra.mxu0 %v2556
    %2946 = vmatprep.subr.bf16.mxu0 %v2553
    %2947 = vmatpush2.bf16.msra.mxu0 %v2552
    %2948 = vmatprep.subr.bf16.mxu0 %v2549
    %2949 = vmatpush2.bf16.msra.mxu0 %v2548
    %2950 = vmatprep.mubr.bf16.mxu0 %v1769
    %2951 = vmatmul.mubr.bf16.gmra.mxu0 %v1768
    %v2952 = vpop.f32.mrf.mxu0
    %v2953 = vadd.f32 %v2880, %v2952
    %v2954 = vpop.f32.mrf.mxu0
    %v2955 = vadd.f32 %v2882, %v2954
    %v2956 = vpop.f32.mrf.mxu0
    %v2957 = vadd.f32 %v2884, %v2956
    %v2958 = vpop.f32.mrf.mxu0
    %v2959 = vadd.f32 %v2886, %v2958
    %2960 = vmatprep.mubr.bf16.mxu0 %v1775
    %2961 = vmatmul.mubr.bf16.gmra.mxu0 %v1774
    %v2962 = vpop.f32.mrf.mxu0
    %v2963 = vadd.f32 %v2890, %v2962
    %v2964 = vpop.f32.mrf.mxu0
    %v2965 = vadd.f32 %v2892, %v2964
    %v2966 = vpop.f32.mrf.mxu0
    %v2967 = vadd.f32 %v2894, %v2966
    %v2968 = vpop.f32.mrf.mxu0
    %v2969 = vadd.f32 %v2896, %v2968
    %2970 = vmatprep.mubr.bf16.mxu0 %v1781
    %2971 = vmatmul.mubr.bf16.gmra.mxu0 %v1780
    %v2972 = vpop.f32.mrf.mxu0
    %v2973 = vadd.f32 %v2900, %v2972
    %v2974 = vpop.f32.mrf.mxu0
    %v2975 = vadd.f32 %v2902, %v2974
    %v2976 = vpop.f32.mrf.mxu0
    %v2977 = vadd.f32 %v2904, %v2976
    %v2978 = vpop.f32.mrf.mxu0
    %v2979 = vadd.f32 %v2906, %v2978
    %2980 = vmatprep.mubr.bf16.mxu0 %v1787
    %2981 = vmatmul.mubr.bf16.gmra.mxu0 %v1786
    %v2982 = vpop.f32.mrf.mxu0
    %v2983 = vadd.f32 %v2910, %v2982
    %v2984 = vpop.f32.mrf.mxu0
    %v2985 = vadd.f32 %v2912, %v2984
    %v2986 = vpop.f32.mrf.mxu0
    %v2987 = vadd.f32 %v2914, %v2986
    %v2988 = vpop.f32.mrf.mxu0
    %v2989 = vadd.f32 %v2916, %v2988
    %2990 = vdwg.mxu0
    %2991 = vmatprep.subr.bf16.mxu0 %v2419
    %2992 = vmatpush1.bf16.msra.mxu0 %v2418
    %2993 = vmatprep.subr.bf16.mxu0 %v2415
    %2994 = vmatpush1.bf16.msra.mxu0 %v2414
    %2995 = vmatprep.subr.bf16.mxu0 %v2411
    %2996 = vmatpush1.bf16.msra.mxu0 %v2410
    %2997 = vmatprep.subr.bf16.mxu0 %v2407
    %2998 = vmatpush1.bf16.msra.mxu0 %v2406
    %2999 = vmatprep.subr.bf16.mxu0 %v2403
    %3000 = vmatpush1.bf16.msra.mxu0 %v2402
    %3001 = vmatprep.subr.bf16.mxu0 %v2399
    %3002 = vmatpush1.bf16.msra.mxu0 %v2398
    %3003 = vmatprep.subr.bf16.mxu0 %v2395
    %3004 = vmatpush1.bf16.msra.mxu0 %v2394
    %3005 = vmatprep.subr.bf16.mxu0 %v2391
    %3006 = vmatpush1.bf16.msra.mxu0 %v2390
    %3007 = vmatprep.subr.bf16.mxu0 %v2451
    %3008 = vmatpush2.bf16.msra.mxu0 %v2450
    %3009 = vmatprep.subr.bf16.mxu0 %v2447
    %3010 = vmatpush2.bf16.msra.mxu0 %v2446
    %3011 = vmatprep.subr.bf16.mxu0 %v2443
    %3012 = vmatpush2.bf16.msra.mxu0 %v2442
    %3013 = vmatprep.subr.bf16.mxu0 %v2439
    %3014 = vmatpush2.bf16.msra.mxu0 %v2438
    %3015 = vmatprep.subr.bf16.mxu0 %v2435
    %3016 = vmatpush2.bf16.msra.mxu0 %v2434
    %3017 = vmatprep.subr.bf16.mxu0 %v2431
    %3018 = vmatpush2.bf16.msra.mxu0 %v2430
    %3019 = vmatprep.subr.bf16.mxu0 %v2427
    %3020 = vmatpush2.bf16.msra.mxu0 %v2426
    %3021 = vmatprep.subr.bf16.mxu0 %v2423
    %3022 = vmatpush2.bf16.msra.mxu0 %v2422
    %3023 = vmatprep.mubr.bf16.mxu0 %v1765
    %3024 = vmatmul.mubr.bf16.gmra.mxu0 %v1764
    %v3025 = vpop.f32.mrf.mxu0
    %v3026 = vadd.f32 0.0, %v3025
    %v3027 = vpop.f32.mrf.mxu0
    %v3028 = vadd.f32 0.0, %v3027
    %v3029 = vpop.f32.mrf.mxu0
    %v3030 = vadd.f32 0.0, %v3029
    %v3031 = vpop.f32.mrf.mxu0
    %v3032 = vadd.f32 0.0, %v3031
    %3033 = vmatprep.mubr.bf16.mxu0 %v1771
    %3034 = vmatmul.mubr.bf16.gmra.mxu0 %v1770
    %v3035 = vpop.f32.mrf.mxu0
    %v3036 = vadd.f32 0.0, %v3035
    %v3037 = vpop.f32.mrf.mxu0
    %v3038 = vadd.f32 0.0, %v3037
    %v3039 = vpop.f32.mrf.mxu0
    %v3040 = vadd.f32 0.0, %v3039
    %v3041 = vpop.f32.mrf.mxu0
    %v3042 = vadd.f32 0.0, %v3041
    %3043 = vmatprep.mubr.bf16.mxu0 %v1777
    %3044 = vmatmul.mubr.bf16.gmra.mxu0 %v1776
    %v3045 = vpop.f32.mrf.mxu0
    %v3046 = vadd.f32 0.0, %v3045
    %v3047 = vpop.f32.mrf.mxu0
    %v3048 = vadd.f32 0.0, %v3047
    %v3049 = vpop.f32.mrf.mxu0
    %v3050 = vadd.f32 0.0, %v3049
    %v3051 = vpop.f32.mrf.mxu0
    %v3052 = vadd.f32 0.0, %v3051
    %3053 = vmatprep.mubr.bf16.mxu0 %v1783
    %3054 = vmatmul.mubr.bf16.gmra.mxu0 %v1782
    %v3055 = vpop.f32.mrf.mxu0
    %v3056 = vadd.f32 0.0, %v3055
    %v3057 = vpop.f32.mrf.mxu0
    %v3058 = vadd.f32 0.0, %v3057
    %v3059 = vpop.f32.mrf.mxu0
    %v3060 = vadd.f32 0.0, %v3059
    %v3061 = vpop.f32.mrf.mxu0
    %v3062 = vadd.f32 0.0, %v3061
    %3063 = vdwg.mxu0
    %3064 = vmatprep.subr.bf16.mxu0 %v2483
    %3065 = vmatpush1.bf16.msra.mxu0 %v2482
    %3066 = vmatprep.subr.bf16.mxu0 %v2479
    %3067 = vmatpush1.bf16.msra.mxu0 %v2478
    %3068 = vmatprep.subr.bf16.mxu0 %v2475
    %3069 = vmatpush1.bf16.msra.mxu0 %v2474
    %3070 = vmatprep.subr.bf16.mxu0 %v2471
    %3071 = vmatpush1.bf16.msra.mxu0 %v2470
    %3072 = vmatprep.subr.bf16.mxu0 %v2467
    %3073 = vmatpush1.bf16.msra.mxu0 %v2466
    %3074 = vmatprep.subr.bf16.mxu0 %v2463
    %3075 = vmatpush1.bf16.msra.mxu0 %v2462
    %3076 = vmatprep.subr.bf16.mxu0 %v2459
    %3077 = vmatpush1.bf16.msra.mxu0 %v2458
    %3078 = vmatprep.subr.bf16.mxu0 %v2455
    %3079 = vmatpush1.bf16.msra.mxu0 %v2454
    %3080 = vmatprep.subr.bf16.mxu0 %v2515
    %3081 = vmatpush2.bf16.msra.mxu0 %v2514
    %3082 = vmatprep.subr.bf16.mxu0 %v2511
    %3083 = vmatpush2.bf16.msra.mxu0 %v2510
    %3084 = vmatprep.subr.bf16.mxu0 %v2507
    %3085 = vmatpush2.bf16.msra.mxu0 %v2506
    %3086 = vmatprep.subr.bf16.mxu0 %v2503
    %3087 = vmatpush2.bf16.msra.mxu0 %v2502
    %3088 = vmatprep.subr.bf16.mxu0 %v2499
    %3089 = vmatpush2.bf16.msra.mxu0 %v2498
    %3090 = vmatprep.subr.bf16.mxu0 %v2495
    %3091 = vmatpush2.bf16.msra.mxu0 %v2494
    %3092 = vmatprep.subr.bf16.mxu0 %v2491
    %3093 = vmatpush2.bf16.msra.mxu0 %v2490
    %3094 = vmatprep.subr.bf16.mxu0 %v2487
    %3095 = vmatpush2.bf16.msra.mxu0 %v2486
    %3096 = vmatprep.mubr.bf16.mxu0 %v1767
    %3097 = vmatmul.mubr.bf16.gmra.mxu0 %v1766
    %v3098 = vpop.f32.mrf.mxu0
    %v3099 = vadd.f32 %v3026, %v3098
    %v3100 = vpop.f32.mrf.mxu0
    %v3101 = vadd.f32 %v3028, %v3100
    %v3102 = vpop.f32.mrf.mxu0
    %v3103 = vadd.f32 %v3030, %v3102
    %v3104 = vpop.f32.mrf.mxu0
    %v3105 = vadd.f32 %v3032, %v3104
    %3106 = vmatprep.mubr.bf16.mxu0 %v1773
    %3107 = vmatmul.mubr.bf16.gmra.mxu0 %v1772
    %v3108 = vpop.f32.mrf.mxu0
    %v3109 = vadd.f32 %v3036, %v3108
    %v3110 = vpop.f32.mrf.mxu0
    %v3111 = vadd.f32 %v3038, %v3110
    %v3112 = vpop.f32.mrf.mxu0
    %v3113 = vadd.f32 %v3040, %v3112
    %v3114 = vpop.f32.mrf.mxu0
    %v3115 = vadd.f32 %v3042, %v3114
    %3116 = vmatprep.mubr.bf16.mxu0 %v1779
    %3117 = vmatmul.mubr.bf16.gmra.mxu0 %v1778
    %v3118 = vpop.f32.mrf.mxu0
    %v3119 = vadd.f32 %v3046, %v3118
    %v3120 = vpop.f32.mrf.mxu0
    %v3121 = vadd.f32 %v3048, %v3120
    %v3122 = vpop.f32.mrf.mxu0
    %v3123 = vadd.f32 %v3050, %v3122
    %v3124 = vpop.f32.mrf.mxu0
    %v3125 = vadd.f32 %v3052, %v3124
    %3126 = vmatprep.mubr.bf16.mxu0 %v1785
    %3127 = vmatmul.mubr.bf16.gmra.mxu0 %v1784
    %v3128 = vpop.f32.mrf.mxu0
    %v3129 = vadd.f32 %v3056, %v3128
    %v3130 = vpop.f32.mrf.mxu0
    %v3131 = vadd.f32 %v3058, %v3130
    %v3132 = vpop.f32.mrf.mxu0
    %v3133 = vadd.f32 %v3060, %v3132
    %v3134 = vpop.f32.mrf.mxu0
    %v3135 = vadd.f32 %v3062, %v3134
    %3136 = vdwg.mxu0
    %3137 = vmatprep.subr.bf16.mxu0 %v2547
    %3138 = vmatpush1.bf16.msra.mxu0 %v2546
    %3139 = vmatprep.subr.bf16.mxu0 %v2543
    %3140 = vmatpush1.bf16.msra.mxu0 %v2542
    %3141 = vmatprep.subr.bf16.mxu0 %v2539
    %3142 = vmatpush1.bf16.msra.mxu0 %v2538
    %3143 = vmatprep.subr.bf16.mxu0 %v2535
    %3144 = vmatpush1.bf16.msra.mxu0 %v2534
    %3145 = vmatprep.subr.bf16.mxu0 %v2531
    %3146 = vmatpush1.bf16.msra.mxu0 %v2530
    %3147 = vmatprep.subr.bf16.mxu0 %v2527
    %3148 = vmatpush1.bf16.msra.mxu0 %v2526
    %3149 = vmatprep.subr.bf16.mxu0 %v2523
    %3150 = vmatpush1.bf16.msra.mxu0 %v2522
    %3151 = vmatprep.subr.bf16.mxu0 %v2519
    %3152 = vmatpush1.bf16.msra.mxu0 %v2518
    %3153 = vmatprep.subr.bf16.mxu0 %v2579
    %3154 = vmatpush2.bf16.msra.mxu0 %v2578
    %3155 = vmatprep.subr.bf16.mxu0 %v2575
    %3156 = vmatpush2.bf16.msra.mxu0 %v2574
    %3157 = vmatprep.subr.bf16.mxu0 %v2571
    %3158 = vmatpush2.bf16.msra.mxu0 %v2570
    %3159 = vmatprep.subr.bf16.mxu0 %v2567
    %3160 = vmatpush2.bf16.msra.mxu0 %v2566
    %3161 = vmatprep.subr.bf16.mxu0 %v2563
    %3162 = vmatpush2.bf16.msra.mxu0 %v2562
    %3163 = vmatprep.subr.bf16.mxu0 %v2559
    %3164 = vmatpush2.bf16.msra.mxu0 %v2558
    %3165 = vmatprep.subr.bf16.mxu0 %v2555
    %3166 = vmatpush2.bf16.msra.mxu0 %v2554
    %3167 = vmatprep.subr.bf16.mxu0 %v2551
    %3168 = vmatpush2.bf16.msra.mxu0 %v2550
    %3169 = vmatprep.mubr.bf16.mxu0 %v1769
    %3170 = vmatmul.mubr.bf16.gmra.mxu0 %v1768
    %v3171 = vpop.f32.mrf.mxu0
    %v3172 = vadd.f32 %v3099, %v3171
    %v3173 = vpop.f32.mrf.mxu0
    %v3174 = vadd.f32 %v3101, %v3173
    %v3175 = vpop.f32.mrf.mxu0
    %v3176 = vadd.f32 %v3103, %v3175
    %v3177 = vpop.f32.mrf.mxu0
    %v3178 = vadd.f32 %v3105, %v3177
    %3179 = vmatprep.mubr.bf16.mxu0 %v1775
    %3180 = vmatmul.mubr.bf16.gmra.mxu0 %v1774
    %v3181 = vpop.f32.mrf.mxu0
    %v3182 = vadd.f32 %v3109, %v3181
    %v3183 = vpop.f32.mrf.mxu0
    %v3184 = vadd.f32 %v3111, %v3183
    %v3185 = vpop.f32.mrf.mxu0
    %v3186 = vadd.f32 %v3113, %v3185
    %v3187 = vpop.f32.mrf.mxu0
    %v3188 = vadd.f32 %v3115, %v3187
    %3189 = vmatprep.mubr.bf16.mxu0 %v1781
    %3190 = vmatmul.mubr.bf16.gmra.mxu0 %v1780
    %v3191 = vpop.f32.mrf.mxu0
    %v3192 = vadd.f32 %v3119, %v3191
    %v3193 = vpop.f32.mrf.mxu0
    %v3194 = vadd.f32 %v3121, %v3193
    %v3195 = vpop.f32.mrf.mxu0
    %v3196 = vadd.f32 %v3123, %v3195
    %v3197 = vpop.f32.mrf.mxu0
    %v3198 = vadd.f32 %v3125, %v3197
    %3199 = vmatprep.mubr.bf16.mxu0 %v1787
    %3200 = vmatmul.mubr.bf16.gmra.mxu0 %v1786
    %v3201 = vpop.f32.mrf.mxu0
    %v3202 = vadd.f32 %v3129, %v3201
    %v3203 = vpop.f32.mrf.mxu0
    %v3204 = vadd.f32 %v3131, %v3203
    %v3205 = vpop.f32.mrf.mxu0
    %v3206 = vadd.f32 %v3133, %v3205
    %v3207 = vpop.f32.mrf.mxu0
    %v3208 = vadd.f32 %v3135, %v3207
    %3209 = vdwg.mxu0
    %v3210 = vpack.c.bf16 %v2957, %v2953
    %v3211 = vpack.c.bf16 %v2959, %v2955
    %v3212 = vpack.c.bf16 %v2967, %v2963
    %v3213 = vpack.c.bf16 %v2969, %v2965
    %v3214 = vpack.c.bf16 %v2977, %v2973
    %v3215 = vpack.c.bf16 %v2979, %v2975
    %v3216 = vpack.c.bf16 %v2987, %v2983
    %v3217 = vpack.c.bf16 %v2989, %v2985
    %v3218 = vpack.c.bf16 %v3176, %v3172
    %v3219 = vpack.c.bf16 %v3178, %v3174
    %v3220 = vpack.c.bf16 %v3186, %v3182
    %v3221 = vpack.c.bf16 %v3188, %v3184
    %v3222 = vpack.c.bf16 %v3196, %v3192
    %v3223 = vpack.c.bf16 %v3198, %v3194
    %v3224 = vpack.c.bf16 %v3206, %v3202
    %v3225 = vpack.c.bf16 %v3208, %v3204
    %v3226 = vmax.bf16 %v3210, %v3218
    %v3227 = vmax.bf16 %v3211, %v3219
    %v3228 = vmax.bf16 %v3212, %v3220
    %v3229 = vmax.bf16 %v3213, %v3221
    %v3230 = vmax.bf16 %v3214, %v3222
    %v3231 = vmax.bf16 %v3215, %v3223
    %v3232 = vmax.bf16 %v3216, %v3224
    %v3233 = vmax.bf16 %v3217, %v3225
    %v3234 = vld [vmem:[#allocation7] sm:$0xff]
    %v3235 = vld [vmem:[#allocation7 + $0x8] sm:$0xff]
    %v3236 = vld [vmem:[#allocation7 + $0x10] sm:$0xff]
    %v3237 = vld [vmem:[#allocation7 + $0x18] sm:$0xff]
    %v3238 = vld [vmem:[#allocation7 + $0x20] sm:$0xff]
    %v3239 = vld [vmem:[#allocation7 + $0x28] sm:$0xff]
    %v3240 = vld [vmem:[#allocation7 + $0x30] sm:$0xff]
    %v3241 = vld [vmem:[#allocation7 + $0x38] sm:$0xff]
    %v3242 = vld [vmem:[#allocation7 + $0x40] sm:$0xff]
    %v3243 = vld [vmem:[#allocation7 + $0x48] sm:$0xff]
    %v3244 = vld [vmem:[#allocation7 + $0x50] sm:$0xff]
    %v3245 = vld [vmem:[#allocation7 + $0x58] sm:$0xff]
    %v3246 = vld [vmem:[#allocation7 + $0x60] sm:$0xff]
    %v3247 = vld [vmem:[#allocation7 + $0x68] sm:$0xff]
    %v3248 = vld [vmem:[#allocation7 + $0x70] sm:$0xff]
    %v3249 = vld [vmem:[#allocation7 + $0x78] sm:$0xff]
    %v3250 = vld [vmem:[#allocation7 + $0x80] sm:$0xff]
    %v3251 = vld [vmem:[#allocation7 + $0x88] sm:$0xff]
    %v3252 = vld [vmem:[#allocation7 + $0x90] sm:$0xff]
    %v3253 = vld [vmem:[#allocation7 + $0x98] sm:$0xff]
    %v3254 = vld [vmem:[#allocation7 + $0xa0] sm:$0xff]
    %v3255 = vld [vmem:[#allocation7 + $0xa8] sm:$0xff]
    %v3256 = vld [vmem:[#allocation7 + $0xb0] sm:$0xff]
    %v3257 = vld [vmem:[#allocation7 + $0xb8] sm:$0xff]
    %v3258 = vld [vmem:[#allocation7 + $0xc0] sm:$0xff]
    %v3259 = vld [vmem:[#allocation7 + $0xc8] sm:$0xff]
    %v3260 = vld [vmem:[#allocation7 + $0xd0] sm:$0xff]
    %v3261 = vld [vmem:[#allocation7 + $0xd8] sm:$0xff]
    %v3262 = vld [vmem:[#allocation7 + $0xe0] sm:$0xff]
    %v3263 = vld [vmem:[#allocation7 + $0xe8] sm:$0xff]
    %v3264 = vld [vmem:[#allocation7 + $0xf0] sm:$0xff]
    %v3265 = vld [vmem:[#allocation7 + $0xf8] sm:$0xff]
    %v3298 = vunpack.c.l.b16 %v3234
    %v3299 = vunpack.c.h.b16 %v3234
    %v3300 = vunpack.c.l.b16 %v3235
    %v3301 = vunpack.c.h.b16 %v3235
    %v3302 = vunpack.c.l.b16 %v3236
    %v3303 = vunpack.c.h.b16 %v3236
    %v3304 = vunpack.c.l.b16 %v3237
    %v3305 = vunpack.c.h.b16 %v3237
    %v3306 = vunpack.c.l.b16 %v3238
    %v3307 = vunpack.c.h.b16 %v3238
    %v3308 = vunpack.c.l.b16 %v3239
    %v3309 = vunpack.c.h.b16 %v3239
    %v3310 = vunpack.c.l.b16 %v3240
    %v3311 = vunpack.c.h.b16 %v3240
    %v3312 = vunpack.c.l.b16 %v3241
    %v3313 = vunpack.c.h.b16 %v3241
    %v3314 = vunpack.c.l.b16 %v3242
    %v3315 = vunpack.c.h.b16 %v3242
    %v3316 = vunpack.c.l.b16 %v3243
    %v3317 = vunpack.c.h.b16 %v3243
    %v3318 = vunpack.c.l.b16 %v3244
    %v3319 = vunpack.c.h.b16 %v3244
    %v3320 = vunpack.c.l.b16 %v3245
    %v3321 = vunpack.c.h.b16 %v3245
    %v3322 = vunpack.c.l.b16 %v3246
    %v3323 = vunpack.c.h.b16 %v3246
    %v3324 = vunpack.c.l.b16 %v3247
    %v3325 = vunpack.c.h.b16 %v3247
    %v3326 = vunpack.c.l.b16 %v3248
    %v3327 = vunpack.c.h.b16 %v3248
    %v3328 = vunpack.c.l.b16 %v3249
    %v3329 = vunpack.c.h.b16 %v3249
    %v3330 = vunpack.c.l.b16 %v3250
    %v3331 = vunpack.c.h.b16 %v3250
    %v3332 = vunpack.c.l.b16 %v3251
    %v3333 = vunpack.c.h.b16 %v3251
    %v3334 = vunpack.c.l.b16 %v3252
    %v3335 = vunpack.c.h.b16 %v3252
    %v3336 = vunpack.c.l.b16 %v3253
    %v3337 = vunpack.c.h.b16 %v3253
    %v3338 = vunpack.c.l.b16 %v3254
    %v3339 = vunpack.c.h.b16 %v3254
    %v3340 = vunpack.c.l.b16 %v3255
    %v3341 = vunpack.c.h.b16 %v3255
    %v3342 = vunpack.c.l.b16 %v3256
    %v3343 = vunpack.c.h.b16 %v3256
    %v3344 = vunpack.c.l.b16 %v3257
    %v3345 = vunpack.c.h.b16 %v3257
    %v3346 = vunpack.c.l.b16 %v3258
    %v3347 = vunpack.c.h.b16 %v3258
    %v3348 = vunpack.c.l.b16 %v3259
    %v3349 = vunpack.c.h.b16 %v3259
    %v3350 = vunpack.c.l.b16 %v3260
    %v3351 = vunpack.c.h.b16 %v3260
    %v3352 = vunpack.c.l.b16 %v3261
    %v3353 = vunpack.c.h.b16 %v3261
    %v3354 = vunpack.c.l.b16 %v3262
    %v3355 = vunpack.c.h.b16 %v3262
    %v3356 = vunpack.c.l.b16 %v3263
    %v3357 = vunpack.c.h.b16 %v3263
    %v3358 = vunpack.c.l.b16 %v3264
    %v3359 = vunpack.c.h.b16 %v3264
    %v3360 = vunpack.c.l.b16 %v3265
    %v3361 = vunpack.c.h.b16 %v3265
    %v3362 = vpack.c.b16 %v3300, %v3298
    %v3363 = vpack.c.b16 %v3301, %v3299
    %v3364 = vpack.c.b16 %v3304, %v3302
    %v3365 = vpack.c.b16 %v3305, %v3303
    %v3366 = vpack.c.b16 %v3308, %v3306
    %v3367 = vpack.c.b16 %v3309, %v3307
    %v3368 = vpack.c.b16 %v3312, %v3310
    %v3369 = vpack.c.b16 %v3313, %v3311
    %v3370 = vpack.c.b16 %v3316, %v3314
    %v3371 = vpack.c.b16 %v3317, %v3315
    %v3372 = vpack.c.b16 %v3320, %v3318
    %v3373 = vpack.c.b16 %v3321, %v3319
    %v3374 = vpack.c.b16 %v3324, %v3322
    %v3375 = vpack.c.b16 %v3325, %v3323
    %v3376 = vpack.c.b16 %v3328, %v3326
    %v3377 = vpack.c.b16 %v3329, %v3327
    %v3378 = vpack.c.b16 %v3332, %v3330
    %v3379 = vpack.c.b16 %v3333, %v3331
    %v3380 = vpack.c.b16 %v3336, %v3334
    %v3381 = vpack.c.b16 %v3337, %v3335
    %v3382 = vpack.c.b16 %v3340, %v3338
    %v3383 = vpack.c.b16 %v3341, %v3339
    %v3384 = vpack.c.b16 %v3344, %v3342
    %v3385 = vpack.c.b16 %v3345, %v3343
    %v3386 = vpack.c.b16 %v3348, %v3346
    %v3387 = vpack.c.b16 %v3349, %v3347
    %v3388 = vpack.c.b16 %v3352, %v3350
    %v3389 = vpack.c.b16 %v3353, %v3351
    %v3390 = vpack.c.b16 %v3356, %v3354
    %v3391 = vpack.c.b16 %v3357, %v3355
    %v3392 = vpack.c.b16 %v3360, %v3358
    %v3393 = vpack.c.b16 %v3361, %v3359
    %3426 = vmatprep.subr.bf16.mxu0 %v3377
    %3427 = vmatpush1.bf16.msra.mxu0 %v3376
    %3428 = vmatprep.subr.bf16.mxu0 %v3375
    %3429 = vmatpush1.bf16.msra.mxu0 %v3374
    %3430 = vmatprep.subr.bf16.mxu0 %v3373
    %3431 = vmatpush1.bf16.msra.mxu0 %v3372
    %3432 = vmatprep.subr.bf16.mxu0 %v3371
    %3433 = vmatpush1.bf16.msra.mxu0 %v3370
    %3434 = vmatprep.subr.bf16.mxu0 %v3369
    %3435 = vmatpush1.bf16.msra.mxu0 %v3368
    %3436 = vmatprep.subr.bf16.mxu0 %v3367
    %3437 = vmatpush1.bf16.msra.mxu0 %v3366
    %3438 = vmatprep.subr.bf16.mxu0 %v3365
    %3439 = vmatpush1.bf16.msra.mxu0 %v3364
    %3440 = vmatprep.subr.bf16.mxu0 %v3363
    %3441 = vmatpush1.bf16.msra.mxu0 %v3362
    %3442 = vmatprep.subr.bf16.mxu0 %v3393
    %3443 = vmatpush2.bf16.msra.mxu0 %v3392
    %3444 = vmatprep.subr.bf16.mxu0 %v3391
    %3445 = vmatpush2.bf16.msra.mxu0 %v3390
    %3446 = vmatprep.subr.bf16.mxu0 %v3389
    %3447 = vmatpush2.bf16.msra.mxu0 %v3388
    %3448 = vmatprep.subr.bf16.mxu0 %v3387
    %3449 = vmatpush2.bf16.msra.mxu0 %v3386
    %3450 = vmatprep.subr.bf16.mxu0 %v3385
    %3451 = vmatpush2.bf16.msra.mxu0 %v3384
    %3452 = vmatprep.subr.bf16.mxu0 %v3383
    %3453 = vmatpush2.bf16.msra.mxu0 %v3382
    %3454 = vmatprep.subr.bf16.mxu0 %v3381
    %3455 = vmatpush2.bf16.msra.mxu0 %v3380
    %3456 = vmatprep.subr.bf16.mxu0 %v3379
    %3457 = vmatpush2.bf16.msra.mxu0 %v3378
    %3458 = vmatprep.mubr.bf16.mxu0 %v3227
    %3459 = vmatmul.mubr.bf16.gmra.mxu0 %v3226
    %v3460 = vpop.f32.mrf.mxu0
    %v3461 = vadd.f32 0.0, %v3460
    %v3462 = vpop.f32.mrf.mxu0
    %v3463 = vadd.f32 0.0, %v3462
    %v3464 = vpop.f32.mrf.mxu0
    %v3465 = vadd.f32 0.0, %v3464
    %v3466 = vpop.f32.mrf.mxu0
    %v3467 = vadd.f32 0.0, %v3466
    %3468 = vmatprep.mubr.bf16.mxu0 %v3229
    %3469 = vmatmul.mubr.bf16.gmra.mxu0 %v3228
    %v3470 = vpop.f32.mrf.mxu0
    %v3471 = vadd.f32 0.0, %v3470
    %v3472 = vpop.f32.mrf.mxu0
    %v3473 = vadd.f32 0.0, %v3472
    %v3474 = vpop.f32.mrf.mxu0
    %v3475 = vadd.f32 0.0, %v3474
    %v3476 = vpop.f32.mrf.mxu0
    %v3477 = vadd.f32 0.0, %v3476
    %3478 = vmatprep.mubr.bf16.mxu0 %v3231
    %3479 = vmatmul.mubr.bf16.gmra.mxu0 %v3230
    %v3480 = vpop.f32.mrf.mxu0
    %v3481 = vadd.f32 0.0, %v3480
    %v3482 = vpop.f32.mrf.mxu0
    %v3483 = vadd.f32 0.0, %v3482
    %v3484 = vpop.f32.mrf.mxu0
    %v3485 = vadd.f32 0.0, %v3484
    %v3486 = vpop.f32.mrf.mxu0
    %v3487 = vadd.f32 0.0, %v3486
    %3488 = vmatprep.mubr.bf16.mxu0 %v3233
    %3489 = vmatmul.mubr.bf16.gmra.mxu0 %v3232
    %v3490 = vpop.f32.mrf.mxu0
    %v3491 = vadd.f32 0.0, %v3490
    %v3492 = vpop.f32.mrf.mxu0
    %v3493 = vadd.f32 0.0, %v3492
    %v3494 = vpop.f32.mrf.mxu0
    %v3495 = vadd.f32 0.0, %v3494
    %v3496 = vpop.f32.mrf.mxu0
    %v3497 = vadd.f32 0.0, %v3496
    %3498 = vdwg.mxu0
    %v3499 = vmax.f32 %v3461, %v3463
    %v3500 = vmax.f32 %v3465, %v3467
    %v3501 = vmax.f32 %v3471, %v3473
    %v3502 = vmax.f32 %v3475, %v3477
    %v3503 = vmax.f32 %v3481, %v3483
    %v3504 = vmax.f32 %v3485, %v3487
    %v3505 = vmax.f32 %v3491, %v3493
    %v3506 = vmax.f32 %v3495, %v3497
    %v3507 = vld [vmem:[%s5] sm:$0x1]
    %v3509 = vlaneseq
    %v3510 = vshrl.u32 %v3509, 7
    %v3511 = vsub.s32 0, %v3510
    %v3512 = vrot.slane %v3507, %v3511
    %v3514 = vadd.f32 %v3499, %v3512
    %v3515 = vadd.f32 %v3500, %v3512
    %v3516 = vadd.f32 %v3501, %v3512
    %v3517 = vadd.f32 %v3502, %v3512
    %v3518 = vadd.f32 %v3503, %v3512
    %v3519 = vadd.f32 %v3504, %v3512
    %v3520 = vadd.f32 %v3505, %v3512
    %v3521 = vadd.f32 %v3506, %v3512
    %v3522 = vmax.f32 %v3514, 0.0
    %v3523 = vmax.f32 %v3515, 0.0
    %v3524 = vmax.f32 %v3516, 0.0
    %v3525 = vmax.f32 %v3517, 0.0
    %v3526 = vmax.f32 %v3518, 0.0
    %v3527 = vmax.f32 %v3519, 0.0
    %v3528 = vmax.f32 %v3520, 0.0
    %v3529 = vmax.f32 %v3521, 0.0
    %v3530 = vpack.c.bf16 %v3523, %v3522
    %v3531 = vpack.c.bf16 %v3525, %v3524
    %v3532 = vpack.c.bf16 %v3527, %v3526
    %v3533 = vpack.c.bf16 %v3529, %v3528
    %v3534 = vld [vmem:[#allocation8] sm:$0xf]
    %v3535 = vld [vmem:[#allocation8 + $0x4] sm:$0xf]
    %v3536 = vld [vmem:[#allocation8 + $0x8] sm:$0xf]
    %v3537 = vld [vmem:[#allocation8 + $0xc] sm:$0xf]
    %v3538 = vld [vmem:[#allocation8 + $0x10] sm:$0xf]
    %v3539 = vld [vmem:[#allocation8 + $0x14] sm:$0xf]
    %v3540 = vld [vmem:[#allocation8 + $0x18] sm:$0xf]
    %v3541 = vld [vmem:[#allocation8 + $0x1c] sm:$0xf]
    %v3542 = vld [vmem:[#allocation8 + $0x20] sm:$0xf]
    %v3543 = vld [vmem:[#allocation8 + $0x24] sm:$0xf]
    %v3544 = vld [vmem:[#allocation8 + $0x28] sm:$0xf]
    %v3545 = vld [vmem:[#allocation8 + $0x2c] sm:$0xf]
    %v3546 = vld [vmem:[#allocation8 + $0x30] sm:$0xf]
    %v3547 = vld [vmem:[#allocation8 + $0x34] sm:$0xf]
    %v3548 = vld [vmem:[#allocation8 + $0x38] sm:$0xf]
    %v3549 = vld [vmem:[#allocation8 + $0x3c] sm:$0xf]
    %v3550 = vld [vmem:[#allocation8 + $0x40] sm:$0xf]
    %v3551 = vld [vmem:[#allocation8 + $0x44] sm:$0xf]
    %v3552 = vld [vmem:[#allocation8 + $0x48] sm:$0xf]
    %v3553 = vld [vmem:[#allocation8 + $0x4c] sm:$0xf]
    %v3554 = vld [vmem:[#allocation8 + $0x50] sm:$0xf]
    %v3555 = vld [vmem:[#allocation8 + $0x54] sm:$0xf]
    %v3556 = vld [vmem:[#allocation8 + $0x58] sm:$0xf]
    %v3557 = vld [vmem:[#allocation8 + $0x5c] sm:$0xf]
    %v3558 = vld [vmem:[#allocation8 + $0x60] sm:$0xf]
    %v3559 = vld [vmem:[#allocation8 + $0x64] sm:$0xf]
    %v3560 = vld [vmem:[#allocation8 + $0x68] sm:$0xf]
    %v3561 = vld [vmem:[#allocation8 + $0x6c] sm:$0xf]
    %v3562 = vld [vmem:[#allocation8 + $0x70] sm:$0xf]
    %v3563 = vld [vmem:[#allocation8 + $0x74] sm:$0xf]
    %v3564 = vld [vmem:[#allocation8 + $0x78] sm:$0xf]
    %v3565 = vld [vmem:[#allocation8 + $0x7c] sm:$0xf]
    %v3566 = vld [vmem:[#allocation8 + $0x80] sm:$0xf]
    %v3567 = vld [vmem:[#allocation8 + $0x84] sm:$0xf]
    %v3568 = vld [vmem:[#allocation8 + $0x88] sm:$0xf]
    %v3569 = vld [vmem:[#allocation8 + $0x8c] sm:$0xf]
    %v3570 = vld [vmem:[#allocation8 + $0x90] sm:$0xf]
    %v3571 = vld [vmem:[#allocation8 + $0x94] sm:$0xf]
    %v3572 = vld [vmem:[#allocation8 + $0x98] sm:$0xf]
    %v3573 = vld [vmem:[#allocation8 + $0x9c] sm:$0xf]
    %v3574 = vld [vmem:[#allocation8 + $0xa0] sm:$0xf]
    %v3575 = vld [vmem:[#allocation8 + $0xa4] sm:$0xf]
    %v3576 = vld [vmem:[#allocation8 + $0xa8] sm:$0xf]
    %v3577 = vld [vmem:[#allocation8 + $0xac] sm:$0xf]
    %v3578 = vld [vmem:[#allocation8 + $0xb0] sm:$0xf]
    %v3579 = vld [vmem:[#allocation8 + $0xb4] sm:$0xf]
    %v3580 = vld [vmem:[#allocation8 + $0xb8] sm:$0xf]
    %v3581 = vld [vmem:[#allocation8 + $0xbc] sm:$0xf]
    %v3582 = vld [vmem:[#allocation8 + $0xc0] sm:$0xf]
    %v3583 = vld [vmem:[#allocation8 + $0xc4] sm:$0xf]
    %v3584 = vld [vmem:[#allocation8 + $0xc8] sm:$0xf]
    %v3585 = vld [vmem:[#allocation8 + $0xcc] sm:$0xf]
    %v3586 = vld [vmem:[#allocation8 + $0xd0] sm:$0xf]
    %v3587 = vld [vmem:[#allocation8 + $0xd4] sm:$0xf]
    %v3588 = vld [vmem:[#allocation8 + $0xd8] sm:$0xf]
    %v3589 = vld [vmem:[#allocation8 + $0xdc] sm:$0xf]
    %v3590 = vld [vmem:[#allocation8 + $0xe0] sm:$0xf]
    %v3591 = vld [vmem:[#allocation8 + $0xe4] sm:$0xf]
    %v3592 = vld [vmem:[#allocation8 + $0xe8] sm:$0xf]
    %v3593 = vld [vmem:[#allocation8 + $0xec] sm:$0xf]
    %v3594 = vld [vmem:[#allocation8 + $0xf0] sm:$0xf]
    %v3595 = vld [vmem:[#allocation8 + $0xf4] sm:$0xf]
    %v3596 = vld [vmem:[#allocation8 + $0xf8] sm:$0xf]
    %v3597 = vld [vmem:[#allocation8 + $0xfc] sm:$0xf]
    %v3598 = vld [vmem:[%s8] sm:$0x1]
    %v3600 = vlaneseq
    %v3601 = vshrl.u32 %v3600, 7
    %v3602 = vsub.s32 0, %v3601
    %v3603 = vrot.slane %v3598, %v3602
    %v3669 = vunpack.c.l.b16 %v3534
    %v3670 = vunpack.c.l.b16 %v3535
    %v3671 = vunpack.c.l.b16 %v3536
    %v3672 = vunpack.c.l.b16 %v3537
    %v3673 = vunpack.c.l.b16 %v3538
    %v3674 = vunpack.c.l.b16 %v3539
    %v3675 = vunpack.c.l.b16 %v3540
    %v3676 = vunpack.c.l.b16 %v3541
    %v3677 = vunpack.c.l.b16 %v3542
    %v3678 = vunpack.c.l.b16 %v3543
    %v3679 = vunpack.c.l.b16 %v3544
    %v3680 = vunpack.c.l.b16 %v3545
    %v3681 = vunpack.c.l.b16 %v3546
    %v3682 = vunpack.c.l.b16 %v3547
    %v3683 = vunpack.c.l.b16 %v3548
    %v3684 = vunpack.c.l.b16 %v3549
    %v3685 = vunpack.c.l.b16 %v3550
    %v3686 = vunpack.c.l.b16 %v3551
    %v3687 = vunpack.c.l.b16 %v3552
    %v3688 = vunpack.c.l.b16 %v3553
    %v3689 = vunpack.c.l.b16 %v3554
    %v3690 = vunpack.c.l.b16 %v3555
    %v3691 = vunpack.c.l.b16 %v3556
    %v3692 = vunpack.c.l.b16 %v3557
    %v3693 = vunpack.c.l.b16 %v3558
    %v3694 = vunpack.c.l.b16 %v3559
    %v3695 = vunpack.c.l.b16 %v3560
    %v3696 = vunpack.c.l.b16 %v3561
    %v3697 = vunpack.c.l.b16 %v3562
    %v3698 = vunpack.c.l.b16 %v3563
    %v3699 = vunpack.c.l.b16 %v3564
    %v3700 = vunpack.c.l.b16 %v3565
    %v3701 = vunpack.c.l.b16 %v3566
    %v3702 = vunpack.c.l.b16 %v3567
    %v3703 = vunpack.c.l.b16 %v3568
    %v3704 = vunpack.c.l.b16 %v3569
    %v3705 = vunpack.c.l.b16 %v3570
    %v3706 = vunpack.c.l.b16 %v3571
    %v3707 = vunpack.c.l.b16 %v3572
    %v3708 = vunpack.c.l.b16 %v3573
    %v3709 = vunpack.c.l.b16 %v3574
    %v3710 = vunpack.c.l.b16 %v3575
    %v3711 = vunpack.c.l.b16 %v3576
    %v3712 = vunpack.c.l.b16 %v3577
    %v3713 = vunpack.c.l.b16 %v3578
    %v3714 = vunpack.c.l.b16 %v3579
    %v3715 = vunpack.c.l.b16 %v3580
    %v3716 = vunpack.c.l.b16 %v3581
    %v3717 = vunpack.c.l.b16 %v3582
    %v3718 = vunpack.c.l.b16 %v3583
    %v3719 = vunpack.c.l.b16 %v3584
    %v3720 = vunpack.c.l.b16 %v3585
    %v3721 = vunpack.c.l.b16 %v3586
    %v3722 = vunpack.c.l.b16 %v3587
    %v3723 = vunpack.c.l.b16 %v3588
    %v3724 = vunpack.c.l.b16 %v3589
    %v3725 = vunpack.c.l.b16 %v3590
    %v3726 = vunpack.c.l.b16 %v3591
    %v3727 = vunpack.c.l.b16 %v3592
    %v3728 = vunpack.c.l.b16 %v3593
    %v3729 = vunpack.c.l.b16 %v3594
    %v3730 = vunpack.c.l.b16 %v3595
    %v3731 = vunpack.c.l.b16 %v3596
    %v3732 = vunpack.c.l.b16 %v3597
    %v3733 = vpack.c.b16 %v3670, %v3669
    %v3734 = vpack.c.b16 %v3672, %v3671
    %v3735 = vpack.c.b16 %v3674, %v3673
    %v3736 = vpack.c.b16 %v3676, %v3675
    %v3737 = vpack.c.b16 %v3678, %v3677
    %v3738 = vpack.c.b16 %v3680, %v3679
    %v3739 = vpack.c.b16 %v3682, %v3681
    %v3740 = vpack.c.b16 %v3684, %v3683
    %v3741 = vpack.c.b16 %v3686, %v3685
    %v3742 = vpack.c.b16 %v3688, %v3687
    %v3743 = vpack.c.b16 %v3690, %v3689
    %v3744 = vpack.c.b16 %v3692, %v3691
    %v3745 = vpack.c.b16 %v3694, %v3693
    %v3746 = vpack.c.b16 %v3696, %v3695
    %v3747 = vpack.c.b16 %v3698, %v3697
    %v3748 = vpack.c.b16 %v3700, %v3699
    %v3749 = vpack.c.b16 %v3702, %v3701
    %v3750 = vpack.c.b16 %v3704, %v3703
    %v3751 = vpack.c.b16 %v3706, %v3705
    %v3752 = vpack.c.b16 %v3708, %v3707
    %v3753 = vpack.c.b16 %v3710, %v3709
    %v3754 = vpack.c.b16 %v3712, %v3711
    %v3755 = vpack.c.b16 %v3714, %v3713
    %v3756 = vpack.c.b16 %v3716, %v3715
    %v3757 = vpack.c.b16 %v3718, %v3717
    %v3758 = vpack.c.b16 %v3720, %v3719
    %v3759 = vpack.c.b16 %v3722, %v3721
    %v3760 = vpack.c.b16 %v3724, %v3723
    %v3761 = vpack.c.b16 %v3726, %v3725
    %v3762 = vpack.c.b16 %v3728, %v3727
    %v3763 = vpack.c.b16 %v3730, %v3729
    %v3764 = vpack.c.b16 %v3732, %v3731
    %3797 = vmatprep.subr.bf16.mxu0 0
    %3798 = vmatpush1.bf16.msra.mxu0 %v3740
    %3799 = vmatprep.subr.bf16.mxu0 0
    %3800 = vmatpush1.bf16.msra.mxu0 %v3739
    %3801 = vmatprep.subr.bf16.mxu0 0
    %3802 = vmatpush1.bf16.msra.mxu0 %v3738
    %3803 = vmatprep.subr.bf16.mxu0 0
    %3804 = vmatpush1.bf16.msra.mxu0 %v3737
    %3805 = vmatprep.subr.bf16.mxu0 0
    %3806 = vmatpush1.bf16.msra.mxu0 %v3736
    %3807 = vmatprep.subr.bf16.mxu0 0
    %3808 = vmatpush1.bf16.msra.mxu0 %v3735
    %3809 = vmatprep.subr.bf16.mxu0 0
    %3810 = vmatpush1.bf16.msra.mxu0 %v3734
    %3811 = vmatprep.subr.bf16.mxu0 0
    %3812 = vmatpush1.bf16.msra.mxu0 %v3733
    %3813 = vmatprep.subr.bf16.mxu0 0
    %3814 = vmatpush2.bf16.msra.mxu0 %v3748
    %3815 = vmatprep.subr.bf16.mxu0 0
    %3816 = vmatpush2.bf16.msra.mxu0 %v3747
    %3817 = vmatprep.subr.bf16.mxu0 0
    %3818 = vmatpush2.bf16.msra.mxu0 %v3746
    %3819 = vmatprep.subr.bf16.mxu0 0
    %3820 = vmatpush2.bf16.msra.mxu0 %v3745
    %3821 = vmatprep.subr.bf16.mxu0 0
    %3822 = vmatpush2.bf16.msra.mxu0 %v3744
    %3823 = vmatprep.subr.bf16.mxu0 0
    %3824 = vmatpush2.bf16.msra.mxu0 %v3743
    %3825 = vmatprep.subr.bf16.mxu0 0
    %3826 = vmatpush2.bf16.msra.mxu0 %v3742
    %3827 = vmatprep.subr.bf16.mxu0 0
    %3828 = vmatpush2.bf16.msra.mxu0 %v3741
    %3829 = vmatprep.mubr.bf16.mxu0 %v3531
    %3830 = vmatmul.mubr.bf16.gmra.mxu0 %v3530
    %v3831 = vpop.f32.mrf.mxu0
    %v3832 = vadd.f32 %v3603, %v3831
    %v3833 = vpop.f32.mrf.mxu0
    %v3834 = vpop.f32.mrf.mxu0
    %v3835 = vadd.f32 %v3603, %v3834
    %v3836 = vpop.f32.mrf.mxu0
    %3837 = vdwg.mxu0
    %3838 = vmatprep.subr.bf16.mxu0 0
    %3839 = vmatpush1.bf16.msra.mxu0 %v3756
    %3840 = vmatprep.subr.bf16.mxu0 0
    %3841 = vmatpush1.bf16.msra.mxu0 %v3755
    %3842 = vmatprep.subr.bf16.mxu0 0
    %3843 = vmatpush1.bf16.msra.mxu0 %v3754
    %3844 = vmatprep.subr.bf16.mxu0 0
    %3845 = vmatpush1.bf16.msra.mxu0 %v3753
    %3846 = vmatprep.subr.bf16.mxu0 0
    %3847 = vmatpush1.bf16.msra.mxu0 %v3752
    %3848 = vmatprep.subr.bf16.mxu0 0
    %3849 = vmatpush1.bf16.msra.mxu0 %v3751
    %3850 = vmatprep.subr.bf16.mxu0 0
    %3851 = vmatpush1.bf16.msra.mxu0 %v3750
    %3852 = vmatprep.subr.bf16.mxu0 0
    %3853 = vmatpush1.bf16.msra.mxu0 %v3749
    %3854 = vmatprep.subr.bf16.mxu0 0
    %3855 = vmatpush2.bf16.msra.mxu0 %v3764
    %3856 = vmatprep.subr.bf16.mxu0 0
    %3857 = vmatpush2.bf16.msra.mxu0 %v3763
    %3858 = vmatprep.subr.bf16.mxu0 0
    %3859 = vmatpush2.bf16.msra.mxu0 %v3762
    %3860 = vmatprep.subr.bf16.mxu0 0
    %3861 = vmatpush2.bf16.msra.mxu0 %v3761
    %3862 = vmatprep.subr.bf16.mxu0 0
    %3863 = vmatpush2.bf16.msra.mxu0 %v3760
    %3864 = vmatprep.subr.bf16.mxu0 0
    %3865 = vmatpush2.bf16.msra.mxu0 %v3759
    %3866 = vmatprep.subr.bf16.mxu0 0
    %3867 = vmatpush2.bf16.msra.mxu0 %v3758
    %3868 = vmatprep.subr.bf16.mxu0 0
    %3869 = vmatpush2.bf16.msra.mxu0 %v3757
    %3870 = vmatprep.mubr.bf16.mxu0 %v3533
    %3871 = vmatmul.mubr.bf16.gmra.mxu0 %v3532
    %v3872 = vpop.f32.mrf.mxu0
    %v3873 = vadd.f32 %v3832, %v3872
    %v3874 = vpop.f32.mrf.mxu0
    %v3875 = vpop.f32.mrf.mxu0
    %v3876 = vadd.f32 %v3835, %v3875
    %v3877 = vpop.f32.mrf.mxu0
    %3878 = vdwg.mxu0
    %v3879 = vmax.f32 %v3873, 0.0
    %v3880 = vmax.f32 %v3876, 0.0
    %3881 = vst [vmem:[%s11] sm:$0xff] %v3879
    %3882 = vst [vmem:[%s11 + $0x8] sm:$0xff] %v3880
    %v3883 = vpack.c.bf16 %v3880, %v3879
    %v3884 = vld [vmem:[%s9] sm:$0xf]
    %v3885 = vld [vmem:[%s9 + $0x4] sm:$0xf]
    %v3886 = vld [vmem:[%s9 + $0x8] sm:$0xf]
    %v3887 = vld [vmem:[%s9 + $0xc] sm:$0xf]
    %v3888 = vld [vmem:[%s9 + $0x10] sm:$0xf]
    %v3889 = vld [vmem:[%s9 + $0x14] sm:$0xf]
    %v3890 = vld [vmem:[%s9 + $0x18] sm:$0xf]
    %v3891 = vld [vmem:[%s9 + $0x1c] sm:$0xf]
    %v3892 = vld [vmem:[%s9 + $0x20] sm:$0xf]
    %v3893 = vld [vmem:[%s9 + $0x24] sm:$0xf]
    %v3894 = vld [vmem:[%s9 + $0x28] sm:$0xf]
    %v3895 = vld [vmem:[%s9 + $0x2c] sm:$0xf]
    %v3896 = vld [vmem:[%s9 + $0x30] sm:$0xf]
    %v3897 = vld [vmem:[%s9 + $0x34] sm:$0xf]
    %v3898 = vld [vmem:[%s9 + $0x38] sm:$0xf]
    %v3899 = vld [vmem:[%s9 + $0x3c] sm:$0xf]
    %v3900 = vld [vmem:[%s10] sm:$0x1]
    %v3902 = vlaneseq
    %v3903 = vshrl.u32 %v3902, 7
    %v3904 = vsub.s32 0, %v3903
    %v3905 = vrot.slane %v3900, %v3904
    %v3923 = vunpack.c.l.b16 %v3884
    %v3924 = vunpack.c.l.b16 %v3885
    %v3925 = vunpack.c.l.b16 %v3886
    %v3926 = vunpack.c.l.b16 %v3887
    %v3927 = vunpack.c.l.b16 %v3888
    %v3928 = vunpack.c.l.b16 %v3889
    %v3929 = vunpack.c.l.b16 %v3890
    %v3930 = vunpack.c.l.b16 %v3891
    %v3931 = vunpack.c.l.b16 %v3892
    %v3932 = vunpack.c.l.b16 %v3893
    %v3933 = vunpack.c.l.b16 %v3894
    %v3934 = vunpack.c.l.b16 %v3895
    %v3935 = vunpack.c.l.b16 %v3896
    %v3936 = vunpack.c.l.b16 %v3897
    %v3937 = vunpack.c.l.b16 %v3898
    %v3938 = vunpack.c.l.b16 %v3899
    %v3939 = vpack.c.b16 %v3924, %v3923
    %v3940 = vpack.c.b16 %v3926, %v3925
    %v3941 = vpack.c.b16 %v3928, %v3927
    %v3942 = vpack.c.b16 %v3930, %v3929
    %v3943 = vpack.c.b16 %v3932, %v3931
    %v3944 = vpack.c.b16 %v3934, %v3933
    %v3945 = vpack.c.b16 %v3936, %v3935
    %v3946 = vpack.c.b16 %v3938, %v3937
    %3955 = vmatprep.subr.bf16.mxu0 0
    %3956 = vmatpush1.bf16.msra.mxu0 %v3946
    %3957 = vmatprep.subr.bf16.mxu0 0
    %3958 = vmatpush1.bf16.msra.mxu0 %v3945
    %3959 = vmatprep.subr.bf16.mxu0 0
    %3960 = vmatpush1.bf16.msra.mxu0 %v3944
    %3961 = vmatprep.subr.bf16.mxu0 0
    %3962 = vmatpush1.bf16.msra.mxu0 %v3943
    %3963 = vmatprep.subr.bf16.mxu0 0
    %3964 = vmatpush1.bf16.msra.mxu0 %v3942
    %3965 = vmatprep.subr.bf16.mxu0 0
    %3966 = vmatpush1.bf16.msra.mxu0 %v3941
    %3967 = vmatprep.subr.bf16.mxu0 0
    %3968 = vmatpush1.bf16.msra.mxu0 %v3940
    %3969 = vmatprep.subr.bf16.mxu0 0
    %3970 = vmatpush1.bf16.msra.mxu0 %v3939
    %3971 = vmatprep.subr.bf16.mxu0 0
    %3972 = vmatpush2.bf16.msra.mxu0 0
    %3973 = vmatprep.subr.bf16.mxu0 0
    %3974 = vmatpush2.bf16.msra.mxu0 0
    %3975 = vmatprep.subr.bf16.mxu0 0
    %3976 = vmatpush2.bf16.msra.mxu0 0
    %3977 = vmatprep.subr.bf16.mxu0 0
    %3978 = vmatpush2.bf16.msra.mxu0 0
    %3979 = vmatprep.subr.bf16.mxu0 0
    %3980 = vmatpush2.bf16.msra.mxu0 0
    %3981 = vmatprep.subr.bf16.mxu0 0
    %3982 = vmatpush2.bf16.msra.mxu0 0
    %3983 = vmatprep.subr.bf16.mxu0 0
    %3984 = vmatpush2.bf16.msra.mxu0 0
    %3985 = vmatprep.subr.bf16.mxu0 0
    %3986 = vmatpush2.bf16.msra.mxu0 0
    %3987 = vmatprep.mubr.bf16.mxu0 0
    %3988 = vmatmul.mubr.bf16.gmra.mxu0 %v3883
    %v3989 = vpop.f32.mrf.mxu0
    %v3990 = vadd.f32 %v3905, %v3989
    %v3991 = vpop.f32.mrf.mxu0
    %v3992 = vpop.f32.mrf.mxu0
    %v3993 = vadd.f32 %v3905, %v3992
    %v3994 = vpop.f32.mrf.mxu0
    %3995 = vdwg.mxu0
    %3996 = vst [vmem:[%s12] sm:$0xff] %v3990
    %3997 = vst [vmem:[%s12 + $0x8] sm:$0xff] %v3993
    // Predicated region
    $region62: #{net_forward.1} parent=1 // pred_check
      _
    $region63: #{net_forward.1} parent=1 // pred_check_branch
      %3999 = sbr.rel (0) target = $region65
    $region64: #{net_forward.1} parent=1 // pred_region
      _
    $region65: #{net_forward.1} parent=1 // pred_fallthru
      _
    // Predicated region
    $region66: #{net_forward.1} parent=1 // pred_check
      _
    $region67: #{net_forward.1} parent=1 // pred_check_branch
      %4001 = sbr.rel (0) target = $region69
    $region68: #{net_forward.1} parent=1 // pred_region
      _
    $region69: #{net_forward.1} parent=1 // pred_fallthru
      _
    // Predicated region
    $region70: #{net_forward.1} parent=1 // pred_check
      _
    $region71: #{net_forward.1} parent=1 // pred_check_branch
      %4003 = sbr.rel (0) target = $region73
    $region72: #{net_forward.1} parent=1 // pred_region
      _
    $region73: #{net_forward.1} parent=1 // pred_fallthru
      _
    // Predicated region
    $region74: #{net_forward.1} parent=1 // pred_check
      _
    $region75: #{net_forward.1} parent=1 // pred_check_branch
      %4005 = sbr.rel (0) target = $region77
    $region76: #{net_forward.1} parent=1 // pred_region
      _
    $region77: #{net_forward.1} parent=1 // pred_fallthru
      _
    %4006 = vsyncpa [#allocation4], 1
    %4007 = vsyncpa [#allocation6], 1
    %4008 = vsyncpa [#allocation9], 1

</llo_original>
